<compile_context>
chip_gen: v7x
topology: tpu7x:2x2x1
jax: 0.10.0
libtpu: 0.0.40
codegen_flags: <defaults>
</compile_context>

<pallas_src>
import math

import jax
import jax.numpy as jnp
import numpy as np
from jax import lax
from jax.experimental import pallas as pl
from jax.experimental.pallas import tpu as pltpu


def _make_resize_kernel(gb, compute_dtype, precision):
    """Per-step kernel: nearest-neighbor resize of `gb` planes via two exact
    0/1 selection matmuls on the MXU (H-gather, then W-gather)."""

    def kernel(sh_ref, sw_ref, x_ref, o_ref):
        sh = sh_ref[...]                      # (Ho, Hi) one-hot row selector
        sw = sw_ref[...]                      # (Wi, Wo) one-hot column selector
        for g in range(gb):                   # static unroll over planes in the block
            xg = x_ref[g].astype(compute_dtype)                       # (Hi, Wi)
            t = jnp.dot(sh, xg, preferred_element_type=jnp.float32,
                        precision=precision)                          # (Ho, Wi)
            o = jnp.dot(t.astype(compute_dtype), sw,
                        preferred_element_type=jnp.float32,
                        precision=precision)                          # (Ho, Wo)
            o_ref[g] = o.astype(o_ref.dtype)

    return kernel


def _xla_gather_fallback(a, src_h, src_w):
    out = jnp.take(a, jnp.asarray(src_h, dtype=jnp.int32), axis=2)
    return jnp.take(out, jnp.asarray(src_w, dtype=jnp.int32), axis=3)


def height_to(a, height, upscale=True):
    """Pallas implementation of HeightTo(height, upscale).forward(a); a is NCHW."""
    assert a.ndim == 4
    N, C, Hi, Wi = (int(d) for d in a.shape)
    zoom = float(height) / float(Hi)
    if not (zoom < 1.0 or (zoom > 1.0 and upscale)):
        return a

    Ho = int(math.floor(Hi * zoom))
    Wo = int(math.floor(Wi * zoom))
    if Ho <= 0 or Wo <= 0:                    # degenerate output guard
        return jnp.zeros((N, C, max(Ho, 0), max(Wo, 0)), a.dtype)

    inv = 1.0 / zoom  # PyTorch uses 1/scale_factor when scales are not recomputed
    src_h = np.minimum(np.floor(np.arange(Ho, dtype=np.float64) * inv).astype(np.int64), Hi - 1)
    src_w = np.minimum(np.floor(np.arange(Wo, dtype=np.float64) * inv).astype(np.int64), Wi - 1)

    if not jnp.issubdtype(a.dtype, jnp.floating):
        # TODO(synk): integer dtypes need a non-MXU gather path inside the kernel
        # to stay exact for large magnitudes; use a plain XLA gather instead.
        return _xla_gather_fallback(a, src_h, src_w)

    # Compute dtype: keep bf16 native (MXU throughput + half the VMEM bytes);
    # everything else runs through f32. Selection matmuls are exact either way.
    cdt = jnp.bfloat16 if a.dtype == jnp.bfloat16 else jnp.float32
    csize = 2 if cdt == jnp.bfloat16 else 4
    isize = np.dtype(a.dtype).itemsize

    NC = N * C
    plane_in = Hi * Wi * isize
    plane_out = Ho * Wo * isize
    sel_bytes = 2 * (Ho * Hi + Wi * Wo) * csize   # selectors, worst-case double buffered

    # --- Generation-aware VMEM budget (128 MiB on v5e/v6e, 64 MiB on v7x) ----
    phys_vmem = 64 * 1024 * 1024
    try:
        phys_vmem = int(getattr(pltpu.get_tpu_info(), "vmem_capacity_bytes", phys_vmem))
    except Exception:
        pass
    vmem_limit = max(32 * 1024 * 1024, min(int(phys_vmem * 0.75), 96 * 1024 * 1024))
    budget = int(vmem_limit * 0.75)               # headroom for compiler scratch

    # --- Choose how many planes to process per grid step ---------------------
    target_block = 2 * 1024 * 1024                # ~1-2 MiB streamed input block
    max_unroll = 64                               # bound kernel code size
    cap = max(1, min(max_unroll, target_block // max(1, plane_in)))
    if NC >= 2:
        cap = min(cap, -(-NC // 2))               # grid >= 2 so v7x's two TCs both work
    cap = max(1, min(cap, NC))
    Gb = 1
    for d in range(cap, 0, -1):                   # largest divisor of NC <= cap
        if NC % d == 0:
            Gb = d
            break

    def _fits(gb):
        return sel_bytes + 2 * gb * (plane_in + plane_out) <= budget

    while Gb > 1 and not _fits(Gb):
        nd = 1
        for d in range(Gb - 1, 0, -1):
            if NC % d == 0:
                nd = d
                break
        Gb = nd
    if not _fits(Gb):
        # TODO(synk): W-tiling (Sw sliced per lane tile) for single planes too
        # large for VMEM; fall back to a plain XLA gather so the op still runs.
        return _xla_gather_fallback(a, src_h, src_w)

    S = NC // Gb

    # --- Selection matrices (static, built host-side) ------------------------
    Sh = np.zeros((Ho, Hi), np.float32)
    Sh[np.arange(Ho), src_h] = 1.0
    Sw = np.zeros((Wi, Wo), np.float32)
    Sw[src_w, np.arange(Wo)] = 1.0
    Sh_j = jnp.asarray(Sh, dtype=cdt)
    Sw_j = jnp.asarray(Sw, dtype=cdt)

    x = a.reshape(NC, Hi, Wi)                     # copy-free, natural layout

    def _run(precision):
        kernel = _make_resize_kernel(Gb, cdt, precision)
        return pl.pallas_call(
            kernel,
            out_shape=jax.ShapeDtypeStruct((NC, Ho, Wo), a.dtype),
            grid=(S,),
            in_specs=[
                pl.BlockSpec((Ho, Hi), lambda s: (0, 0)),        # Sh (constant index -> fetched once)
                pl.BlockSpec((Wi, Wo), lambda s: (0, 0)),        # Sw (constant index -> fetched once)
                pl.BlockSpec((Gb, Hi, Wi), lambda s: (s, 0, 0)),  # Gb planes per step
            ],
            out_specs=pl.BlockSpec((Gb, Ho, Wo), lambda s: (s, 0, 0)),
            compiler_params=pltpu.CompilerParams(
                dimension_semantics=("parallel",),               # plane blocks are independent
                vmem_limit_bytes=vmem_limit,
            ),
        )(Sh_j, Sw_j, x)

    if cdt == jnp.float32:
        # Pin MXU precision so 0/1 selection stays bit-exact for f32 even if the
        # default lowering changes; fall back to DEFAULT if this toolchain's
        # Mosaic lowering rejects the explicit precision argument.
        try:
            out = _run(lax.Precision.HIGHEST)
        except Exception:
            out = _run(lax.Precision.DEFAULT)
    else:
        out = _run(lax.Precision.DEFAULT)         # bf16 x bf16 -> f32 acc is already exact

    return out.reshape(N, C, Ho, Wo)


def _numpy_reference(a, height, upscale=True):
    a = np.asarray(a)
    N, C, Hi, Wi = a.shape
    zoom = float(height) / float(Hi)
    if not (zoom < 1.0 or (zoom > 1.0 and upscale)):
        return a
    Ho = int(math.floor(Hi * zoom))
    Wo = int(math.floor(Wi * zoom))
    inv = 1.0 / zoom
    sh = np.minimum(np.floor(np.arange(Ho) * inv).astype(np.int64), Hi - 1)
    sw = np.minimum(np.floor(np.arange(Wo) * inv).astype(np.int64), Wi - 1)
    return a[:, :, sh][:, :, :, sw]


if __name__ == "__main__":
    key = jax.random.PRNGKey(0)
    x = jax.random.normal(key, (2, 4, 16, 16), dtype=jnp.float32)

    # Downscale: HeightTo(8) on H=16 -> zoom=0.5 -> output (2, 4, 8, 8)
    y_down = jax.block_until_ready(height_to(x, height=8, upscale=True))
    assert y_down.shape == (2, 4, 8, 8), y_down.shape
    np.testing.assert_allclose(
        np.asarray(y_down), _numpy_reference(x, 8), rtol=1e-6, atol=1e-6
    )

    # Upscale: HeightTo(24) on H=16 -> zoom=1.5 -> output (2, 4, 24, 24)
    y_up = jax.block_until_ready(height_to(x, height=24, upscale=True))
    assert y_up.shape == (2, 4, 24, 24), y_up.shape
    np.testing.assert_allclose(
        np.asarray(y_up), _numpy_reference(x, 24), rtol=1e-6, atol=1e-6
    )

    # bf16 path: operands stay bf16 in-kernel (exact for nearest selection)
    xb = x.astype(jnp.bfloat16)
    y_bf = jax.block_until_ready(height_to(xb, height=8, upscale=True))
    assert y_bf.dtype == jnp.bfloat16 and y_bf.shape == (2, 4, 8, 8)
    np.testing.assert_allclose(
        np.asarray(y_bf).astype(np.float32),
        _numpy_reference(np.asarray(xb).astype(np.float32), 8),
        rtol=1e-6, atol=1e-6,
    )

    # No-op: upscale disabled -> input returned unchanged
    y_same = jax.block_until_ready(height_to(x, height=24, upscale=False))
    assert y_same.shape == x.shape

    print("KERNEL_OK")
</pallas_src>

<mosaic_0001>
module attributes {stable_mosaic.version = 11 : i64} {
  func.func @kernel(%arg0: i32, %arg1: memref<8x16xf32, #tpu.memory_space<vmem>>, %arg2: memref<16x8xf32, #tpu.memory_space<vmem>>, %arg3: memref<4x16x16xf32, #tpu.memory_space<vmem>>, %arg4: memref<4x8x8xf32, #tpu.memory_space<vmem>>) attributes {dimension_semantics = [#tpu.dimension_semantics<parallel>], iteration_bounds = array<i64: 2>, scalar_prefetch = 0 : i64, scratch_operands = 0 : i64, tpu.core_type = #tpu.core_type<tc>, window_params = [{pipeline_mode = #tpu.pipeline_mode<synchronous>, transform_indices = @transform_0, window_bounds = array<i64: 8, 16>}, {pipeline_mode = #tpu.pipeline_mode<synchronous>, transform_indices = @transform_1, window_bounds = array<i64: 16, 8>}, {transform_indices = @transform_2, window_bounds = array<i64: 4, 16, 16>}, {transform_indices = @transform_3, window_bounds = array<i64: 4, 8, 8>}]} {
    %c0 = arith.constant 0 : index
    %c0_0 = arith.constant 0 : index
    %0 = vector.load %arg1[%c0, %c0_0] : memref<8x16xf32, #tpu.memory_space<vmem>>, vector<8x16xf32>
    %c0_1 = arith.constant 0 : index
    %c0_2 = arith.constant 0 : index
    %1 = vector.load %arg2[%c0_1, %c0_2] : memref<16x8xf32, #tpu.memory_space<vmem>>, vector<16x8xf32>
    %c0_3 = arith.constant 0 : index
    %c0_4 = arith.constant 0 : index
    %c0_5 = arith.constant 0 : index
    %2 = vector.load %arg3[%c0_3, %c0_4, %c0_5] : memref<4x16x16xf32, #tpu.memory_space<vmem>>, vector<1x16x16xf32>
    %3 = vector.shape_cast %2 : vector<1x16x16xf32> to vector<16x16xf32>
    %cst = arith.constant dense<0.000000e+00> : vector<8x16xf32>
    %4 = tpu.matmul %0, %3, %cst {dimension_numbers = #tpu.dot_dimension_numbers<[1], [0], [0], [1], [0, 0, 1, 1], [], []>, precision = #tpu.contract_precision<fp32>} : vector<8x16xf32>, vector<16x16xf32>, vector<8x16xf32> -> vector<8x16xf32>
    %cst_6 = arith.constant dense<0.000000e+00> : vector<8x8xf32>
    %5 = tpu.matmul %4, %1, %cst_6 {dimension_numbers = #tpu.dot_dimension_numbers<[1], [0], [0], [1], [0, 0, 1, 1], [], []>, precision = #tpu.contract_precision<fp32>} : vector<8x16xf32>, vector<16x8xf32>, vector<8x8xf32> -> vector<8x8xf32>
    %c0_7 = arith.constant 0 : index
    %c0_8 = arith.constant 0 : index
    %c0_9 = arith.constant 0 : index
    %6 = vector.load %arg4[%c0_7, %c0_8, %c0_9] : memref<4x8x8xf32, #tpu.memory_space<vmem>>, vector<1x8x8xf32>
    %7 = vector.shape_cast %6 : vector<1x8x8xf32> to vector<8x8xf32>
    %8 = vector.shape_cast %5 : vector<8x8xf32> to vector<1x8x8xf32>
    tpu.vector_store %arg4[%c0_7, %c0_8, %c0_9], %8 {strides = array<i32>} : memref<4x8x8xf32, #tpu.memory_space<vmem>>, vector<1x8x8xf32>,
    %c1 = arith.constant 1 : index
    %c0_10 = arith.constant 0 : index
    %c0_11 = arith.constant 0 : index
    %9 = vector.load %arg3[%c1, %c0_10, %c0_11] : memref<4x16x16xf32, #tpu.memory_space<vmem>>, vector<1x16x16xf32>
    %10 = vector.shape_cast %9 : vector<1x16x16xf32> to vector<16x16xf32>
    %cst_12 = arith.constant dense<0.000000e+00> : vector<8x16xf32>
    %11 = tpu.matmul %0, %10, %cst_12 {dimension_numbers = #tpu.dot_dimension_numbers<[1], [0], [0], [1], [0, 0, 1, 1], [], []>, precision = #tpu.contract_precision<fp32>} : vector<8x16xf32>, vector<16x16xf32>, vector<8x16xf32> -> vector<8x16xf32>
    %cst_13 = arith.constant dense<0.000000e+00> : vector<8x8xf32>
    %12 = tpu.matmul %11, %1, %cst_13 {dimension_numbers = #tpu.dot_dimension_numbers<[1], [0], [0], [1], [0, 0, 1, 1], [], []>, precision = #tpu.contract_precision<fp32>} : vector<8x16xf32>, vector<16x8xf32>, vector<8x8xf32> -> vector<8x8xf32>
    %c1_14 = arith.constant 1 : index
    %c0_15 = arith.constant 0 : index
    %c0_16 = arith.constant 0 : index
    %13 = vector.load %arg4[%c1_14, %c0_15, %c0_16] : memref<4x8x8xf32, #tpu.memory_space<vmem>>, vector<1x8x8xf32>
    %14 = vector.shape_cast %13 : vector<1x8x8xf32> to vector<8x8xf32>
    %15 = vector.shape_cast %12 : vector<8x8xf32> to vector<1x8x8xf32>
    tpu.vector_store %arg4[%c1_14, %c0_15, %c0_16], %15 {strides = array<i32>} : memref<4x8x8xf32, #tpu.memory_space<vmem>>, vector<1x8x8xf32>,
    %c2 = arith.constant 2 : index
    %c0_17 = arith.constant 0 : index
    %c0_18 = arith.constant 0 : index
    %16 = vector.load %arg3[%c2, %c0_17, %c0_18] : memref<4x16x16xf32, #tpu.memory_space<vmem>>, vector<1x16x16xf32>
    %17 = vector.shape_cast %16 : vector<1x16x16xf32> to vector<16x16xf32>
    %cst_19 = arith.constant dense<0.000000e+00> : vector<8x16xf32>
    %18 = tpu.matmul %0, %17, %cst_19 {dimension_numbers = #tpu.dot_dimension_numbers<[1], [0], [0], [1], [0, 0, 1, 1], [], []>, precision = #tpu.contract_precision<fp32>} : vector<8x16xf32>, vector<16x16xf32>, vector<8x16xf32> -> vector<8x16xf32>
    %cst_20 = arith.constant dense<0.000000e+00> : vector<8x8xf32>
    %19 = tpu.matmul %18, %1, %cst_20 {dimension_numbers = #tpu.dot_dimension_numbers<[1], [0], [0], [1], [0, 0, 1, 1], [], []>, precision = #tpu.contract_precision<fp32>} : vector<8x16xf32>, vector<16x8xf32>, vector<8x8xf32> -> vector<8x8xf32>
    %c2_21 = arith.constant 2 : index
    %c0_22 = arith.constant 0 : index
    %c0_23 = arith.constant 0 : index
    %20 = vector.load %arg4[%c2_21, %c0_22, %c0_23] : memref<4x8x8xf32, #tpu.memory_space<vmem>>, vector<1x8x8xf32>
    %21 = vector.shape_cast %20 : vector<1x8x8xf32> to vector<8x8xf32>
    %22 = vector.shape_cast %19 : vector<8x8xf32> to vector<1x8x8xf32>
    tpu.vector_store %arg4[%c2_21, %c0_22, %c0_23], %22 {strides = array<i32>} : memref<4x8x8xf32, #tpu.memory_space<vmem>>, vector<1x8x8xf32>,
    %c3 = arith.constant 3 : index
    %c0_24 = arith.constant 0 : index
    %c0_25 = arith.constant 0 : index
    %23 = vector.load %arg3[%c3, %c0_24, %c0_25] : memref<4x16x16xf32, #tpu.memory_space<vmem>>, vector<1x16x16xf32>
    %24 = vector.shape_cast %23 : vector<1x16x16xf32> to vector<16x16xf32>
    %cst_26 = arith.constant dense<0.000000e+00> : vector<8x16xf32>
    %25 = tpu.matmul %0, %24, %cst_26 {dimension_numbers = #tpu.dot_dimension_numbers<[1], [0], [0], [1], [0, 0, 1, 1], [], []>, precision = #tpu.contract_precision<fp32>} : vector<8x16xf32>, vector<16x16xf32>, vector<8x16xf32> -> vector<8x16xf32>
    %cst_27 = arith.constant dense<0.000000e+00> : vector<8x8xf32>
    %26 = tpu.matmul %25, %1, %cst_27 {dimension_numbers = #tpu.dot_dimension_numbers<[1], [0], [0], [1], [0, 0, 1, 1], [], []>, precision = #tpu.contract_precision<fp32>} : vector<8x16xf32>, vector<16x8xf32>, vector<8x8xf32> -> vector<8x8xf32>
    %c3_28 = arith.constant 3 : index
    %c0_29 = arith.constant 0 : index
    %c0_30 = arith.constant 0 : index
    %27 = vector.load %arg4[%c3_28, %c0_29, %c0_30] : memref<4x8x8xf32, #tpu.memory_space<vmem>>, vector<1x8x8xf32>
    %28 = vector.shape_cast %27 : vector<1x8x8xf32> to vector<8x8xf32>
    %29 = vector.shape_cast %26 : vector<8x8xf32> to vector<1x8x8xf32>
    tpu.vector_store %arg4[%c3_28, %c0_29, %c0_30], %29 {strides = array<i32>} : memref<4x8x8xf32, #tpu.memory_space<vmem>>, vector<1x8x8xf32>,
    return
  }
  func.func @transform_0(%arg0: i32) -> (i32, i32) {
    %c0_i32 = arith.constant 0 : i32
    %c0_i32_0 = arith.constant 0 : i32
    %c0_i32_1 = arith.constant 0 : i32
    return %c0_i32, %c0_i32_0 : i32, i32
  }
  func.func @transform_1(%arg0: i32) -> (i32, i32) {
    %c0_i32 = arith.constant 0 : i32
    %c0_i32_0 = arith.constant 0 : i32
    %c0_i32_1 = arith.constant 0 : i32
    return %c0_i32, %c0_i32_0 : i32, i32
  }
  func.func @transform_2(%arg0: i32) -> (i32, i32, i32) {
    %c0_i32 = arith.constant 0 : i32
    %c0_i32_0 = arith.constant 0 : i32
    %c0_i32_1 = arith.constant 0 : i32
    return %arg0, %c0_i32, %c0_i32_0 : i32, i32, i32
  }
  func.func @transform_3(%arg0: i32) -> (i32, i32, i32) {
    %c0_i32 = arith.constant 0 : i32
    %c0_i32_0 = arith.constant 0 : i32
    %c0_i32_1 = arith.constant 0 : i32
    return %arg0, %c0_i32, %c0_i32_0 : i32, i32, i32
  }
}

module attributes {stable_mosaic.version = 11 : i64} {
  func.func @kernel(%arg0: i32, %arg1: memref<8x16xf32, #tpu.memory_space<vmem>>, %arg2: memref<16x8xf32, #tpu.memory_space<vmem>>, %arg3: memref<4x16x16xf32, #tpu.memory_space<vmem>>, %arg4: memref<4x8x8xf32, #tpu.memory_space<vmem>>) attributes {dimension_semantics = [#tpu.dimension_semantics<parallel>], iteration_bounds = array<i64: 2>, scalar_prefetch = 0 : i64, scratch_operands = 0 : i64, tpu.core_type = #tpu.core_type<tc>, window_params = [{pipeline_mode = #tpu.pipeline_mode<synchronous>, transform_indices = @transform_0, window_bounds = array<i64: 8, 16>}, {pipeline_mode = #tpu.pipeline_mode<synchronous>, transform_indices = @transform_1, window_bounds = array<i64: 16, 8>}, {transform_indices = @transform_2, window_bounds = array<i64: 4, 16, 16>}, {transform_indices = @transform_3, window_bounds = array<i64: 4, 8, 8>}]} {
    %c0 = arith.constant 0 : index
    %c0_0 = arith.constant 0 : index
    %0 = vector.load %arg1[%c0, %c0_0] : memref<8x16xf32, #tpu.memory_space<vmem>>, vector<8x16xf32>
    %c0_1 = arith.constant 0 : index
    %c0_2 = arith.constant 0 : index
    %1 = vector.load %arg2[%c0_1, %c0_2] : memref<16x8xf32, #tpu.memory_space<vmem>>, vector<16x8xf32>
    %c0_3 = arith.constant 0 : index
    %c0_4 = arith.constant 0 : index
    %c0_5 = arith.constant 0 : index
    %2 = vector.load %arg3[%c0_3, %c0_4, %c0_5] : memref<4x16x16xf32, #tpu.memory_space<vmem>>, vector<1x16x16xf32>
    %3 = vector.shape_cast %2 : vector<1x16x16xf32> to vector<16x16xf32>
    %cst = arith.constant dense<0.000000e+00> : vector<8x16xf32>
    %4 = tpu.matmul %0, %3, %cst {dimension_numbers = #tpu.dot_dimension_numbers<[1], [0], [0], [1], [0, 0, 1, 1], [], []>} : vector<8x16xf32>, vector<16x16xf32>, vector<8x16xf32> -> vector<8x16xf32>
    %cst_6 = arith.constant dense<0.000000e+00> : vector<8x8xf32>
    %5 = tpu.matmul %4, %1, %cst_6 {dimension_numbers = #tpu.dot_dimension_numbers<[1], [0], [0], [1], [0, 0, 1, 1], [], []>} : vector<8x16xf32>, vector<16x8xf32>, vector<8x8xf32> -> vector<8x8xf32>
    %c0_7 = arith.constant 0 : index
    %c0_8 = arith.constant 0 : index
    %c0_9 = arith.constant 0 : index
    %6 = vector.load %arg4[%c0_7, %c0_8, %c0_9] : memref<4x8x8xf32, #tpu.memory_space<vmem>>, vector<1x8x8xf32>
    %7 = vector.shape_cast %6 : vector<1x8x8xf32> to vector<8x8xf32>
    %8 = vector.shape_cast %5 : vector<8x8xf32> to vector<1x8x8xf32>
    tpu.vector_store %arg4[%c0_7, %c0_8, %c0_9], %8 {strides = array<i32>} : memref<4x8x8xf32, #tpu.memory_space<vmem>>, vector<1x8x8xf32>,
    %c1 = arith.constant 1 : index
    %c0_10 = arith.constant 0 : index
    %c0_11 = arith.constant 0 : index
    %9 = vector.load %arg3[%c1, %c0_10, %c0_11] : memref<4x16x16xf32, #tpu.memory_space<vmem>>, vector<1x16x16xf32>
    %10 = vector.shape_cast %9 : vector<1x16x16xf32> to vector<16x16xf32>
    %cst_12 = arith.constant dense<0.000000e+00> : vector<8x16xf32>
    %11 = tpu.matmul %0, %10, %cst_12 {dimension_numbers = #tpu.dot_dimension_numbers<[1], [0], [0], [1], [0, 0, 1, 1], [], []>} : vector<8x16xf32>, vector<16x16xf32>, vector<8x16xf32> -> vector<8x16xf32>
    %cst_13 = arith.constant dense<0.000000e+00> : vector<8x8xf32>
    %12 = tpu.matmul %11, %1, %cst_13 {dimension_numbers = #tpu.dot_dimension_numbers<[1], [0], [0], [1], [0, 0, 1, 1], [], []>} : vector<8x16xf32>, vector<16x8xf32>, vector<8x8xf32> -> vector<8x8xf32>
    %c1_14 = arith.constant 1 : index
    %c0_15 = arith.constant 0 : index
    %c0_16 = arith.constant 0 : index
    %13 = vector.load %arg4[%c1_14, %c0_15, %c0_16] : memref<4x8x8xf32, #tpu.memory_space<vmem>>, vector<1x8x8xf32>
    %14 = vector.shape_cast %13 : vector<1x8x8xf32> to vector<8x8xf32>
    %15 = vector.shape_cast %12 : vector<8x8xf32> to vector<1x8x8xf32>
    tpu.vector_store %arg4[%c1_14, %c0_15, %c0_16], %15 {strides = array<i32>} : memref<4x8x8xf32, #tpu.memory_space<vmem>>, vector<1x8x8xf32>,
    %c2 = arith.constant 2 : index
    %c0_17 = arith.constant 0 : index
    %c0_18 = arith.constant 0 : index
    %16 = vector.load %arg3[%c2, %c0_17, %c0_18] : memref<4x16x16xf32, #tpu.memory_space<vmem>>, vector<1x16x16xf32>
    %17 = vector.shape_cast %16 : vector<1x16x16xf32> to vector<16x16xf32>
    %cst_19 = arith.constant dense<0.000000e+00> : vector<8x16xf32>
    %18 = tpu.matmul %0, %17, %cst_19 {dimension_numbers = #tpu.dot_dimension_numbers<[1], [0], [0], [1], [0, 0, 1, 1], [], []>} : vector<8x16xf32>, vector<16x16xf32>, vector<8x16xf32> -> vector<8x16xf32>
    %cst_20 = arith.constant dense<0.000000e+00> : vector<8x8xf32>
    %19 = tpu.matmul %18, %1, %cst_20 {dimension_numbers = #tpu.dot_dimension_numbers<[1], [0], [0], [1], [0, 0, 1, 1], [], []>} : vector<8x16xf32>, vector<16x8xf32>, vector<8x8xf32> -> vector<8x8xf32>
    %c2_21 = arith.constant 2 : index
    %c0_22 = arith.constant 0 : index
    %c0_23 = arith.constant 0 : index
    %20 = vector.load %arg4[%c2_21, %c0_22, %c0_23] : memref<4x8x8xf32, #tpu.memory_space<vmem>>, vector<1x8x8xf32>
    %21 = vector.shape_cast %20 : vector<1x8x8xf32> to vector<8x8xf32>
    %22 = vector.shape_cast %19 : vector<8x8xf32> to vector<1x8x8xf32>
    tpu.vector_store %arg4[%c2_21, %c0_22, %c0_23], %22 {strides = array<i32>} : memref<4x8x8xf32, #tpu.memory_space<vmem>>, vector<1x8x8xf32>,
    %c3 = arith.constant 3 : index
    %c0_24 = arith.constant 0 : index
    %c0_25 = arith.constant 0 : index
    %23 = vector.load %arg3[%c3, %c0_24, %c0_25] : memref<4x16x16xf32, #tpu.memory_space<vmem>>, vector<1x16x16xf32>
    %24 = vector.shape_cast %23 : vector<1x16x16xf32> to vector<16x16xf32>
    %cst_26 = arith.constant dense<0.000000e+00> : vector<8x16xf32>
    %25 = tpu.matmul %0, %24, %cst_26 {dimension_numbers = #tpu.dot_dimension_numbers<[1], [0], [0], [1], [0, 0, 1, 1], [], []>} : vector<8x16xf32>, vector<16x16xf32>, vector<8x16xf32> -> vector<8x16xf32>
    %cst_27 = arith.constant dense<0.000000e+00> : vector<8x8xf32>
    %26 = tpu.matmul %25, %1, %cst_27 {dimension_numbers = #tpu.dot_dimension_numbers<[1], [0], [0], [1], [0, 0, 1, 1], [], []>} : vector<8x16xf32>, vector<16x8xf32>, vector<8x8xf32> -> vector<8x8xf32>
    %c3_28 = arith.constant 3 : index
    %c0_29 = arith.constant 0 : index
    %c0_30 = arith.constant 0 : index
    %27 = vector.load %arg4[%c3_28, %c0_29, %c0_30] : memref<4x8x8xf32, #tpu.memory_space<vmem>>, vector<1x8x8xf32>
    %28 = vector.shape_cast %27 : vector<1x8x8xf32> to vector<8x8xf32>
    %29 = vector.shape_cast %26 : vector<8x8xf32> to vector<1x8x8xf32>
    tpu.vector_store %arg4[%c3_28, %c0_29, %c0_30], %29 {strides = array<i32>} : memref<4x8x8xf32, #tpu.memory_space<vmem>>, vector<1x8x8xf32>,
    return
  }
  func.func @transform_0(%arg0: i32) -> (i32, i32) {
    %c0_i32 = arith.constant 0 : i32
    %c0_i32_0 = arith.constant 0 : i32
    %c0_i32_1 = arith.constant 0 : i32
    return %c0_i32, %c0_i32_0 : i32, i32
  }
  func.func @transform_1(%arg0: i32) -> (i32, i32) {
    %c0_i32 = arith.constant 0 : i32
    %c0_i32_0 = arith.constant 0 : i32
    %c0_i32_1 = arith.constant 0 : i32
    return %c0_i32, %c0_i32_0 : i32, i32
  }
  func.func @transform_2(%arg0: i32) -> (i32, i32, i32) {
    %c0_i32 = arith.constant 0 : i32
    %c0_i32_0 = arith.constant 0 : i32
    %c0_i32_1 = arith.constant 0 : i32
    return %arg0, %c0_i32, %c0_i32_0 : i32, i32, i32
  }
  func.func @transform_3(%arg0: i32) -> (i32, i32, i32) {
    %c0_i32 = arith.constant 0 : i32
    %c0_i32_0 = arith.constant 0 : i32
    %c0_i32_1 = arith.constant 0 : i32
    return %arg0, %c0_i32, %c0_i32_0 : i32, i32, i32
  }
}

</mosaic_0001>

<llo_original>
// kernel: tpu_custom_call.1
$region0: #{tpu_custom_call.1}
  #allocation0 [shape = 'u32[]', space=smem, size = 0x4, offset = 0x4, fixed_abs, tag = 'smem constant byte address 0x4 - core index']
  #allocation1 [shape = 'u32[144,128]{1,0:T(1,128)}', space=vmem, size = 0x12000, scoped, tag = 'internal scratch']
  %s0 = inlined_call_operand.vmem [shape: f32[8,16], index: 0, kind: input, shape index: {}]
  %s1 = inlined_call_operand.vmem [shape: f32[16,8], index: 1, kind: input, shape index: {}]
  %s2 = inlined_call_operand.hbm [shape: f32[8,16,16], index: 2, kind: input, shape index: {}]
  %s3 = inlined_call_operand.hbm [shape: f32[8,8,8], index: 3, kind: output, shape index: {}]
  %s4 = sld [smem:[#allocation0]]
  $region49: #{tpu_custom_call.1} parent=0
    _
  %s6 = ssub.s32 1, %s4
  %s7 = scalar_select 0, %s6, %s4
  $region1: #{tpu_custom_call.1} parent=0
    #allocation2 [shape = 'u8[65536]{0}', space=vmem, size = 0x10000, scoped, tag = 'input window, operand 2']
    #allocation3 [shape = 's32[2]{0}', space=sflag, size = 0x8, scoped, tag = 'scoped memory for tpu_custom_call.1']
    #allocation4 [shape = 's32[2]{0}', space=sflag, size = 0x8, scoped, tag = 'scoped memory for tpu_custom_call.1']
    #allocation5 [shape = 'u8[32768]{0}', space=vmem, size = 0x8000, scoped, tag = 'output window, operand 0']
    %8 = vsyncpa [#allocation3], 0
    %s9 = scalar_lea.sflag [#allocation3], 1
    %10 = vsyncpa %s9, 0
    %11 = vsyncpa [#allocation4], 0
    %s12 = scalar_lea.sflag [#allocation4], 1
    %13 = vsyncpa %s12, 0
    loop: start=0, step=1, limit=4
    $region2: #{tpu_custom_call.1} parent=1 // loop_pre_header
      _
    $region3: #{tpu_custom_call.1} parent=1 // loop_header
      %s15 = sphi 0, %s19
      %p16 = scmp.ge.s32.totalorder %s15, 4
      %s23 = sphi 0, %s23
      %s25 = sphi 0, %s23
      %s26 = sphi 0, %s25
      %s40 = sphi 0, %s26
      %s44 = sphi 0, %s44
      %s46 = sphi 0, %s44
      %s47 = sphi 0, %s46
      %s61 = sphi 0, %s47
      %s67 = sphi 0, %s69
      %s70 = sphi 0, %s67
      %s71 = sphi 0, %s70
      %s87 = sphi 0, %s71
      %s93 = sphi 0, %s95
      %s96 = sphi 0, %s93
      %s97 = sphi 0, %s96
      %s113 = sphi 0, %s97
    $region4: #{tpu_custom_call.1} parent=1 // loop_header_branch
      %18 = sbr.rel (%p16) target = $region8
    $region5: #{tpu_custom_call.1} parent=1 // loop_body
      %s20 = ssub.s32 %s15, 1
      %s21 = ssub.s32 %s15, 2
      %s22 = sadd.s32 %s15, 1
      %s24 = sadd.s32 %s23, 1
      %p27 = scmp.eq.s32.totalorder %s15, 1
      %p28 = scmp.ne.s32.totalorder %s23, %s25
      %p29 = scmp.eq.s32.totalorder %s15, 0
      %p30 = por %p28, %p29
      %p31 = scmp.ne.s32.totalorder %s23, %s25
      %p32 = scmp.eq.s32.totalorder %s20, 1
      %p33 = por %p31, %p32
      %p34 = scmp.ne.s32.totalorder %s25, %s26
      %p35 = scmp.eq.s32.totalorder %s20, 0
      %p36 = por %p34, %p35
      %p37 = scmp.ne.s32.totalorder %s25, %s26
      %p38 = scmp.eq.s32.totalorder %s21, 1
      %p39 = por %p37, %p38
      %p41 = scmp.ne.s32.totalorder %s26, %s40
      %p42 = scmp.eq.s32.totalorder %s21, 0
      %p43 = por %p41, %p42
      %s45 = sadd.s32 %s44, 1
      %p48 = scmp.eq.s32.totalorder %s15, 1
      %p49 = scmp.ne.s32.totalorder %s44, %s46
      %p50 = scmp.eq.s32.totalorder %s15, 0
      %p51 = por %p49, %p50
      %p52 = scmp.ne.s32.totalorder %s44, %s46
      %p53 = scmp.eq.s32.totalorder %s20, 1
      %p54 = por %p52, %p53
      %p55 = scmp.ne.s32.totalorder %s46, %s47
      %p56 = scmp.eq.s32.totalorder %s20, 0
      %p57 = por %p55, %p56
      %p58 = scmp.ne.s32.totalorder %s46, %s47
      %p59 = scmp.eq.s32.totalorder %s21, 1
      %p60 = por %p58, %p59
      %p62 = scmp.ne.s32.totalorder %s47, %s61
      %p63 = scmp.eq.s32.totalorder %s21, 0
      %p64 = por %p62, %p63
      %s65 = ssub.s32 %s15, %s22
      %p66 = scmp.eq.s32.totalorder %s65, 0
      %s68 = sadd.s32 %s67, 1
      %s69 = scalar_select %p66, %s67, %s68
      %p72 = pneg %p66
      %p73 = scmp.eq.s32.totalorder %s15, 1
      %p74 = por %p72, %p73
      %p75 = scmp.ne.s32.totalorder %s67, %s70
      %p76 = scmp.eq.s32.totalorder %s15, 0
      %p77 = por %p75, %p76
      %p78 = scmp.ne.s32.totalorder %s67, %s70
      %p79 = scmp.eq.s32.totalorder %s20, 1
      %p80 = por %p78, %p79
      %p81 = scmp.ne.s32.totalorder %s70, %s71
      %p82 = scmp.eq.s32.totalorder %s20, 0
      %p83 = por %p81, %p82
      %p84 = scmp.ne.s32.totalorder %s70, %s71
      %p85 = scmp.eq.s32.totalorder %s21, 1
      %p86 = por %p84, %p85
      %p88 = scmp.ne.s32.totalorder %s71, %s87
      %p89 = scmp.eq.s32.totalorder %s21, 0
      %p90 = por %p88, %p89
      %s91 = ssub.s32 %s15, %s22
      %p92 = scmp.eq.s32.totalorder %s91, 0
      %s94 = sadd.s32 %s93, 1
      %s95 = scalar_select %p92, %s93, %s94
      %p98 = pneg %p92
      %p99 = scmp.eq.s32.totalorder %s15, 1
      %p100 = por %p98, %p99
      %p101 = scmp.ne.s32.totalorder %s93, %s96
      %p102 = scmp.eq.s32.totalorder %s15, 0
      %p103 = por %p101, %p102
      %p104 = scmp.ne.s32.totalorder %s93, %s96
      %p105 = scmp.eq.s32.totalorder %s20, 1
      %p106 = por %p104, %p105
      %p107 = scmp.ne.s32.totalorder %s96, %s97
      %p108 = scmp.eq.s32.totalorder %s20, 0
      %p109 = por %p107, %p108
      %p110 = scmp.ne.s32.totalorder %s96, %s97
      %p111 = scmp.eq.s32.totalorder %s21, 1
      %p112 = por %p110, %p111
      %p114 = scmp.ne.s32.totalorder %s97, %s113
      %p115 = scmp.eq.s32.totalorder %s21, 0
      %p116 = por %p114, %p115
      %p117 = scmp.le.s32.totalorder 1, %s15
      %p118 = scmp.lt.s32.totalorder %s15, 3
      %p119 = pnand %p117, %p118
      %p120 = pneg %p119
      // Predicated region
      $region9: #{tpu_custom_call.1} parent=5 // pred_check
        _
      $region10: #{tpu_custom_call.1} parent=5 // pred_check_branch
        %122 = sbr.rel (%p119) target = $region12
      $region11: #{tpu_custom_call.1} parent=5 // pred_region
        %s123 = ssub.s32 %s15, 1
        // Predicated region
        $region13: #{tpu_custom_call.1} parent=11 // pred_check
          %p124 = pneg %p36
        $region14: #{tpu_custom_call.1} parent=11 // pred_check_branch
          %126 = sbr.rel (%p124) target = $region16
        $region15: #{tpu_custom_call.1} parent=11 // pred_region
          _
        $region16: #{tpu_custom_call.1} parent=11 // pred_fallthru
          _
        // Predicated region
        $region17: #{tpu_custom_call.1} parent=11 // pred_check
          %p127 = pneg %p57
        $region18: #{tpu_custom_call.1} parent=11 // pred_check_branch
          %129 = sbr.rel (%p127) target = $region20
        $region19: #{tpu_custom_call.1} parent=11 // pred_region
          _
        $region20: #{tpu_custom_call.1} parent=11 // pred_fallthru
          _
      $region12: #{tpu_custom_call.1} parent=5 // pred_fallthru
        _
      %p130 = scmp.lt.s32.totalorder %s15, 2
      // Predicated region
      $region21: #{tpu_custom_call.1} parent=5 // pred_check
        %p131 = pneg %p130
      $region22: #{tpu_custom_call.1} parent=5 // pred_check_branch
        %133 = sbr.rel (%p131) target = $region24
      $region23: #{tpu_custom_call.1} parent=5 // pred_region
        // Predicated region
        $region25: #{tpu_custom_call.1} parent=23 // pred_check
          %p134 = pneg %p77
        $region26: #{tpu_custom_call.1} parent=23 // pred_check_branch
          %136 = sbr.rel (%p134) target = $region28
        $region27: #{tpu_custom_call.1} parent=23 // pred_region
          %s137 = sand.u32 %s67, 1
          %s138 = scalar_lea.sflag [#allocation3], %s137
          %s139 = sand.u32 %s67, 1
          %s140 = smul.addr %s139, 64
          %s141 = scalar_lea.vmem [#allocation2], %s140
          %s142 = smul.u32 4, %s15
          %s144 = ssub.s32 1024, 1024
          %145 = vsyncadd %s138, %s144
          %s146 = smul.addr %s142, 2
          %s147 = smul.addr %s146, 128
          %s148 = scalar_lea.hbm %s2, %s147
          %s149 = sshll.u32 %s141, 4
          %s150 = int_to_ptr.vmem [resolvable:$true] %s149
          %155 = dma.hbm_to_vmem [thread:$0]  %s148, 1024, %s150, %s138, 128, 128, 8
        $region28: #{tpu_custom_call.1} parent=23 // pred_fallthru
          _
      $region24: #{tpu_custom_call.1} parent=5 // pred_fallthru
        _
      %p156 = scmp.le.s32.totalorder 1, %s15
      %p157 = scmp.lt.s32.totalorder %s15, 3
      %p158 = pnand %p156, %p157
      %p159 = pneg %p158
      // Predicated region
      $region29: #{tpu_custom_call.1} parent=5 // pred_check
        _
      $region30: #{tpu_custom_call.1} parent=5 // pred_check_branch
        %161 = sbr.rel (%p158) target = $region32
      $region31: #{tpu_custom_call.1} parent=5 // pred_region
        %s162 = ssub.s32 %s15, 1
        %s163 = sand.u32 %s70, 1
        %s164 = scalar_lea.sflag [#allocation3], %s163
        %s165 = sand.u32 %s70, 1
        %s166 = smul.addr %s165, 64
        %s167 = scalar_lea.vmem [#allocation2], %s166
        // Predicated region
        $region33: #{tpu_custom_call.1} parent=31 // pred_check
          %p168 = pneg %p83
        $region34: #{tpu_custom_call.1} parent=31 // pred_check_branch
          %170 = sbr.rel (%p168) target = $region36
        $region35: #{tpu_custom_call.1} parent=31 // pred_region
          %171 = dma.done %s164, 1024
        $region36: #{tpu_custom_call.1} parent=31 // pred_fallthru
          _
        %p172 = pneg %p36
        %p173 = pneg %p33
        %p174 = pneg %p57
        %p175 = pneg %p54
        %s176 = sand.u32 %s70, 1
        %s177 = scalar_lea.sflag [#allocation3], %s176
        %s178 = sand.u32 %s70, 1
        %s179 = smul.addr %s178, 64
        %s180 = scalar_lea.vmem [#allocation2], %s179
        %p181 = pneg %p83
        %p182 = pneg %p80
        %p183 = pneg %p109
        %p184 = pneg %p106
        %s185 = sand.u32 %s96, 1
        %s186 = scalar_lea.sflag [#allocation4], %s185
        %s187 = sand.u32 %s96, 1
        %s188 = smul.addr %s187, 32
        %s189 = scalar_lea.vmem [#allocation5], %s188
        %s190 = smul.u32 4, %s20
        %s191 = smul.u32 4, %s20
        %v192 = vld [vmem:[%s0] sm:$0xff]
        %v193 = vld [vmem:[%s1] sm:$0xff]
        %v194 = vld [vmem:[%s1 + $0x8] sm:$0xff]
        %v195 = vld [vmem:[%s167] sm:$0xff]
        %v196 = vld [vmem:[%s167 + $0x8] sm:$0xff]
        %vm197 = vcmask 130048
        %v199 = vsel %vm197, %v192, 0
        %201 = vmatprep.subr.mxu0 0.0
        %v202 = vand.u32 %v195, 4294901760
        %203 = vmatpush1.msra.mxu0 %v202
        %204 = vmatprep.subr.mxu0 0.0
        %v205 = vand.u32 %v196, 4294901760
        %206 = vmatpush1.msra.mxu0 %v205
        %207 = vmatprep.subr.mxu0 0.0
        %208 = vmatpush1.msra.mxu0 0.0
        %209 = vmatprep.subr.mxu0 0.0
        %210 = vmatpush1.msra.mxu0 0.0
        %211 = vmatprep.subr.mxu0 0.0
        %212 = vmatpush1.msra.mxu0 0.0
        %213 = vmatprep.subr.mxu0 0.0
        %214 = vmatpush1.msra.mxu0 0.0
        %215 = vmatprep.subr.mxu0 0.0
        %216 = vmatpush1.msra.mxu0 0.0
        %217 = vmatprep.subr.mxu0 0.0
        %218 = vmatpush1.msra.mxu0 0.0
        %219 = vmatprep.subr.mxu0 0.0
        %220 = vmatpush1.msra.mxu0 0.0
        %221 = vmatprep.subr.mxu0 0.0
        %222 = vmatpush1.msra.mxu0 0.0
        %223 = vmatprep.subr.mxu0 0.0
        %224 = vmatpush1.msra.mxu0 0.0
        %225 = vmatprep.subr.mxu0 0.0
        %226 = vmatpush1.msra.mxu0 0.0
        %227 = vmatprep.subr.mxu0 0.0
        %228 = vmatpush1.msra.mxu0 0.0
        %229 = vmatprep.subr.mxu0 0.0
        %230 = vmatpush1.msra.mxu0 0.0
        %231 = vmatprep.subr.mxu0 0.0
        %232 = vmatpush1.msra.mxu0 0.0
        %233 = vmatprep.subr.mxu0 0.0
        %234 = vmatpush1.msra.mxu0 0.0
        %235 = vmatprep.subr.mxu0 0.0
        %236 = vmatpush1.msra.mxu0 0.0
        %237 = vmatprep.subr.mxu0 0.0
        %238 = vmatpush1.msra.mxu0 0.0
        %239 = vmatprep.subr.mxu0 0.0
        %240 = vmatpush1.msra.mxu0 0.0
        %241 = vmatprep.subr.mxu0 0.0
        %242 = vmatpush1.msra.mxu0 0.0
        %243 = vmatprep.subr.mxu0 0.0
        %244 = vmatpush1.msra.mxu0 0.0
        %245 = vmatprep.subr.mxu0 0.0
        %246 = vmatpush1.msra.mxu0 0.0
        %247 = vmatprep.subr.mxu0 0.0
        %248 = vmatpush1.msra.mxu0 0.0
        %249 = vmatprep.subr.mxu0 0.0
        %250 = vmatpush1.msra.mxu0 0.0
        %251 = vmatprep.subr.mxu0 0.0
        %252 = vmatpush1.msra.mxu0 0.0
        %253 = vmatprep.subr.mxu0 0.0
        %254 = vmatpush1.msra.mxu0 0.0
        %255 = vmatprep.subr.mxu0 0.0
        %256 = vmatpush1.msra.mxu0 0.0
        %257 = vmatprep.subr.mxu0 0.0
        %258 = vmatpush1.msra.mxu0 0.0
        %259 = vmatprep.subr.mxu0 0.0
        %260 = vmatpush1.msra.mxu0 0.0
        %261 = vmatprep.subr.mxu0 0.0
        %262 = vmatpush1.msra.mxu0 0.0
        %263 = vmatprep.subr.mxu0 0.0
        %264 = vmatpush1.msra.mxu0 0.0
        %265 = vmatprep.subr.mxu0 0.0
        %266 = vmatpush1.msra.mxu0 0.0
        %267 = vmatprep.mubr.f32.mxu0 0.0
        %v268 = vand.u32 %v199, 4294901760
        %v269 = vsub.f32 %v199, %v268
        %v270 = vand.u32 %v269, 4294901760
        %v271 = vsub.f32 %v269, %v270
        %v272 = vand.u32 %v271, 4294901760
        %273 = vmatmul.mubr.f32.gmra.mrb[0].mxu0 %v272
        %v274 = vpop.f32.mrb[0].mxu0
        %v275 = vadd.f32 0.0, %v274
        %v276 = vpop.f32.mrb[0].mxu0
        %277 = vdwg.mxu0
        %278 = vmatprep.subr.mxu0 0.0
        %v279 = vand.u32 %v195, 4294901760
        %v280 = vsub.f32 %v195, %v279
        %v281 = vand.u32 %v280, 4294901760
        %v282 = vsub.f32 %v280, %v281
        %v283 = vand.u32 %v282, 4294901760
        %284 = vmatpush1.msra.mxu0 %v283
        %285 = vmatprep.subr.mxu0 0.0
        %v286 = vand.u32 %v196, 4294901760
        %v287 = vsub.f32 %v196, %v286
        %v288 = vand.u32 %v287, 4294901760
        %v289 = vsub.f32 %v287, %v288
        %v290 = vand.u32 %v289, 4294901760
        %291 = vmatpush1.msra.mxu0 %v290
        %292 = vmatprep.subr.mxu0 0.0
        %293 = vmatpush1.msra.mxu0 0.0
        %294 = vmatprep.subr.mxu0 0.0
        %295 = vmatpush1.msra.mxu0 0.0
        %296 = vmatprep.subr.mxu0 0.0
        %297 = vmatpush1.msra.mxu0 0.0
        %298 = vmatprep.subr.mxu0 0.0
        %299 = vmatpush1.msra.mxu0 0.0
        %300 = vmatprep.subr.mxu0 0.0
        %301 = vmatpush1.msra.mxu0 0.0
        %302 = vmatprep.subr.mxu0 0.0
        %303 = vmatpush1.msra.mxu0 0.0
        %304 = vmatprep.subr.mxu0 0.0
        %305 = vmatpush1.msra.mxu0 0.0
        %306 = vmatprep.subr.mxu0 0.0
        %307 = vmatpush1.msra.mxu0 0.0
        %308 = vmatprep.subr.mxu0 0.0
        %309 = vmatpush1.msra.mxu0 0.0
        %310 = vmatprep.subr.mxu0 0.0
        %311 = vmatpush1.msra.mxu0 0.0
        %312 = vmatprep.subr.mxu0 0.0
        %313 = vmatpush1.msra.mxu0 0.0
        %314 = vmatprep.subr.mxu0 0.0
        %315 = vmatpush1.msra.mxu0 0.0
        %316 = vmatprep.subr.mxu0 0.0
        %317 = vmatpush1.msra.mxu0 0.0
        %318 = vmatprep.subr.mxu0 0.0
        %319 = vmatpush1.msra.mxu0 0.0
        %320 = vmatprep.subr.mxu0 0.0
        %321 = vmatpush1.msra.mxu0 0.0
        %322 = vmatprep.subr.mxu0 0.0
        %323 = vmatpush1.msra.mxu0 0.0
        %324 = vmatprep.subr.mxu0 0.0
        %325 = vmatpush1.msra.mxu0 0.0
        %326 = vmatprep.subr.mxu0 0.0
        %327 = vmatpush1.msra.mxu0 0.0
        %328 = vmatprep.subr.mxu0 0.0
        %329 = vmatpush1.msra.mxu0 0.0
        %330 = vmatprep.subr.mxu0 0.0
        %331 = vmatpush1.msra.mxu0 0.0
        %332 = vmatprep.subr.mxu0 0.0
        %333 = vmatpush1.msra.mxu0 0.0
        %334 = vmatprep.subr.mxu0 0.0
        %335 = vmatpush1.msra.mxu0 0.0
        %336 = vmatprep.subr.mxu0 0.0
        %337 = vmatpush1.msra.mxu0 0.0
        %338 = vmatprep.subr.mxu0 0.0
        %339 = vmatpush1.msra.mxu0 0.0
        %340 = vmatprep.subr.mxu0 0.0
        %341 = vmatpush1.msra.mxu0 0.0
        %342 = vmatprep.subr.mxu0 0.0
        %343 = vmatpush1.msra.mxu0 0.0
        %344 = vmatprep.subr.mxu0 0.0
        %345 = vmatpush1.msra.mxu0 0.0
        %346 = vmatprep.subr.mxu0 0.0
        %347 = vmatpush1.msra.mxu0 0.0
        %348 = vmatprep.subr.mxu0 0.0
        %349 = vmatpush1.msra.mxu0 0.0
        %350 = vmatprep.subr.mxu0 0.0
        %351 = vmatpush1.msra.mxu0 0.0
        %352 = vmatprep.mubr.f32.mxu0 0.0
        %v353 = vand.u32 %v199, 4294901760
        %354 = vmatmul.mubr.f32.gmra.mrb[0].mxu0 %v353
        %v355 = vpop.f32.mrb[0].mxu0
        %v356 = vadd.f32 %v275, %v355
        %v357 = vpop.f32.mrb[0].mxu0
        %358 = vdwg.mxu0
        %359 = vmatprep.subr.mxu0 0.0
        %v360 = vand.u32 %v195, 4294901760
        %v361 = vsub.f32 %v195, %v360
        %362 = vmatpush1.msra.mxu0 %v361
        %363 = vmatprep.subr.mxu0 0.0
        %v364 = vand.u32 %v196, 4294901760
        %v365 = vsub.f32 %v196, %v364
        %366 = vmatpush1.msra.mxu0 %v365
        %367 = vmatprep.subr.mxu0 0.0
        %368 = vmatpush1.msra.mxu0 0.0
        %369 = vmatprep.subr.mxu0 0.0
        %370 = vmatpush1.msra.mxu0 0.0
        %371 = vmatprep.subr.mxu0 0.0
        %372 = vmatpush1.msra.mxu0 0.0
        %373 = vmatprep.subr.mxu0 0.0
        %374 = vmatpush1.msra.mxu0 0.0
        %375 = vmatprep.subr.mxu0 0.0
        %376 = vmatpush1.msra.mxu0 0.0
        %377 = vmatprep.subr.mxu0 0.0
        %378 = vmatpush1.msra.mxu0 0.0
        %379 = vmatprep.subr.mxu0 0.0
        %380 = vmatpush1.msra.mxu0 0.0
        %381 = vmatprep.subr.mxu0 0.0
        %382 = vmatpush1.msra.mxu0 0.0
        %383 = vmatprep.subr.mxu0 0.0
        %384 = vmatpush1.msra.mxu0 0.0
        %385 = vmatprep.subr.mxu0 0.0
        %386 = vmatpush1.msra.mxu0 0.0
        %387 = vmatprep.subr.mxu0 0.0
        %388 = vmatpush1.msra.mxu0 0.0
        %389 = vmatprep.subr.mxu0 0.0
        %390 = vmatpush1.msra.mxu0 0.0
        %391 = vmatprep.subr.mxu0 0.0
        %392 = vmatpush1.msra.mxu0 0.0
        %393 = vmatprep.subr.mxu0 0.0
        %394 = vmatpush1.msra.mxu0 0.0
        %395 = vmatprep.subr.mxu0 0.0
        %396 = vmatpush1.msra.mxu0 0.0
        %397 = vmatprep.subr.mxu0 0.0
        %398 = vmatpush1.msra.mxu0 0.0
        %399 = vmatprep.subr.mxu0 0.0
        %400 = vmatpush1.msra.mxu0 0.0
        %401 = vmatprep.subr.mxu0 0.0
        %402 = vmatpush1.msra.mxu0 0.0
        %403 = vmatprep.subr.mxu0 0.0
        %404 = vmatpush1.msra.mxu0 0.0
        %405 = vmatprep.subr.mxu0 0.0
        %406 = vmatpush1.msra.mxu0 0.0
        %407 = vmatprep.subr.mxu0 0.0
        %408 = vmatpush1.msra.mxu0 0.0
        %409 = vmatprep.subr.mxu0 0.0
        %410 = vmatpush1.msra.mxu0 0.0
        %411 = vmatprep.subr.mxu0 0.0
        %412 = vmatpush1.msra.mxu0 0.0
        %413 = vmatprep.subr.mxu0 0.0
        %414 = vmatpush1.msra.mxu0 0.0
        %415 = vmatprep.subr.mxu0 0.0
        %416 = vmatpush1.msra.mxu0 0.0
        %417 = vmatprep.subr.mxu0 0.0
        %418 = vmatpush1.msra.mxu0 0.0
        %419 = vmatprep.subr.mxu0 0.0
        %420 = vmatpush1.msra.mxu0 0.0
        %421 = vmatprep.subr.mxu0 0.0
        %422 = vmatpush1.msra.mxu0 0.0
        %423 = vmatprep.subr.mxu0 0.0
        %424 = vmatpush1.msra.mxu0 0.0
        %425 = vmatprep.subr.mxu0 0.0
        %426 = vmatpush1.msra.mxu0 0.0
        %427 = vmatprep.mubr.f32.mxu0 0.0
        %v428 = vand.u32 %v199, 4294901760
        %v429 = vsub.f32 %v199, %v428
        %430 = vmatmul.mubr.f32.gmra.mrb[0].mxu0 %v429
        %v431 = vpop.f32.mrb[0].mxu0
        %v432 = vadd.f32 %v356, %v431
        %v433 = vpop.f32.mrb[0].mxu0
        %434 = vdwg.mxu0
        %435 = vmatprep.subr.mxu0 0.0
        %v436 = vand.u32 %v195, 4294901760
        %437 = vmatpush1.msra.mxu0 %v436
        %438 = vmatprep.subr.mxu0 0.0
        %v439 = vand.u32 %v196, 4294901760
        %440 = vmatpush1.msra.mxu0 %v439
        %441 = vmatprep.subr.mxu0 0.0
        %442 = vmatpush1.msra.mxu0 0.0
        %443 = vmatprep.subr.mxu0 0.0
        %444 = vmatpush1.msra.mxu0 0.0
        %445 = vmatprep.subr.mxu0 0.0
        %446 = vmatpush1.msra.mxu0 0.0
        %447 = vmatprep.subr.mxu0 0.0
        %448 = vmatpush1.msra.mxu0 0.0
        %449 = vmatprep.subr.mxu0 0.0
        %450 = vmatpush1.msra.mxu0 0.0
        %451 = vmatprep.subr.mxu0 0.0
        %452 = vmatpush1.msra.mxu0 0.0
        %453 = vmatprep.subr.mxu0 0.0
        %454 = vmatpush1.msra.mxu0 0.0
        %455 = vmatprep.subr.mxu0 0.0
        %456 = vmatpush1.msra.mxu0 0.0
        %457 = vmatprep.subr.mxu0 0.0
        %458 = vmatpush1.msra.mxu0 0.0
        %459 = vmatprep.subr.mxu0 0.0
        %460 = vmatpush1.msra.mxu0 0.0
        %461 = vmatprep.subr.mxu0 0.0
        %462 = vmatpush1.msra.mxu0 0.0
        %463 = vmatprep.subr.mxu0 0.0
        %464 = vmatpush1.msra.mxu0 0.0
        %465 = vmatprep.subr.mxu0 0.0
        %466 = vmatpush1.msra.mxu0 0.0
        %467 = vmatprep.subr.mxu0 0.0
        %468 = vmatpush1.msra.mxu0 0.0
        %469 = vmatprep.subr.mxu0 0.0
        %470 = vmatpush1.msra.mxu0 0.0
        %471 = vmatprep.subr.mxu0 0.0
        %472 = vmatpush1.msra.mxu0 0.0
        %473 = vmatprep.subr.mxu0 0.0
        %474 = vmatpush1.msra.mxu0 0.0
        %475 = vmatprep.subr.mxu0 0.0
        %476 = vmatpush1.msra.mxu0 0.0
        %477 = vmatprep.subr.mxu0 0.0
        %478 = vmatpush1.msra.mxu0 0.0
        %479 = vmatprep.subr.mxu0 0.0
        %480 = vmatpush1.msra.mxu0 0.0
        %481 = vmatprep.subr.mxu0 0.0
        %482 = vmatpush1.msra.mxu0 0.0
        %483 = vmatprep.subr.mxu0 0.0
        %484 = vmatpush1.msra.mxu0 0.0
        %485 = vmatprep.subr.mxu0 0.0
        %486 = vmatpush1.msra.mxu0 0.0
        %487 = vmatprep.subr.mxu0 0.0
        %488 = vmatpush1.msra.mxu0 0.0
        %489 = vmatprep.subr.mxu0 0.0
        %490 = vmatpush1.msra.mxu0 0.0
        %491 = vmatprep.subr.mxu0 0.0
        %492 = vmatpush1.msra.mxu0 0.0
        %493 = vmatprep.subr.mxu0 0.0
        %494 = vmatpush1.msra.mxu0 0.0
        %495 = vmatprep.subr.mxu0 0.0
        %496 = vmatpush1.msra.mxu0 0.0
        %497 = vmatprep.subr.mxu0 0.0
        %498 = vmatpush1.msra.mxu0 0.0
        %499 = vmatprep.subr.mxu0 0.0
        %500 = vmatpush1.msra.mxu0 0.0
        %501 = vmatprep.mubr.f32.mxu0 0.0
        %v502 = vand.u32 %v199, 4294901760
        %v503 = vsub.f32 %v199, %v502
        %v504 = vand.u32 %v503, 4294901760
        %505 = vmatmul.mubr.f32.gmra.mrb[0].mxu0 %v504
        %v506 = vpop.f32.mrb[0].mxu0
        %v507 = vadd.f32 %v432, %v506
        %v508 = vpop.f32.mrb[0].mxu0
        %509 = vdwg.mxu0
        %510 = vmatprep.subr.mxu0 0.0
        %v511 = vand.u32 %v195, 4294901760
        %v512 = vsub.f32 %v195, %v511
        %v513 = vand.u32 %v512, 4294901760
        %514 = vmatpush1.msra.mxu0 %v513
        %515 = vmatprep.subr.mxu0 0.0
        %v516 = vand.u32 %v196, 4294901760
        %v517 = vsub.f32 %v196, %v516
        %v518 = vand.u32 %v517, 4294901760
        %519 = vmatpush1.msra.mxu0 %v518
        %520 = vmatprep.subr.mxu0 0.0
        %521 = vmatpush1.msra.mxu0 0.0
        %522 = vmatprep.subr.mxu0 0.0
        %523 = vmatpush1.msra.mxu0 0.0
        %524 = vmatprep.subr.mxu0 0.0
        %525 = vmatpush1.msra.mxu0 0.0
        %526 = vmatprep.subr.mxu0 0.0
        %527 = vmatpush1.msra.mxu0 0.0
        %528 = vmatprep.subr.mxu0 0.0
        %529 = vmatpush1.msra.mxu0 0.0
        %530 = vmatprep.subr.mxu0 0.0
        %531 = vmatpush1.msra.mxu0 0.0
        %532 = vmatprep.subr.mxu0 0.0
        %533 = vmatpush1.msra.mxu0 0.0
        %534 = vmatprep.subr.mxu0 0.0
        %535 = vmatpush1.msra.mxu0 0.0
        %536 = vmatprep.subr.mxu0 0.0
        %537 = vmatpush1.msra.mxu0 0.0
        %538 = vmatprep.subr.mxu0 0.0
        %539 = vmatpush1.msra.mxu0 0.0
        %540 = vmatprep.subr.mxu0 0.0
        %541 = vmatpush1.msra.mxu0 0.0
        %542 = vmatprep.subr.mxu0 0.0
        %543 = vmatpush1.msra.mxu0 0.0
        %544 = vmatprep.subr.mxu0 0.0
        %545 = vmatpush1.msra.mxu0 0.0
        %546 = vmatprep.subr.mxu0 0.0
        %547 = vmatpush1.msra.mxu0 0.0
        %548 = vmatprep.subr.mxu0 0.0
        %549 = vmatpush1.msra.mxu0 0.0
        %550 = vmatprep.subr.mxu0 0.0
        %551 = vmatpush1.msra.mxu0 0.0
        %552 = vmatprep.subr.mxu0 0.0
        %553 = vmatpush1.msra.mxu0 0.0
        %554 = vmatprep.subr.mxu0 0.0
        %555 = vmatpush1.msra.mxu0 0.0
        %556 = vmatprep.subr.mxu0 0.0
        %557 = vmatpush1.msra.mxu0 0.0
        %558 = vmatprep.subr.mxu0 0.0
        %559 = vmatpush1.msra.mxu0 0.0
        %560 = vmatprep.subr.mxu0 0.0
        %561 = vmatpush1.msra.mxu0 0.0
        %562 = vmatprep.subr.mxu0 0.0
        %563 = vmatpush1.msra.mxu0 0.0
        %564 = vmatprep.subr.mxu0 0.0
        %565 = vmatpush1.msra.mxu0 0.0
        %566 = vmatprep.subr.mxu0 0.0
        %567 = vmatpush1.msra.mxu0 0.0
        %568 = vmatprep.subr.mxu0 0.0
        %569 = vmatpush1.msra.mxu0 0.0
        %570 = vmatprep.subr.mxu0 0.0
        %571 = vmatpush1.msra.mxu0 0.0
        %572 = vmatprep.subr.mxu0 0.0
        %573 = vmatpush1.msra.mxu0 0.0
        %574 = vmatprep.subr.mxu0 0.0
        %575 = vmatpush1.msra.mxu0 0.0
        %576 = vmatprep.subr.mxu0 0.0
        %577 = vmatpush1.msra.mxu0 0.0
        %578 = vmatprep.subr.mxu0 0.0
        %579 = vmatpush1.msra.mxu0 0.0
        %580 = vmatprep.mubr.f32.mxu0 0.0
        %v581 = vand.u32 %v199, 4294901760
        %582 = vmatmul.mubr.f32.gmra.mrb[0].mxu0 %v581
        %v583 = vpop.f32.mrb[0].mxu0
        %v584 = vadd.f32 %v507, %v583
        %v585 = vpop.f32.mrb[0].mxu0
        %586 = vdwg.mxu0
        %587 = vmatprep.subr.mxu0 0.0
        %v588 = vand.u32 %v195, 4294901760
        %589 = vmatpush1.msra.mxu0 %v588
        %590 = vmatprep.subr.mxu0 0.0
        %v591 = vand.u32 %v196, 4294901760
        %592 = vmatpush1.msra.mxu0 %v591
        %593 = vmatprep.subr.mxu0 0.0
        %594 = vmatpush1.msra.mxu0 0.0
        %595 = vmatprep.subr.mxu0 0.0
        %596 = vmatpush1.msra.mxu0 0.0
        %597 = vmatprep.subr.mxu0 0.0
        %598 = vmatpush1.msra.mxu0 0.0
        %599 = vmatprep.subr.mxu0 0.0
        %600 = vmatpush1.msra.mxu0 0.0
        %601 = vmatprep.subr.mxu0 0.0
        %602 = vmatpush1.msra.mxu0 0.0
        %603 = vmatprep.subr.mxu0 0.0
        %604 = vmatpush1.msra.mxu0 0.0
        %605 = vmatprep.subr.mxu0 0.0
        %606 = vmatpush1.msra.mxu0 0.0
        %607 = vmatprep.subr.mxu0 0.0
        %608 = vmatpush1.msra.mxu0 0.0
        %609 = vmatprep.subr.mxu0 0.0
        %610 = vmatpush1.msra.mxu0 0.0
        %611 = vmatprep.subr.mxu0 0.0
        %612 = vmatpush1.msra.mxu0 0.0
        %613 = vmatprep.subr.mxu0 0.0
        %614 = vmatpush1.msra.mxu0 0.0
        %615 = vmatprep.subr.mxu0 0.0
        %616 = vmatpush1.msra.mxu0 0.0
        %617 = vmatprep.subr.mxu0 0.0
        %618 = vmatpush1.msra.mxu0 0.0
        %619 = vmatprep.subr.mxu0 0.0
        %620 = vmatpush1.msra.mxu0 0.0
        %621 = vmatprep.subr.mxu0 0.0
        %622 = vmatpush1.msra.mxu0 0.0
        %623 = vmatprep.subr.mxu0 0.0
        %624 = vmatpush1.msra.mxu0 0.0
        %625 = vmatprep.subr.mxu0 0.0
        %626 = vmatpush1.msra.mxu0 0.0
        %627 = vmatprep.subr.mxu0 0.0
        %628 = vmatpush1.msra.mxu0 0.0
        %629 = vmatprep.subr.mxu0 0.0
        %630 = vmatpush1.msra.mxu0 0.0
        %631 = vmatprep.subr.mxu0 0.0
        %632 = vmatpush1.msra.mxu0 0.0
        %633 = vmatprep.subr.mxu0 0.0
        %634 = vmatpush1.msra.mxu0 0.0
        %635 = vmatprep.subr.mxu0 0.0
        %636 = vmatpush1.msra.mxu0 0.0
        %637 = vmatprep.subr.mxu0 0.0
        %638 = vmatpush1.msra.mxu0 0.0
        %639 = vmatprep.subr.mxu0 0.0
        %640 = vmatpush1.msra.mxu0 0.0
        %641 = vmatprep.subr.mxu0 0.0
        %642 = vmatpush1.msra.mxu0 0.0
        %643 = vmatprep.subr.mxu0 0.0
        %644 = vmatpush1.msra.mxu0 0.0
        %645 = vmatprep.subr.mxu0 0.0
        %646 = vmatpush1.msra.mxu0 0.0
        %647 = vmatprep.subr.mxu0 0.0
        %648 = vmatpush1.msra.mxu0 0.0
        %649 = vmatprep.subr.mxu0 0.0
        %650 = vmatpush1.msra.mxu0 0.0
        %651 = vmatprep.subr.mxu0 0.0
        %652 = vmatpush1.msra.mxu0 0.0
        %653 = vmatprep.mubr.f32.mxu0 0.0
        %v654 = vand.u32 %v199, 4294901760
        %655 = vmatmul.mubr.f32.gmra.mrb[0].mxu0 %v654
        %v656 = vpop.f32.mrb[0].mxu0
        %v657 = vadd.f32 %v584, %v656
        %v658 = vpop.f32.mrb[0].mxu0
        %659 = vdwg.mxu0
        %v661 = vsel %vm197, %v657, 0
        %663 = vmatprep.subr.mxu0 0.0
        %v664 = vand.u32 %v193, 4294901760
        %665 = vmatpush1.msra.mxu0 %v664
        %666 = vmatprep.subr.mxu0 0.0
        %v667 = vand.u32 %v194, 4294901760
        %668 = vmatpush1.msra.mxu0 %v667
        %669 = vmatprep.subr.mxu0 0.0
        %670 = vmatpush1.msra.mxu0 0.0
        %671 = vmatprep.subr.mxu0 0.0
        %672 = vmatpush1.msra.mxu0 0.0
        %673 = vmatprep.subr.mxu0 0.0
        %674 = vmatpush1.msra.mxu0 0.0
        %675 = vmatprep.subr.mxu0 0.0
        %676 = vmatpush1.msra.mxu0 0.0
        %677 = vmatprep.subr.mxu0 0.0
        %678 = vmatpush1.msra.mxu0 0.0
        %679 = vmatprep.subr.mxu0 0.0
        %680 = vmatpush1.msra.mxu0 0.0
        %681 = vmatprep.subr.mxu0 0.0
        %682 = vmatpush1.msra.mxu0 0.0
        %683 = vmatprep.subr.mxu0 0.0
        %684 = vmatpush1.msra.mxu0 0.0
        %685 = vmatprep.subr.mxu0 0.0
        %686 = vmatpush1.msra.mxu0 0.0
        %687 = vmatprep.subr.mxu0 0.0
        %688 = vmatpush1.msra.mxu0 0.0
        %689 = vmatprep.subr.mxu0 0.0
        %690 = vmatpush1.msra.mxu0 0.0
        %691 = vmatprep.subr.mxu0 0.0
        %692 = vmatpush1.msra.mxu0 0.0
        %693 = vmatprep.subr.mxu0 0.0
        %694 = vmatpush1.msra.mxu0 0.0
        %695 = vmatprep.subr.mxu0 0.0
        %696 = vmatpush1.msra.mxu0 0.0
        %697 = vmatprep.subr.mxu0 0.0
        %698 = vmatpush1.msra.mxu0 0.0
        %699 = vmatprep.subr.mxu0 0.0
        %700 = vmatpush1.msra.mxu0 0.0
        %701 = vmatprep.subr.mxu0 0.0
        %702 = vmatpush1.msra.mxu0 0.0
        %703 = vmatprep.subr.mxu0 0.0
        %704 = vmatpush1.msra.mxu0 0.0
        %705 = vmatprep.subr.mxu0 0.0
        %706 = vmatpush1.msra.mxu0 0.0
        %707 = vmatprep.subr.mxu0 0.0
        %708 = vmatpush1.msra.mxu0 0.0
        %709 = vmatprep.subr.mxu0 0.0
        %710 = vmatpush1.msra.mxu0 0.0
        %711 = vmatprep.subr.mxu0 0.0
        %712 = vmatpush1.msra.mxu0 0.0
        %713 = vmatprep.subr.mxu0 0.0
        %714 = vmatpush1.msra.mxu0 0.0
        %715 = vmatprep.subr.mxu0 0.0
        %716 = vmatpush1.msra.mxu0 0.0
        %717 = vmatprep.subr.mxu0 0.0
        %718 = vmatpush1.msra.mxu0 0.0
        %719 = vmatprep.subr.mxu0 0.0
        %720 = vmatpush1.msra.mxu0 0.0
        %721 = vmatprep.subr.mxu0 0.0
        %722 = vmatpush1.msra.mxu0 0.0
        %723 = vmatprep.subr.mxu0 0.0
        %724 = vmatpush1.msra.mxu0 0.0
        %725 = vmatprep.subr.mxu0 0.0
        %726 = vmatpush1.msra.mxu0 0.0
        %727 = vmatprep.subr.mxu0 0.0
        %728 = vmatpush1.msra.mxu0 0.0
        %729 = vmatprep.mubr.f32.mxu0 0.0
        %v730 = vand.u32 %v661, 4294901760
        %v731 = vsub.f32 %v661, %v730
        %v732 = vand.u32 %v731, 4294901760
        %v733 = vsub.f32 %v731, %v732
        %v734 = vand.u32 %v733, 4294901760
        %735 = vmatmul.mubr.f32.gmra.mrb[0].mxu0 %v734
        %v736 = vpop.f32.mrb[0].mxu0
        %v737 = vadd.f32 0.0, %v736
        %v738 = vpop.f32.mrb[0].mxu0
        %739 = vdwg.mxu0
        %740 = vmatprep.subr.mxu0 0.0
        %v741 = vand.u32 %v193, 4294901760
        %v742 = vsub.f32 %v193, %v741
        %v743 = vand.u32 %v742, 4294901760
        %v744 = vsub.f32 %v742, %v743
        %v745 = vand.u32 %v744, 4294901760
        %746 = vmatpush1.msra.mxu0 %v745
        %747 = vmatprep.subr.mxu0 0.0
        %v748 = vand.u32 %v194, 4294901760
        %v749 = vsub.f32 %v194, %v748
        %v750 = vand.u32 %v749, 4294901760
        %v751 = vsub.f32 %v749, %v750
        %v752 = vand.u32 %v751, 4294901760
        %753 = vmatpush1.msra.mxu0 %v752
        %754 = vmatprep.subr.mxu0 0.0
        %755 = vmatpush1.msra.mxu0 0.0
        %756 = vmatprep.subr.mxu0 0.0
        %757 = vmatpush1.msra.mxu0 0.0
        %758 = vmatprep.subr.mxu0 0.0
        %759 = vmatpush1.msra.mxu0 0.0
        %760 = vmatprep.subr.mxu0 0.0
        %761 = vmatpush1.msra.mxu0 0.0
        %762 = vmatprep.subr.mxu0 0.0
        %763 = vmatpush1.msra.mxu0 0.0
        %764 = vmatprep.subr.mxu0 0.0
        %765 = vmatpush1.msra.mxu0 0.0
        %766 = vmatprep.subr.mxu0 0.0
        %767 = vmatpush1.msra.mxu0 0.0
        %768 = vmatprep.subr.mxu0 0.0
        %769 = vmatpush1.msra.mxu0 0.0
        %770 = vmatprep.subr.mxu0 0.0
        %771 = vmatpush1.msra.mxu0 0.0
        %772 = vmatprep.subr.mxu0 0.0
        %773 = vmatpush1.msra.mxu0 0.0
        %774 = vmatprep.subr.mxu0 0.0
        %775 = vmatpush1.msra.mxu0 0.0
        %776 = vmatprep.subr.mxu0 0.0
        %777 = vmatpush1.msra.mxu0 0.0
        %778 = vmatprep.subr.mxu0 0.0
        %779 = vmatpush1.msra.mxu0 0.0
        %780 = vmatprep.subr.mxu0 0.0
        %781 = vmatpush1.msra.mxu0 0.0
        %782 = vmatprep.subr.mxu0 0.0
        %783 = vmatpush1.msra.mxu0 0.0
        %784 = vmatprep.subr.mxu0 0.0
        %785 = vmatpush1.msra.mxu0 0.0
        %786 = vmatprep.subr.mxu0 0.0
        %787 = vmatpush1.msra.mxu0 0.0
        %788 = vmatprep.subr.mxu0 0.0
        %789 = vmatpush1.msra.mxu0 0.0
        %790 = vmatprep.subr.mxu0 0.0
        %791 = vmatpush1.msra.mxu0 0.0
        %792 = vmatprep.subr.mxu0 0.0
        %793 = vmatpush1.msra.mxu0 0.0
        %794 = vmatprep.subr.mxu0 0.0
        %795 = vmatpush1.msra.mxu0 0.0
        %796 = vmatprep.subr.mxu0 0.0
        %797 = vmatpush1.msra.mxu0 0.0
        %798 = vmatprep.subr.mxu0 0.0
        %799 = vmatpush1.msra.mxu0 0.0
        %800 = vmatprep.subr.mxu0 0.0
        %801 = vmatpush1.msra.mxu0 0.0
        %802 = vmatprep.subr.mxu0 0.0
        %803 = vmatpush1.msra.mxu0 0.0
        %804 = vmatprep.subr.mxu0 0.0
        %805 = vmatpush1.msra.mxu0 0.0
        %806 = vmatprep.subr.mxu0 0.0
        %807 = vmatpush1.msra.mxu0 0.0
        %808 = vmatprep.subr.mxu0 0.0
        %809 = vmatpush1.msra.mxu0 0.0
        %810 = vmatprep.subr.mxu0 0.0
        %811 = vmatpush1.msra.mxu0 0.0
        %812 = vmatprep.subr.mxu0 0.0
        %813 = vmatpush1.msra.mxu0 0.0
        %814 = vmatprep.mubr.f32.mxu0 0.0
        %v815 = vand.u32 %v661, 4294901760
        %816 = vmatmul.mubr.f32.gmra.mrb[0].mxu0 %v815
        %v817 = vpop.f32.mrb[0].mxu0
        %v818 = vadd.f32 %v737, %v817
        %v819 = vpop.f32.mrb[0].mxu0
        %820 = vdwg.mxu0
        %821 = vmatprep.subr.mxu0 0.0
        %v822 = vand.u32 %v193, 4294901760
        %v823 = vsub.f32 %v193, %v822
        %824 = vmatpush1.msra.mxu0 %v823
        %825 = vmatprep.subr.mxu0 0.0
        %v826 = vand.u32 %v194, 4294901760
        %v827 = vsub.f32 %v194, %v826
        %828 = vmatpush1.msra.mxu0 %v827
        %829 = vmatprep.subr.mxu0 0.0
        %830 = vmatpush1.msra.mxu0 0.0
        %831 = vmatprep.subr.mxu0 0.0
        %832 = vmatpush1.msra.mxu0 0.0
        %833 = vmatprep.subr.mxu0 0.0
        %834 = vmatpush1.msra.mxu0 0.0
        %835 = vmatprep.subr.mxu0 0.0
        %836 = vmatpush1.msra.mxu0 0.0
        %837 = vmatprep.subr.mxu0 0.0
        %838 = vmatpush1.msra.mxu0 0.0
        %839 = vmatprep.subr.mxu0 0.0
        %840 = vmatpush1.msra.mxu0 0.0
        %841 = vmatprep.subr.mxu0 0.0
        %842 = vmatpush1.msra.mxu0 0.0
        %843 = vmatprep.subr.mxu0 0.0
        %844 = vmatpush1.msra.mxu0 0.0
        %845 = vmatprep.subr.mxu0 0.0
        %846 = vmatpush1.msra.mxu0 0.0
        %847 = vmatprep.subr.mxu0 0.0
        %848 = vmatpush1.msra.mxu0 0.0
        %849 = vmatprep.subr.mxu0 0.0
        %850 = vmatpush1.msra.mxu0 0.0
        %851 = vmatprep.subr.mxu0 0.0
        %852 = vmatpush1.msra.mxu0 0.0
        %853 = vmatprep.subr.mxu0 0.0
        %854 = vmatpush1.msra.mxu0 0.0
        %855 = vmatprep.subr.mxu0 0.0
        %856 = vmatpush1.msra.mxu0 0.0
        %857 = vmatprep.subr.mxu0 0.0
        %858 = vmatpush1.msra.mxu0 0.0
        %859 = vmatprep.subr.mxu0 0.0
        %860 = vmatpush1.msra.mxu0 0.0
        %861 = vmatprep.subr.mxu0 0.0
        %862 = vmatpush1.msra.mxu0 0.0
        %863 = vmatprep.subr.mxu0 0.0
        %864 = vmatpush1.msra.mxu0 0.0
        %865 = vmatprep.subr.mxu0 0.0
        %866 = vmatpush1.msra.mxu0 0.0
        %867 = vmatprep.subr.mxu0 0.0
        %868 = vmatpush1.msra.mxu0 0.0
        %869 = vmatprep.subr.mxu0 0.0
        %870 = vmatpush1.msra.mxu0 0.0
        %871 = vmatprep.subr.mxu0 0.0
        %872 = vmatpush1.msra.mxu0 0.0
        %873 = vmatprep.subr.mxu0 0.0
        %874 = vmatpush1.msra.mxu0 0.0
        %875 = vmatprep.subr.mxu0 0.0
        %876 = vmatpush1.msra.mxu0 0.0
        %877 = vmatprep.subr.mxu0 0.0
        %878 = vmatpush1.msra.mxu0 0.0
        %879 = vmatprep.subr.mxu0 0.0
        %880 = vmatpush1.msra.mxu0 0.0
        %881 = vmatprep.subr.mxu0 0.0
        %882 = vmatpush1.msra.mxu0 0.0
        %883 = vmatprep.subr.mxu0 0.0
        %884 = vmatpush1.msra.mxu0 0.0
        %885 = vmatprep.subr.mxu0 0.0
        %886 = vmatpush1.msra.mxu0 0.0
        %887 = vmatprep.subr.mxu0 0.0
        %888 = vmatpush1.msra.mxu0 0.0
        %889 = vmatprep.mubr.f32.mxu0 0.0
        %v890 = vand.u32 %v661, 4294901760
        %v891 = vsub.f32 %v661, %v890
        %892 = vmatmul.mubr.f32.gmra.mrb[0].mxu0 %v891
        %v893 = vpop.f32.mrb[0].mxu0
        %v894 = vadd.f32 %v818, %v893
        %v895 = vpop.f32.mrb[0].mxu0
        %896 = vdwg.mxu0
        %897 = vmatprep.subr.mxu0 0.0
        %v898 = vand.u32 %v193, 4294901760
        %899 = vmatpush1.msra.mxu0 %v898
        %900 = vmatprep.subr.mxu0 0.0
        %v901 = vand.u32 %v194, 4294901760
        %902 = vmatpush1.msra.mxu0 %v901
        %903 = vmatprep.subr.mxu0 0.0
        %904 = vmatpush1.msra.mxu0 0.0
        %905 = vmatprep.subr.mxu0 0.0
        %906 = vmatpush1.msra.mxu0 0.0
        %907 = vmatprep.subr.mxu0 0.0
        %908 = vmatpush1.msra.mxu0 0.0
        %909 = vmatprep.subr.mxu0 0.0
        %910 = vmatpush1.msra.mxu0 0.0
        %911 = vmatprep.subr.mxu0 0.0
        %912 = vmatpush1.msra.mxu0 0.0
        %913 = vmatprep.subr.mxu0 0.0
        %914 = vmatpush1.msra.mxu0 0.0
        %915 = vmatprep.subr.mxu0 0.0
        %916 = vmatpush1.msra.mxu0 0.0
        %917 = vmatprep.subr.mxu0 0.0
        %918 = vmatpush1.msra.mxu0 0.0
        %919 = vmatprep.subr.mxu0 0.0
        %920 = vmatpush1.msra.mxu0 0.0
        %921 = vmatprep.subr.mxu0 0.0
        %922 = vmatpush1.msra.mxu0 0.0
        %923 = vmatprep.subr.mxu0 0.0
        %924 = vmatpush1.msra.mxu0 0.0
        %925 = vmatprep.subr.mxu0 0.0
        %926 = vmatpush1.msra.mxu0 0.0
        %927 = vmatprep.subr.mxu0 0.0
        %928 = vmatpush1.msra.mxu0 0.0
        %929 = vmatprep.subr.mxu0 0.0
        %930 = vmatpush1.msra.mxu0 0.0
        %931 = vmatprep.subr.mxu0 0.0
        %932 = vmatpush1.msra.mxu0 0.0
        %933 = vmatprep.subr.mxu0 0.0
        %934 = vmatpush1.msra.mxu0 0.0
        %935 = vmatprep.subr.mxu0 0.0
        %936 = vmatpush1.msra.mxu0 0.0
        %937 = vmatprep.subr.mxu0 0.0
        %938 = vmatpush1.msra.mxu0 0.0
        %939 = vmatprep.subr.mxu0 0.0
        %940 = vmatpush1.msra.mxu0 0.0
        %941 = vmatprep.subr.mxu0 0.0
        %942 = vmatpush1.msra.mxu0 0.0
        %943 = vmatprep.subr.mxu0 0.0
        %944 = vmatpush1.msra.mxu0 0.0
        %945 = vmatprep.subr.mxu0 0.0
        %946 = vmatpush1.msra.mxu0 0.0
        %947 = vmatprep.subr.mxu0 0.0
        %948 = vmatpush1.msra.mxu0 0.0
        %949 = vmatprep.subr.mxu0 0.0
        %950 = vmatpush1.msra.mxu0 0.0
        %951 = vmatprep.subr.mxu0 0.0
        %952 = vmatpush1.msra.mxu0 0.0
        %953 = vmatprep.subr.mxu0 0.0
        %954 = vmatpush1.msra.mxu0 0.0
        %955 = vmatprep.subr.mxu0 0.0
        %956 = vmatpush1.msra.mxu0 0.0
        %957 = vmatprep.subr.mxu0 0.0
        %958 = vmatpush1.msra.mxu0 0.0
        %959 = vmatprep.subr.mxu0 0.0
        %960 = vmatpush1.msra.mxu0 0.0
        %961 = vmatprep.subr.mxu0 0.0
        %962 = vmatpush1.msra.mxu0 0.0
        %963 = vmatprep.mubr.f32.mxu0 0.0
        %v964 = vand.u32 %v661, 4294901760
        %v965 = vsub.f32 %v661, %v964
        %v966 = vand.u32 %v965, 4294901760
        %967 = vmatmul.mubr.f32.gmra.mrb[0].mxu0 %v966
        %v968 = vpop.f32.mrb[0].mxu0
        %v969 = vadd.f32 %v894, %v968
        %v970 = vpop.f32.mrb[0].mxu0
        %971 = vdwg.mxu0
        %972 = vmatprep.subr.mxu0 0.0
        %v973 = vand.u32 %v193, 4294901760
        %v974 = vsub.f32 %v193, %v973
        %v975 = vand.u32 %v974, 4294901760
        %976 = vmatpush1.msra.mxu0 %v975
        %977 = vmatprep.subr.mxu0 0.0
        %v978 = vand.u32 %v194, 4294901760
        %v979 = vsub.f32 %v194, %v978
        %v980 = vand.u32 %v979, 4294901760
        %981 = vmatpush1.msra.mxu0 %v980
        %982 = vmatprep.subr.mxu0 0.0
        %983 = vmatpush1.msra.mxu0 0.0
        %984 = vmatprep.subr.mxu0 0.0
        %985 = vmatpush1.msra.mxu0 0.0
        %986 = vmatprep.subr.mxu0 0.0
        %987 = vmatpush1.msra.mxu0 0.0
        %988 = vmatprep.subr.mxu0 0.0
        %989 = vmatpush1.msra.mxu0 0.0
        %990 = vmatprep.subr.mxu0 0.0
        %991 = vmatpush1.msra.mxu0 0.0
        %992 = vmatprep.subr.mxu0 0.0
        %993 = vmatpush1.msra.mxu0 0.0
        %994 = vmatprep.subr.mxu0 0.0
        %995 = vmatpush1.msra.mxu0 0.0
        %996 = vmatprep.subr.mxu0 0.0
        %997 = vmatpush1.msra.mxu0 0.0
        %998 = vmatprep.subr.mxu0 0.0
        %999 = vmatpush1.msra.mxu0 0.0
        %1000 = vmatprep.subr.mxu0 0.0
        %1001 = vmatpush1.msra.mxu0 0.0
        %1002 = vmatprep.subr.mxu0 0.0
        %1003 = vmatpush1.msra.mxu0 0.0
        %1004 = vmatprep.subr.mxu0 0.0
        %1005 = vmatpush1.msra.mxu0 0.0
        %1006 = vmatprep.subr.mxu0 0.0
        %1007 = vmatpush1.msra.mxu0 0.0
        %1008 = vmatprep.subr.mxu0 0.0
        %1009 = vmatpush1.msra.mxu0 0.0
        %1010 = vmatprep.subr.mxu0 0.0
        %1011 = vmatpush1.msra.mxu0 0.0
        %1012 = vmatprep.subr.mxu0 0.0
        %1013 = vmatpush1.msra.mxu0 0.0
        %1014 = vmatprep.subr.mxu0 0.0
        %1015 = vmatpush1.msra.mxu0 0.0
        %1016 = vmatprep.subr.mxu0 0.0
        %1017 = vmatpush1.msra.mxu0 0.0
        %1018 = vmatprep.subr.mxu0 0.0
        %1019 = vmatpush1.msra.mxu0 0.0
        %1020 = vmatprep.subr.mxu0 0.0
        %1021 = vmatpush1.msra.mxu0 0.0
        %1022 = vmatprep.subr.mxu0 0.0
        %1023 = vmatpush1.msra.mxu0 0.0
        %1024 = vmatprep.subr.mxu0 0.0
        %1025 = vmatpush1.msra.mxu0 0.0
        %1026 = vmatprep.subr.mxu0 0.0
        %1027 = vmatpush1.msra.mxu0 0.0
        %1028 = vmatprep.subr.mxu0 0.0
        %1029 = vmatpush1.msra.mxu0 0.0
        %1030 = vmatprep.subr.mxu0 0.0
        %1031 = vmatpush1.msra.mxu0 0.0
        %1032 = vmatprep.subr.mxu0 0.0
        %1033 = vmatpush1.msra.mxu0 0.0
        %1034 = vmatprep.subr.mxu0 0.0
        %1035 = vmatpush1.msra.mxu0 0.0
        %1036 = vmatprep.subr.mxu0 0.0
        %1037 = vmatpush1.msra.mxu0 0.0
        %1038 = vmatprep.subr.mxu0 0.0
        %1039 = vmatpush1.msra.mxu0 0.0
        %1040 = vmatprep.subr.mxu0 0.0
        %1041 = vmatpush1.msra.mxu0 0.0
        %1042 = vmatprep.mubr.f32.mxu0 0.0
        %v1043 = vand.u32 %v661, 4294901760
        %1044 = vmatmul.mubr.f32.gmra.mrb[0].mxu0 %v1043
        %v1045 = vpop.f32.mrb[0].mxu0
        %v1046 = vadd.f32 %v969, %v1045
        %v1047 = vpop.f32.mrb[0].mxu0
        %1048 = vdwg.mxu0
        %1049 = vmatprep.subr.mxu0 0.0
        %v1050 = vand.u32 %v193, 4294901760
        %1051 = vmatpush1.msra.mxu0 %v1050
        %1052 = vmatprep.subr.mxu0 0.0
        %v1053 = vand.u32 %v194, 4294901760
        %1054 = vmatpush1.msra.mxu0 %v1053
        %1055 = vmatprep.subr.mxu0 0.0
        %1056 = vmatpush1.msra.mxu0 0.0
        %1057 = vmatprep.subr.mxu0 0.0
        %1058 = vmatpush1.msra.mxu0 0.0
        %1059 = vmatprep.subr.mxu0 0.0
        %1060 = vmatpush1.msra.mxu0 0.0
        %1061 = vmatprep.subr.mxu0 0.0
        %1062 = vmatpush1.msra.mxu0 0.0
        %1063 = vmatprep.subr.mxu0 0.0
        %1064 = vmatpush1.msra.mxu0 0.0
        %1065 = vmatprep.subr.mxu0 0.0
        %1066 = vmatpush1.msra.mxu0 0.0
        %1067 = vmatprep.subr.mxu0 0.0
        %1068 = vmatpush1.msra.mxu0 0.0
        %1069 = vmatprep.subr.mxu0 0.0
        %1070 = vmatpush1.msra.mxu0 0.0
        %1071 = vmatprep.subr.mxu0 0.0
        %1072 = vmatpush1.msra.mxu0 0.0
        %1073 = vmatprep.subr.mxu0 0.0
        %1074 = vmatpush1.msra.mxu0 0.0
        %1075 = vmatprep.subr.mxu0 0.0
        %1076 = vmatpush1.msra.mxu0 0.0
        %1077 = vmatprep.subr.mxu0 0.0
        %1078 = vmatpush1.msra.mxu0 0.0
        %1079 = vmatprep.subr.mxu0 0.0
        %1080 = vmatpush1.msra.mxu0 0.0
        %1081 = vmatprep.subr.mxu0 0.0
        %1082 = vmatpush1.msra.mxu0 0.0
        %1083 = vmatprep.subr.mxu0 0.0
        %1084 = vmatpush1.msra.mxu0 0.0
        %1085 = vmatprep.subr.mxu0 0.0
        %1086 = vmatpush1.msra.mxu0 0.0
        %1087 = vmatprep.subr.mxu0 0.0
        %1088 = vmatpush1.msra.mxu0 0.0
        %1089 = vmatprep.subr.mxu0 0.0
        %1090 = vmatpush1.msra.mxu0 0.0
        %1091 = vmatprep.subr.mxu0 0.0
        %1092 = vmatpush1.msra.mxu0 0.0
        %1093 = vmatprep.subr.mxu0 0.0
        %1094 = vmatpush1.msra.mxu0 0.0
        %1095 = vmatprep.subr.mxu0 0.0
        %1096 = vmatpush1.msra.mxu0 0.0
        %1097 = vmatprep.subr.mxu0 0.0
        %1098 = vmatpush1.msra.mxu0 0.0
        %1099 = vmatprep.subr.mxu0 0.0
        %1100 = vmatpush1.msra.mxu0 0.0
        %1101 = vmatprep.subr.mxu0 0.0
        %1102 = vmatpush1.msra.mxu0 0.0
        %1103 = vmatprep.subr.mxu0 0.0
        %1104 = vmatpush1.msra.mxu0 0.0
        %1105 = vmatprep.subr.mxu0 0.0
        %1106 = vmatpush1.msra.mxu0 0.0
        %1107 = vmatprep.subr.mxu0 0.0
        %1108 = vmatpush1.msra.mxu0 0.0
        %1109 = vmatprep.subr.mxu0 0.0
        %1110 = vmatpush1.msra.mxu0 0.0
        %1111 = vmatprep.subr.mxu0 0.0
        %1112 = vmatpush1.msra.mxu0 0.0
        %1113 = vmatprep.subr.mxu0 0.0
        %1114 = vmatpush1.msra.mxu0 0.0
        %1115 = vmatprep.mubr.f32.mxu0 0.0
        %v1116 = vand.u32 %v661, 4294901760
        %1117 = vmatmul.mubr.f32.gmra.mrb[0].mxu0 %v1116
        %v1118 = vpop.f32.mrb[0].mxu0
        %v1119 = vadd.f32 %v1046, %v1118
        %v1120 = vpop.f32.mrb[0].mxu0
        %1121 = vdwg.mxu0
        %vm1122 = vcmask 64512
        %1123 = vst.msk [vmem:[%s189] sm:$0xff] %vm1122, %v1119
        %s1124 = scalar_lea.vmem %s167, 16 [#allocation2]
        %v1125 = vld [vmem:[%s1124] sm:$0xff]
        %v1126 = vld [vmem:[%s1124 + $0x8] sm:$0xff]
        %1127 = vmatprep.subr.mxu0 0.0
        %v1128 = vand.u32 %v1125, 4294901760
        %1129 = vmatpush1.msra.mxu0 %v1128
        %1130 = vmatprep.subr.mxu0 0.0
        %v1131 = vand.u32 %v1126, 4294901760
        %1132 = vmatpush1.msra.mxu0 %v1131
        %1133 = vmatprep.subr.mxu0 0.0
        %1134 = vmatpush1.msra.mxu0 0.0
        %1135 = vmatprep.subr.mxu0 0.0
        %1136 = vmatpush1.msra.mxu0 0.0
        %1137 = vmatprep.subr.mxu0 0.0
        %1138 = vmatpush1.msra.mxu0 0.0
        %1139 = vmatprep.subr.mxu0 0.0
        %1140 = vmatpush1.msra.mxu0 0.0
        %1141 = vmatprep.subr.mxu0 0.0
        %1142 = vmatpush1.msra.mxu0 0.0
        %1143 = vmatprep.subr.mxu0 0.0
        %1144 = vmatpush1.msra.mxu0 0.0
        %1145 = vmatprep.subr.mxu0 0.0
        %1146 = vmatpush1.msra.mxu0 0.0
        %1147 = vmatprep.subr.mxu0 0.0
        %1148 = vmatpush1.msra.mxu0 0.0
        %1149 = vmatprep.subr.mxu0 0.0
        %1150 = vmatpush1.msra.mxu0 0.0
        %1151 = vmatprep.subr.mxu0 0.0
        %1152 = vmatpush1.msra.mxu0 0.0
        %1153 = vmatprep.subr.mxu0 0.0
        %1154 = vmatpush1.msra.mxu0 0.0
        %1155 = vmatprep.subr.mxu0 0.0
        %1156 = vmatpush1.msra.mxu0 0.0
        %1157 = vmatprep.subr.mxu0 0.0
        %1158 = vmatpush1.msra.mxu0 0.0
        %1159 = vmatprep.subr.mxu0 0.0
        %1160 = vmatpush1.msra.mxu0 0.0
        %1161 = vmatprep.subr.mxu0 0.0
        %1162 = vmatpush1.msra.mxu0 0.0
        %1163 = vmatprep.subr.mxu0 0.0
        %1164 = vmatpush1.msra.mxu0 0.0
        %1165 = vmatprep.subr.mxu0 0.0
        %1166 = vmatpush1.msra.mxu0 0.0
        %1167 = vmatprep.subr.mxu0 0.0
        %1168 = vmatpush1.msra.mxu0 0.0
        %1169 = vmatprep.subr.mxu0 0.0
        %1170 = vmatpush1.msra.mxu0 0.0
        %1171 = vmatprep.subr.mxu0 0.0
        %1172 = vmatpush1.msra.mxu0 0.0
        %1173 = vmatprep.subr.mxu0 0.0
        %1174 = vmatpush1.msra.mxu0 0.0
        %1175 = vmatprep.subr.mxu0 0.0
        %1176 = vmatpush1.msra.mxu0 0.0
        %1177 = vmatprep.subr.mxu0 0.0
        %1178 = vmatpush1.msra.mxu0 0.0
        %1179 = vmatprep.subr.mxu0 0.0
        %1180 = vmatpush1.msra.mxu0 0.0
        %1181 = vmatprep.subr.mxu0 0.0
        %1182 = vmatpush1.msra.mxu0 0.0
        %1183 = vmatprep.subr.mxu0 0.0
        %1184 = vmatpush1.msra.mxu0 0.0
        %1185 = vmatprep.subr.mxu0 0.0
        %1186 = vmatpush1.msra.mxu0 0.0
        %1187 = vmatprep.subr.mxu0 0.0
        %1188 = vmatpush1.msra.mxu0 0.0
        %1189 = vmatprep.subr.mxu0 0.0
        %1190 = vmatpush1.msra.mxu0 0.0
        %1191 = vmatprep.subr.mxu0 0.0
        %1192 = vmatpush1.msra.mxu0 0.0
        %1193 = vmatprep.mubr.f32.mxu0 0.0
        %v1194 = vand.u32 %v199, 4294901760
        %v1195 = vsub.f32 %v199, %v1194
        %v1196 = vand.u32 %v1195, 4294901760
        %v1197 = vsub.f32 %v1195, %v1196
        %v1198 = vand.u32 %v1197, 4294901760
        %1199 = vmatmul.mubr.f32.gmra.mrb[0].mxu0 %v1198
        %v1200 = vpop.f32.mrb[0].mxu0
        %v1201 = vadd.f32 0.0, %v1200
        %v1202 = vpop.f32.mrb[0].mxu0
        %1203 = vdwg.mxu0
        %1204 = vmatprep.subr.mxu0 0.0
        %v1205 = vand.u32 %v1125, 4294901760
        %v1206 = vsub.f32 %v1125, %v1205
        %v1207 = vand.u32 %v1206, 4294901760
        %v1208 = vsub.f32 %v1206, %v1207
        %v1209 = vand.u32 %v1208, 4294901760
        %1210 = vmatpush1.msra.mxu0 %v1209
        %1211 = vmatprep.subr.mxu0 0.0
        %v1212 = vand.u32 %v1126, 4294901760
        %v1213 = vsub.f32 %v1126, %v1212
        %v1214 = vand.u32 %v1213, 4294901760
        %v1215 = vsub.f32 %v1213, %v1214
        %v1216 = vand.u32 %v1215, 4294901760
        %1217 = vmatpush1.msra.mxu0 %v1216
        %1218 = vmatprep.subr.mxu0 0.0
        %1219 = vmatpush1.msra.mxu0 0.0
        %1220 = vmatprep.subr.mxu0 0.0
        %1221 = vmatpush1.msra.mxu0 0.0
        %1222 = vmatprep.subr.mxu0 0.0
        %1223 = vmatpush1.msra.mxu0 0.0
        %1224 = vmatprep.subr.mxu0 0.0
        %1225 = vmatpush1.msra.mxu0 0.0
        %1226 = vmatprep.subr.mxu0 0.0
        %1227 = vmatpush1.msra.mxu0 0.0
        %1228 = vmatprep.subr.mxu0 0.0
        %1229 = vmatpush1.msra.mxu0 0.0
        %1230 = vmatprep.subr.mxu0 0.0
        %1231 = vmatpush1.msra.mxu0 0.0
        %1232 = vmatprep.subr.mxu0 0.0
        %1233 = vmatpush1.msra.mxu0 0.0
        %1234 = vmatprep.subr.mxu0 0.0
        %1235 = vmatpush1.msra.mxu0 0.0
        %1236 = vmatprep.subr.mxu0 0.0
        %1237 = vmatpush1.msra.mxu0 0.0
        %1238 = vmatprep.subr.mxu0 0.0
        %1239 = vmatpush1.msra.mxu0 0.0
        %1240 = vmatprep.subr.mxu0 0.0
        %1241 = vmatpush1.msra.mxu0 0.0
        %1242 = vmatprep.subr.mxu0 0.0
        %1243 = vmatpush1.msra.mxu0 0.0
        %1244 = vmatprep.subr.mxu0 0.0
        %1245 = vmatpush1.msra.mxu0 0.0
        %1246 = vmatprep.subr.mxu0 0.0
        %1247 = vmatpush1.msra.mxu0 0.0
        %1248 = vmatprep.subr.mxu0 0.0
        %1249 = vmatpush1.msra.mxu0 0.0
        %1250 = vmatprep.subr.mxu0 0.0
        %1251 = vmatpush1.msra.mxu0 0.0
        %1252 = vmatprep.subr.mxu0 0.0
        %1253 = vmatpush1.msra.mxu0 0.0
        %1254 = vmatprep.subr.mxu0 0.0
        %1255 = vmatpush1.msra.mxu0 0.0
        %1256 = vmatprep.subr.mxu0 0.0
        %1257 = vmatpush1.msra.mxu0 0.0
        %1258 = vmatprep.subr.mxu0 0.0
        %1259 = vmatpush1.msra.mxu0 0.0
        %1260 = vmatprep.subr.mxu0 0.0
        %1261 = vmatpush1.msra.mxu0 0.0
        %1262 = vmatprep.subr.mxu0 0.0
        %1263 = vmatpush1.msra.mxu0 0.0
        %1264 = vmatprep.subr.mxu0 0.0
        %1265 = vmatpush1.msra.mxu0 0.0
        %1266 = vmatprep.subr.mxu0 0.0
        %1267 = vmatpush1.msra.mxu0 0.0
        %1268 = vmatprep.subr.mxu0 0.0
        %1269 = vmatpush1.msra.mxu0 0.0
        %1270 = vmatprep.subr.mxu0 0.0
        %1271 = vmatpush1.msra.mxu0 0.0
        %1272 = vmatprep.subr.mxu0 0.0
        %1273 = vmatpush1.msra.mxu0 0.0
        %1274 = vmatprep.subr.mxu0 0.0
        %1275 = vmatpush1.msra.mxu0 0.0
        %1276 = vmatprep.subr.mxu0 0.0
        %1277 = vmatpush1.msra.mxu0 0.0
        %1278 = vmatprep.mubr.f32.mxu0 0.0
        %v1279 = vand.u32 %v199, 4294901760
        %1280 = vmatmul.mubr.f32.gmra.mrb[0].mxu0 %v1279
        %v1281 = vpop.f32.mrb[0].mxu0
        %v1282 = vadd.f32 %v1201, %v1281
        %v1283 = vpop.f32.mrb[0].mxu0
        %1284 = vdwg.mxu0
        %1285 = vmatprep.subr.mxu0 0.0
        %v1286 = vand.u32 %v1125, 4294901760
        %v1287 = vsub.f32 %v1125, %v1286
        %1288 = vmatpush1.msra.mxu0 %v1287
        %1289 = vmatprep.subr.mxu0 0.0
        %v1290 = vand.u32 %v1126, 4294901760
        %v1291 = vsub.f32 %v1126, %v1290
        %1292 = vmatpush1.msra.mxu0 %v1291
        %1293 = vmatprep.subr.mxu0 0.0
        %1294 = vmatpush1.msra.mxu0 0.0
        %1295 = vmatprep.subr.mxu0 0.0
        %1296 = vmatpush1.msra.mxu0 0.0
        %1297 = vmatprep.subr.mxu0 0.0
        %1298 = vmatpush1.msra.mxu0 0.0
        %1299 = vmatprep.subr.mxu0 0.0
        %1300 = vmatpush1.msra.mxu0 0.0
        %1301 = vmatprep.subr.mxu0 0.0
        %1302 = vmatpush1.msra.mxu0 0.0
        %1303 = vmatprep.subr.mxu0 0.0
        %1304 = vmatpush1.msra.mxu0 0.0
        %1305 = vmatprep.subr.mxu0 0.0
        %1306 = vmatpush1.msra.mxu0 0.0
        %1307 = vmatprep.subr.mxu0 0.0
        %1308 = vmatpush1.msra.mxu0 0.0
        %1309 = vmatprep.subr.mxu0 0.0
        %1310 = vmatpush1.msra.mxu0 0.0
        %1311 = vmatprep.subr.mxu0 0.0
        %1312 = vmatpush1.msra.mxu0 0.0
        %1313 = vmatprep.subr.mxu0 0.0
        %1314 = vmatpush1.msra.mxu0 0.0
        %1315 = vmatprep.subr.mxu0 0.0
        %1316 = vmatpush1.msra.mxu0 0.0
        %1317 = vmatprep.subr.mxu0 0.0
        %1318 = vmatpush1.msra.mxu0 0.0
        %1319 = vmatprep.subr.mxu0 0.0
        %1320 = vmatpush1.msra.mxu0 0.0
        %1321 = vmatprep.subr.mxu0 0.0
        %1322 = vmatpush1.msra.mxu0 0.0
        %1323 = vmatprep.subr.mxu0 0.0
        %1324 = vmatpush1.msra.mxu0 0.0
        %1325 = vmatprep.subr.mxu0 0.0
        %1326 = vmatpush1.msra.mxu0 0.0
        %1327 = vmatprep.subr.mxu0 0.0
        %1328 = vmatpush1.msra.mxu0 0.0
        %1329 = vmatprep.subr.mxu0 0.0
        %1330 = vmatpush1.msra.mxu0 0.0
        %1331 = vmatprep.subr.mxu0 0.0
        %1332 = vmatpush1.msra.mxu0 0.0
        %1333 = vmatprep.subr.mxu0 0.0
        %1334 = vmatpush1.msra.mxu0 0.0
        %1335 = vmatprep.subr.mxu0 0.0
        %1336 = vmatpush1.msra.mxu0 0.0
        %1337 = vmatprep.subr.mxu0 0.0
        %1338 = vmatpush1.msra.mxu0 0.0
        %1339 = vmatprep.subr.mxu0 0.0
        %1340 = vmatpush1.msra.mxu0 0.0
        %1341 = vmatprep.subr.mxu0 0.0
        %1342 = vmatpush1.msra.mxu0 0.0
        %1343 = vmatprep.subr.mxu0 0.0
        %1344 = vmatpush1.msra.mxu0 0.0
        %1345 = vmatprep.subr.mxu0 0.0
        %1346 = vmatpush1.msra.mxu0 0.0
        %1347 = vmatprep.subr.mxu0 0.0
        %1348 = vmatpush1.msra.mxu0 0.0
        %1349 = vmatprep.subr.mxu0 0.0
        %1350 = vmatpush1.msra.mxu0 0.0
        %1351 = vmatprep.subr.mxu0 0.0
        %1352 = vmatpush1.msra.mxu0 0.0
        %1353 = vmatprep.mubr.f32.mxu0 0.0
        %v1354 = vand.u32 %v199, 4294901760
        %v1355 = vsub.f32 %v199, %v1354
        %1356 = vmatmul.mubr.f32.gmra.mrb[0].mxu0 %v1355
        %v1357 = vpop.f32.mrb[0].mxu0
        %v1358 = vadd.f32 %v1282, %v1357
        %v1359 = vpop.f32.mrb[0].mxu0
        %1360 = vdwg.mxu0
        %1361 = vmatprep.subr.mxu0 0.0
        %v1362 = vand.u32 %v1125, 4294901760
        %1363 = vmatpush1.msra.mxu0 %v1362
        %1364 = vmatprep.subr.mxu0 0.0
        %v1365 = vand.u32 %v1126, 4294901760
        %1366 = vmatpush1.msra.mxu0 %v1365
        %1367 = vmatprep.subr.mxu0 0.0
        %1368 = vmatpush1.msra.mxu0 0.0
        %1369 = vmatprep.subr.mxu0 0.0
        %1370 = vmatpush1.msra.mxu0 0.0
        %1371 = vmatprep.subr.mxu0 0.0
        %1372 = vmatpush1.msra.mxu0 0.0
        %1373 = vmatprep.subr.mxu0 0.0
        %1374 = vmatpush1.msra.mxu0 0.0
        %1375 = vmatprep.subr.mxu0 0.0
        %1376 = vmatpush1.msra.mxu0 0.0
        %1377 = vmatprep.subr.mxu0 0.0
        %1378 = vmatpush1.msra.mxu0 0.0
        %1379 = vmatprep.subr.mxu0 0.0
        %1380 = vmatpush1.msra.mxu0 0.0
        %1381 = vmatprep.subr.mxu0 0.0
        %1382 = vmatpush1.msra.mxu0 0.0
        %1383 = vmatprep.subr.mxu0 0.0
        %1384 = vmatpush1.msra.mxu0 0.0
        %1385 = vmatprep.subr.mxu0 0.0
        %1386 = vmatpush1.msra.mxu0 0.0
        %1387 = vmatprep.subr.mxu0 0.0
        %1388 = vmatpush1.msra.mxu0 0.0
        %1389 = vmatprep.subr.mxu0 0.0
        %1390 = vmatpush1.msra.mxu0 0.0
        %1391 = vmatprep.subr.mxu0 0.0
        %1392 = vmatpush1.msra.mxu0 0.0
        %1393 = vmatprep.subr.mxu0 0.0
        %1394 = vmatpush1.msra.mxu0 0.0
        %1395 = vmatprep.subr.mxu0 0.0
        %1396 = vmatpush1.msra.mxu0 0.0
        %1397 = vmatprep.subr.mxu0 0.0
        %1398 = vmatpush1.msra.mxu0 0.0
        %1399 = vmatprep.subr.mxu0 0.0
        %1400 = vmatpush1.msra.mxu0 0.0
        %1401 = vmatprep.subr.mxu0 0.0
        %1402 = vmatpush1.msra.mxu0 0.0
        %1403 = vmatprep.subr.mxu0 0.0
        %1404 = vmatpush1.msra.mxu0 0.0
        %1405 = vmatprep.subr.mxu0 0.0
        %1406 = vmatpush1.msra.mxu0 0.0
        %1407 = vmatprep.subr.mxu0 0.0
        %1408 = vmatpush1.msra.mxu0 0.0
        %1409 = vmatprep.subr.mxu0 0.0
        %1410 = vmatpush1.msra.mxu0 0.0
        %1411 = vmatprep.subr.mxu0 0.0
        %1412 = vmatpush1.msra.mxu0 0.0
        %1413 = vmatprep.subr.mxu0 0.0
        %1414 = vmatpush1.msra.mxu0 0.0
        %1415 = vmatprep.subr.mxu0 0.0
        %1416 = vmatpush1.msra.mxu0 0.0
        %1417 = vmatprep.subr.mxu0 0.0
        %1418 = vmatpush1.msra.mxu0 0.0
        %1419 = vmatprep.subr.mxu0 0.0
        %1420 = vmatpush1.msra.mxu0 0.0
        %1421 = vmatprep.subr.mxu0 0.0
        %1422 = vmatpush1.msra.mxu0 0.0
        %1423 = vmatprep.subr.mxu0 0.0
        %1424 = vmatpush1.msra.mxu0 0.0
        %1425 = vmatprep.subr.mxu0 0.0
        %1426 = vmatpush1.msra.mxu0 0.0
        %1427 = vmatprep.mubr.f32.mxu0 0.0
        %v1428 = vand.u32 %v199, 4294901760
        %v1429 = vsub.f32 %v199, %v1428
        %v1430 = vand.u32 %v1429, 4294901760
        %1431 = vmatmul.mubr.f32.gmra.mrb[0].mxu0 %v1430
        %v1432 = vpop.f32.mrb[0].mxu0
        %v1433 = vadd.f32 %v1358, %v1432
        %v1434 = vpop.f32.mrb[0].mxu0
        %1435 = vdwg.mxu0
        %1436 = vmatprep.subr.mxu0 0.0
        %v1437 = vand.u32 %v1125, 4294901760
        %v1438 = vsub.f32 %v1125, %v1437
        %v1439 = vand.u32 %v1438, 4294901760
        %1440 = vmatpush1.msra.mxu0 %v1439
        %1441 = vmatprep.subr.mxu0 0.0
        %v1442 = vand.u32 %v1126, 4294901760
        %v1443 = vsub.f32 %v1126, %v1442
        %v1444 = vand.u32 %v1443, 4294901760
        %1445 = vmatpush1.msra.mxu0 %v1444
        %1446 = vmatprep.subr.mxu0 0.0
        %1447 = vmatpush1.msra.mxu0 0.0
        %1448 = vmatprep.subr.mxu0 0.0
        %1449 = vmatpush1.msra.mxu0 0.0
        %1450 = vmatprep.subr.mxu0 0.0
        %1451 = vmatpush1.msra.mxu0 0.0
        %1452 = vmatprep.subr.mxu0 0.0
        %1453 = vmatpush1.msra.mxu0 0.0
        %1454 = vmatprep.subr.mxu0 0.0
        %1455 = vmatpush1.msra.mxu0 0.0
        %1456 = vmatprep.subr.mxu0 0.0
        %1457 = vmatpush1.msra.mxu0 0.0
        %1458 = vmatprep.subr.mxu0 0.0
        %1459 = vmatpush1.msra.mxu0 0.0
        %1460 = vmatprep.subr.mxu0 0.0
        %1461 = vmatpush1.msra.mxu0 0.0
        %1462 = vmatprep.subr.mxu0 0.0
        %1463 = vmatpush1.msra.mxu0 0.0
        %1464 = vmatprep.subr.mxu0 0.0
        %1465 = vmatpush1.msra.mxu0 0.0
        %1466 = vmatprep.subr.mxu0 0.0
        %1467 = vmatpush1.msra.mxu0 0.0
        %1468 = vmatprep.subr.mxu0 0.0
        %1469 = vmatpush1.msra.mxu0 0.0
        %1470 = vmatprep.subr.mxu0 0.0
        %1471 = vmatpush1.msra.mxu0 0.0
        %1472 = vmatprep.subr.mxu0 0.0
        %1473 = vmatpush1.msra.mxu0 0.0
        %1474 = vmatprep.subr.mxu0 0.0
        %1475 = vmatpush1.msra.mxu0 0.0
        %1476 = vmatprep.subr.mxu0 0.0
        %1477 = vmatpush1.msra.mxu0 0.0
        %1478 = vmatprep.subr.mxu0 0.0
        %1479 = vmatpush1.msra.mxu0 0.0
        %1480 = vmatprep.subr.mxu0 0.0
        %1481 = vmatpush1.msra.mxu0 0.0
        %1482 = vmatprep.subr.mxu0 0.0
        %1483 = vmatpush1.msra.mxu0 0.0
        %1484 = vmatprep.subr.mxu0 0.0
        %1485 = vmatpush1.msra.mxu0 0.0
        %1486 = vmatprep.subr.mxu0 0.0
        %1487 = vmatpush1.msra.mxu0 0.0
        %1488 = vmatprep.subr.mxu0 0.0
        %1489 = vmatpush1.msra.mxu0 0.0
        %1490 = vmatprep.subr.mxu0 0.0
        %1491 = vmatpush1.msra.mxu0 0.0
        %1492 = vmatprep.subr.mxu0 0.0
        %1493 = vmatpush1.msra.mxu0 0.0
        %1494 = vmatprep.subr.mxu0 0.0
        %1495 = vmatpush1.msra.mxu0 0.0
        %1496 = vmatprep.subr.mxu0 0.0
        %1497 = vmatpush1.msra.mxu0 0.0
        %1498 = vmatprep.subr.mxu0 0.0
        %1499 = vmatpush1.msra.mxu0 0.0
        %1500 = vmatprep.subr.mxu0 0.0
        %1501 = vmatpush1.msra.mxu0 0.0
        %1502 = vmatprep.subr.mxu0 0.0
        %1503 = vmatpush1.msra.mxu0 0.0
        %1504 = vmatprep.subr.mxu0 0.0
        %1505 = vmatpush1.msra.mxu0 0.0
        %1506 = vmatprep.mubr.f32.mxu0 0.0
        %v1507 = vand.u32 %v199, 4294901760
        %1508 = vmatmul.mubr.f32.gmra.mrb[0].mxu0 %v1507
        %v1509 = vpop.f32.mrb[0].mxu0
        %v1510 = vadd.f32 %v1433, %v1509
        %v1511 = vpop.f32.mrb[0].mxu0
        %1512 = vdwg.mxu0
        %1513 = vmatprep.subr.mxu0 0.0
        %v1514 = vand.u32 %v1125, 4294901760
        %1515 = vmatpush1.msra.mxu0 %v1514
        %1516 = vmatprep.subr.mxu0 0.0
        %v1517 = vand.u32 %v1126, 4294901760
        %1518 = vmatpush1.msra.mxu0 %v1517
        %1519 = vmatprep.subr.mxu0 0.0
        %1520 = vmatpush1.msra.mxu0 0.0
        %1521 = vmatprep.subr.mxu0 0.0
        %1522 = vmatpush1.msra.mxu0 0.0
        %1523 = vmatprep.subr.mxu0 0.0
        %1524 = vmatpush1.msra.mxu0 0.0
        %1525 = vmatprep.subr.mxu0 0.0
        %1526 = vmatpush1.msra.mxu0 0.0
        %1527 = vmatprep.subr.mxu0 0.0
        %1528 = vmatpush1.msra.mxu0 0.0
        %1529 = vmatprep.subr.mxu0 0.0
        %1530 = vmatpush1.msra.mxu0 0.0
        %1531 = vmatprep.subr.mxu0 0.0
        %1532 = vmatpush1.msra.mxu0 0.0
        %1533 = vmatprep.subr.mxu0 0.0
        %1534 = vmatpush1.msra.mxu0 0.0
        %1535 = vmatprep.subr.mxu0 0.0
        %1536 = vmatpush1.msra.mxu0 0.0
        %1537 = vmatprep.subr.mxu0 0.0
        %1538 = vmatpush1.msra.mxu0 0.0
        %1539 = vmatprep.subr.mxu0 0.0
        %1540 = vmatpush1.msra.mxu0 0.0
        %1541 = vmatprep.subr.mxu0 0.0
        %1542 = vmatpush1.msra.mxu0 0.0
        %1543 = vmatprep.subr.mxu0 0.0
        %1544 = vmatpush1.msra.mxu0 0.0
        %1545 = vmatprep.subr.mxu0 0.0
        %1546 = vmatpush1.msra.mxu0 0.0
        %1547 = vmatprep.subr.mxu0 0.0
        %1548 = vmatpush1.msra.mxu0 0.0
        %1549 = vmatprep.subr.mxu0 0.0
        %1550 = vmatpush1.msra.mxu0 0.0
        %1551 = vmatprep.subr.mxu0 0.0
        %1552 = vmatpush1.msra.mxu0 0.0
        %1553 = vmatprep.subr.mxu0 0.0
        %1554 = vmatpush1.msra.mxu0 0.0
        %1555 = vmatprep.subr.mxu0 0.0
        %1556 = vmatpush1.msra.mxu0 0.0
        %1557 = vmatprep.subr.mxu0 0.0
        %1558 = vmatpush1.msra.mxu0 0.0
        %1559 = vmatprep.subr.mxu0 0.0
        %1560 = vmatpush1.msra.mxu0 0.0
        %1561 = vmatprep.subr.mxu0 0.0
        %1562 = vmatpush1.msra.mxu0 0.0
        %1563 = vmatprep.subr.mxu0 0.0
        %1564 = vmatpush1.msra.mxu0 0.0
        %1565 = vmatprep.subr.mxu0 0.0
        %1566 = vmatpush1.msra.mxu0 0.0
        %1567 = vmatprep.subr.mxu0 0.0
        %1568 = vmatpush1.msra.mxu0 0.0
        %1569 = vmatprep.subr.mxu0 0.0
        %1570 = vmatpush1.msra.mxu0 0.0
        %1571 = vmatprep.subr.mxu0 0.0
        %1572 = vmatpush1.msra.mxu0 0.0
        %1573 = vmatprep.subr.mxu0 0.0
        %1574 = vmatpush1.msra.mxu0 0.0
        %1575 = vmatprep.subr.mxu0 0.0
        %1576 = vmatpush1.msra.mxu0 0.0
        %1577 = vmatprep.subr.mxu0 0.0
        %1578 = vmatpush1.msra.mxu0 0.0
        %1579 = vmatprep.mubr.f32.mxu0 0.0
        %v1580 = vand.u32 %v199, 4294901760
        %1581 = vmatmul.mubr.f32.gmra.mrb[0].mxu0 %v1580
        %v1582 = vpop.f32.mrb[0].mxu0
        %v1583 = vadd.f32 %v1510, %v1582
        %v1584 = vpop.f32.mrb[0].mxu0
        %1585 = vdwg.mxu0
        %v1587 = vsel %vm197, %v1583, 0
        %1589 = vmatprep.subr.mxu0 0.0
        %v1590 = vand.u32 %v193, 4294901760
        %1591 = vmatpush1.msra.mxu0 %v1590
        %1592 = vmatprep.subr.mxu0 0.0
        %v1593 = vand.u32 %v194, 4294901760
        %1594 = vmatpush1.msra.mxu0 %v1593
        %1595 = vmatprep.subr.mxu0 0.0
        %1596 = vmatpush1.msra.mxu0 0.0
        %1597 = vmatprep.subr.mxu0 0.0
        %1598 = vmatpush1.msra.mxu0 0.0
        %1599 = vmatprep.subr.mxu0 0.0
        %1600 = vmatpush1.msra.mxu0 0.0
        %1601 = vmatprep.subr.mxu0 0.0
        %1602 = vmatpush1.msra.mxu0 0.0
        %1603 = vmatprep.subr.mxu0 0.0
        %1604 = vmatpush1.msra.mxu0 0.0
        %1605 = vmatprep.subr.mxu0 0.0
        %1606 = vmatpush1.msra.mxu0 0.0
        %1607 = vmatprep.subr.mxu0 0.0
        %1608 = vmatpush1.msra.mxu0 0.0
        %1609 = vmatprep.subr.mxu0 0.0
        %1610 = vmatpush1.msra.mxu0 0.0
        %1611 = vmatprep.subr.mxu0 0.0
        %1612 = vmatpush1.msra.mxu0 0.0
        %1613 = vmatprep.subr.mxu0 0.0
        %1614 = vmatpush1.msra.mxu0 0.0
        %1615 = vmatprep.subr.mxu0 0.0
        %1616 = vmatpush1.msra.mxu0 0.0
        %1617 = vmatprep.subr.mxu0 0.0
        %1618 = vmatpush1.msra.mxu0 0.0
        %1619 = vmatprep.subr.mxu0 0.0
        %1620 = vmatpush1.msra.mxu0 0.0
        %1621 = vmatprep.subr.mxu0 0.0
        %1622 = vmatpush1.msra.mxu0 0.0
        %1623 = vmatprep.subr.mxu0 0.0
        %1624 = vmatpush1.msra.mxu0 0.0
        %1625 = vmatprep.subr.mxu0 0.0
        %1626 = vmatpush1.msra.mxu0 0.0
        %1627 = vmatprep.subr.mxu0 0.0
        %1628 = vmatpush1.msra.mxu0 0.0
        %1629 = vmatprep.subr.mxu0 0.0
        %1630 = vmatpush1.msra.mxu0 0.0
        %1631 = vmatprep.subr.mxu0 0.0
        %1632 = vmatpush1.msra.mxu0 0.0
        %1633 = vmatprep.subr.mxu0 0.0
        %1634 = vmatpush1.msra.mxu0 0.0
        %1635 = vmatprep.subr.mxu0 0.0
        %1636 = vmatpush1.msra.mxu0 0.0
        %1637 = vmatprep.subr.mxu0 0.0
        %1638 = vmatpush1.msra.mxu0 0.0
        %1639 = vmatprep.subr.mxu0 0.0
        %1640 = vmatpush1.msra.mxu0 0.0
        %1641 = vmatprep.subr.mxu0 0.0
        %1642 = vmatpush1.msra.mxu0 0.0
        %1643 = vmatprep.subr.mxu0 0.0
        %1644 = vmatpush1.msra.mxu0 0.0
        %1645 = vmatprep.subr.mxu0 0.0
        %1646 = vmatpush1.msra.mxu0 0.0
        %1647 = vmatprep.subr.mxu0 0.0
        %1648 = vmatpush1.msra.mxu0 0.0
        %1649 = vmatprep.subr.mxu0 0.0
        %1650 = vmatpush1.msra.mxu0 0.0
        %1651 = vmatprep.subr.mxu0 0.0
        %1652 = vmatpush1.msra.mxu0 0.0
        %1653 = vmatprep.subr.mxu0 0.0
        %1654 = vmatpush1.msra.mxu0 0.0
        %1655 = vmatprep.mubr.f32.mxu0 0.0
        %v1656 = vand.u32 %v1587, 4294901760
        %v1657 = vsub.f32 %v1587, %v1656
        %v1658 = vand.u32 %v1657, 4294901760
        %v1659 = vsub.f32 %v1657, %v1658
        %v1660 = vand.u32 %v1659, 4294901760
        %1661 = vmatmul.mubr.f32.gmra.mrb[0].mxu0 %v1660
        %v1662 = vpop.f32.mrb[0].mxu0
        %v1663 = vadd.f32 0.0, %v1662
        %v1664 = vpop.f32.mrb[0].mxu0
        %1665 = vdwg.mxu0
        %1666 = vmatprep.subr.mxu0 0.0
        %v1667 = vand.u32 %v193, 4294901760
        %v1668 = vsub.f32 %v193, %v1667
        %v1669 = vand.u32 %v1668, 4294901760
        %v1670 = vsub.f32 %v1668, %v1669
        %v1671 = vand.u32 %v1670, 4294901760
        %1672 = vmatpush1.msra.mxu0 %v1671
        %1673 = vmatprep.subr.mxu0 0.0
        %v1674 = vand.u32 %v194, 4294901760
        %v1675 = vsub.f32 %v194, %v1674
        %v1676 = vand.u32 %v1675, 4294901760
        %v1677 = vsub.f32 %v1675, %v1676
        %v1678 = vand.u32 %v1677, 4294901760
        %1679 = vmatpush1.msra.mxu0 %v1678
        %1680 = vmatprep.subr.mxu0 0.0
        %1681 = vmatpush1.msra.mxu0 0.0
        %1682 = vmatprep.subr.mxu0 0.0
        %1683 = vmatpush1.msra.mxu0 0.0
        %1684 = vmatprep.subr.mxu0 0.0
        %1685 = vmatpush1.msra.mxu0 0.0
        %1686 = vmatprep.subr.mxu0 0.0
        %1687 = vmatpush1.msra.mxu0 0.0
        %1688 = vmatprep.subr.mxu0 0.0
        %1689 = vmatpush1.msra.mxu0 0.0
        %1690 = vmatprep.subr.mxu0 0.0
        %1691 = vmatpush1.msra.mxu0 0.0
        %1692 = vmatprep.subr.mxu0 0.0
        %1693 = vmatpush1.msra.mxu0 0.0
        %1694 = vmatprep.subr.mxu0 0.0
        %1695 = vmatpush1.msra.mxu0 0.0
        %1696 = vmatprep.subr.mxu0 0.0
        %1697 = vmatpush1.msra.mxu0 0.0
        %1698 = vmatprep.subr.mxu0 0.0
        %1699 = vmatpush1.msra.mxu0 0.0
        %1700 = vmatprep.subr.mxu0 0.0
        %1701 = vmatpush1.msra.mxu0 0.0
        %1702 = vmatprep.subr.mxu0 0.0
        %1703 = vmatpush1.msra.mxu0 0.0
        %1704 = vmatprep.subr.mxu0 0.0
        %1705 = vmatpush1.msra.mxu0 0.0
        %1706 = vmatprep.subr.mxu0 0.0
        %1707 = vmatpush1.msra.mxu0 0.0
        %1708 = vmatprep.subr.mxu0 0.0
        %1709 = vmatpush1.msra.mxu0 0.0
        %1710 = vmatprep.subr.mxu0 0.0
        %1711 = vmatpush1.msra.mxu0 0.0
        %1712 = vmatprep.subr.mxu0 0.0
        %1713 = vmatpush1.msra.mxu0 0.0
        %1714 = vmatprep.subr.mxu0 0.0
        %1715 = vmatpush1.msra.mxu0 0.0
        %1716 = vmatprep.subr.mxu0 0.0
        %1717 = vmatpush1.msra.mxu0 0.0
        %1718 = vmatprep.subr.mxu0 0.0
        %1719 = vmatpush1.msra.mxu0 0.0
        %1720 = vmatprep.subr.mxu0 0.0
        %1721 = vmatpush1.msra.mxu0 0.0
        %1722 = vmatprep.subr.mxu0 0.0
        %1723 = vmatpush1.msra.mxu0 0.0
        %1724 = vmatprep.subr.mxu0 0.0
        %1725 = vmatpush1.msra.mxu0 0.0
        %1726 = vmatprep.subr.mxu0 0.0
        %1727 = vmatpush1.msra.mxu0 0.0
        %1728 = vmatprep.subr.mxu0 0.0
        %1729 = vmatpush1.msra.mxu0 0.0
        %1730 = vmatprep.subr.mxu0 0.0
        %1731 = vmatpush1.msra.mxu0 0.0
        %1732 = vmatprep.subr.mxu0 0.0
        %1733 = vmatpush1.msra.mxu0 0.0
        %1734 = vmatprep.subr.mxu0 0.0
        %1735 = vmatpush1.msra.mxu0 0.0
        %1736 = vmatprep.subr.mxu0 0.0
        %1737 = vmatpush1.msra.mxu0 0.0
        %1738 = vmatprep.subr.mxu0 0.0
        %1739 = vmatpush1.msra.mxu0 0.0
        %1740 = vmatprep.mubr.f32.mxu0 0.0
        %v1741 = vand.u32 %v1587, 4294901760
        %1742 = vmatmul.mubr.f32.gmra.mrb[0].mxu0 %v1741
        %v1743 = vpop.f32.mrb[0].mxu0
        %v1744 = vadd.f32 %v1663, %v1743
        %v1745 = vpop.f32.mrb[0].mxu0
        %1746 = vdwg.mxu0
        %1747 = vmatprep.subr.mxu0 0.0
        %v1748 = vand.u32 %v193, 4294901760
        %v1749 = vsub.f32 %v193, %v1748
        %1750 = vmatpush1.msra.mxu0 %v1749
        %1751 = vmatprep.subr.mxu0 0.0
        %v1752 = vand.u32 %v194, 4294901760
        %v1753 = vsub.f32 %v194, %v1752
        %1754 = vmatpush1.msra.mxu0 %v1753
        %1755 = vmatprep.subr.mxu0 0.0
        %1756 = vmatpush1.msra.mxu0 0.0
        %1757 = vmatprep.subr.mxu0 0.0
        %1758 = vmatpush1.msra.mxu0 0.0
        %1759 = vmatprep.subr.mxu0 0.0
        %1760 = vmatpush1.msra.mxu0 0.0
        %1761 = vmatprep.subr.mxu0 0.0
        %1762 = vmatpush1.msra.mxu0 0.0
        %1763 = vmatprep.subr.mxu0 0.0
        %1764 = vmatpush1.msra.mxu0 0.0
        %1765 = vmatprep.subr.mxu0 0.0
        %1766 = vmatpush1.msra.mxu0 0.0
        %1767 = vmatprep.subr.mxu0 0.0
        %1768 = vmatpush1.msra.mxu0 0.0
        %1769 = vmatprep.subr.mxu0 0.0
        %1770 = vmatpush1.msra.mxu0 0.0
        %1771 = vmatprep.subr.mxu0 0.0
        %1772 = vmatpush1.msra.mxu0 0.0
        %1773 = vmatprep.subr.mxu0 0.0
        %1774 = vmatpush1.msra.mxu0 0.0
        %1775 = vmatprep.subr.mxu0 0.0
        %1776 = vmatpush1.msra.mxu0 0.0
        %1777 = vmatprep.subr.mxu0 0.0
        %1778 = vmatpush1.msra.mxu0 0.0
        %1779 = vmatprep.subr.mxu0 0.0
        %1780 = vmatpush1.msra.mxu0 0.0
        %1781 = vmatprep.subr.mxu0 0.0
        %1782 = vmatpush1.msra.mxu0 0.0
        %1783 = vmatprep.subr.mxu0 0.0
        %1784 = vmatpush1.msra.mxu0 0.0
        %1785 = vmatprep.subr.mxu0 0.0
        %1786 = vmatpush1.msra.mxu0 0.0
        %1787 = vmatprep.subr.mxu0 0.0
        %1788 = vmatpush1.msra.mxu0 0.0
        %1789 = vmatprep.subr.mxu0 0.0
        %1790 = vmatpush1.msra.mxu0 0.0
        %1791 = vmatprep.subr.mxu0 0.0
        %1792 = vmatpush1.msra.mxu0 0.0
        %1793 = vmatprep.subr.mxu0 0.0
        %1794 = vmatpush1.msra.mxu0 0.0
        %1795 = vmatprep.subr.mxu0 0.0
        %1796 = vmatpush1.msra.mxu0 0.0
        %1797 = vmatprep.subr.mxu0 0.0
        %1798 = vmatpush1.msra.mxu0 0.0
        %1799 = vmatprep.subr.mxu0 0.0
        %1800 = vmatpush1.msra.mxu0 0.0
        %1801 = vmatprep.subr.mxu0 0.0
        %1802 = vmatpush1.msra.mxu0 0.0
        %1803 = vmatprep.subr.mxu0 0.0
        %1804 = vmatpush1.msra.mxu0 0.0
        %1805 = vmatprep.subr.mxu0 0.0
        %1806 = vmatpush1.msra.mxu0 0.0
        %1807 = vmatprep.subr.mxu0 0.0
        %1808 = vmatpush1.msra.mxu0 0.0
        %1809 = vmatprep.subr.mxu0 0.0
        %1810 = vmatpush1.msra.mxu0 0.0
        %1811 = vmatprep.subr.mxu0 0.0
        %1812 = vmatpush1.msra.mxu0 0.0
        %1813 = vmatprep.subr.mxu0 0.0
        %1814 = vmatpush1.msra.mxu0 0.0
        %1815 = vmatprep.mubr.f32.mxu0 0.0
        %v1816 = vand.u32 %v1587, 4294901760
        %v1817 = vsub.f32 %v1587, %v1816
        %1818 = vmatmul.mubr.f32.gmra.mrb[0].mxu0 %v1817
        %v1819 = vpop.f32.mrb[0].mxu0
        %v1820 = vadd.f32 %v1744, %v1819
        %v1821 = vpop.f32.mrb[0].mxu0
        %1822 = vdwg.mxu0
        %1823 = vmatprep.subr.mxu0 0.0
        %v1824 = vand.u32 %v193, 4294901760
        %1825 = vmatpush1.msra.mxu0 %v1824
        %1826 = vmatprep.subr.mxu0 0.0
        %v1827 = vand.u32 %v194, 4294901760
        %1828 = vmatpush1.msra.mxu0 %v1827
        %1829 = vmatprep.subr.mxu0 0.0
        %1830 = vmatpush1.msra.mxu0 0.0
        %1831 = vmatprep.subr.mxu0 0.0
        %1832 = vmatpush1.msra.mxu0 0.0
        %1833 = vmatprep.subr.mxu0 0.0
        %1834 = vmatpush1.msra.mxu0 0.0
        %1835 = vmatprep.subr.mxu0 0.0
        %1836 = vmatpush1.msra.mxu0 0.0
        %1837 = vmatprep.subr.mxu0 0.0
        %1838 = vmatpush1.msra.mxu0 0.0
        %1839 = vmatprep.subr.mxu0 0.0
        %1840 = vmatpush1.msra.mxu0 0.0
        %1841 = vmatprep.subr.mxu0 0.0
        %1842 = vmatpush1.msra.mxu0 0.0
        %1843 = vmatprep.subr.mxu0 0.0
        %1844 = vmatpush1.msra.mxu0 0.0
        %1845 = vmatprep.subr.mxu0 0.0
        %1846 = vmatpush1.msra.mxu0 0.0
        %1847 = vmatprep.subr.mxu0 0.0
        %1848 = vmatpush1.msra.mxu0 0.0
        %1849 = vmatprep.subr.mxu0 0.0
        %1850 = vmatpush1.msra.mxu0 0.0
        %1851 = vmatprep.subr.mxu0 0.0
        %1852 = vmatpush1.msra.mxu0 0.0
        %1853 = vmatprep.subr.mxu0 0.0
        %1854 = vmatpush1.msra.mxu0 0.0
        %1855 = vmatprep.subr.mxu0 0.0
        %1856 = vmatpush1.msra.mxu0 0.0
        %1857 = vmatprep.subr.mxu0 0.0
        %1858 = vmatpush1.msra.mxu0 0.0
        %1859 = vmatprep.subr.mxu0 0.0
        %1860 = vmatpush1.msra.mxu0 0.0
        %1861 = vmatprep.subr.mxu0 0.0
        %1862 = vmatpush1.msra.mxu0 0.0
        %1863 = vmatprep.subr.mxu0 0.0
        %1864 = vmatpush1.msra.mxu0 0.0
        %1865 = vmatprep.subr.mxu0 0.0
        %1866 = vmatpush1.msra.mxu0 0.0
        %1867 = vmatprep.subr.mxu0 0.0
        %1868 = vmatpush1.msra.mxu0 0.0
        %1869 = vmatprep.subr.mxu0 0.0
        %1870 = vmatpush1.msra.mxu0 0.0
        %1871 = vmatprep.subr.mxu0 0.0
        %1872 = vmatpush1.msra.mxu0 0.0
        %1873 = vmatprep.subr.mxu0 0.0
        %1874 = vmatpush1.msra.mxu0 0.0
        %1875 = vmatprep.subr.mxu0 0.0
        %1876 = vmatpush1.msra.mxu0 0.0
        %1877 = vmatprep.subr.mxu0 0.0
        %1878 = vmatpush1.msra.mxu0 0.0
        %1879 = vmatprep.subr.mxu0 0.0
        %1880 = vmatpush1.msra.mxu0 0.0
        %1881 = vmatprep.subr.mxu0 0.0
        %1882 = vmatpush1.msra.mxu0 0.0
        %1883 = vmatprep.subr.mxu0 0.0
        %1884 = vmatpush1.msra.mxu0 0.0
        %1885 = vmatprep.subr.mxu0 0.0
        %1886 = vmatpush1.msra.mxu0 0.0
        %1887 = vmatprep.subr.mxu0 0.0
        %1888 = vmatpush1.msra.mxu0 0.0
        %1889 = vmatprep.mubr.f32.mxu0 0.0
        %v1890 = vand.u32 %v1587, 4294901760
        %v1891 = vsub.f32 %v1587, %v1890
        %v1892 = vand.u32 %v1891, 4294901760
        %1893 = vmatmul.mubr.f32.gmra.mrb[0].mxu0 %v1892
        %v1894 = vpop.f32.mrb[0].mxu0
        %v1895 = vadd.f32 %v1820, %v1894
        %v1896 = vpop.f32.mrb[0].mxu0
        %1897 = vdwg.mxu0
        %1898 = vmatprep.subr.mxu0 0.0
        %v1899 = vand.u32 %v193, 4294901760
        %v1900 = vsub.f32 %v193, %v1899
        %v1901 = vand.u32 %v1900, 4294901760
        %1902 = vmatpush1.msra.mxu0 %v1901
        %1903 = vmatprep.subr.mxu0 0.0
        %v1904 = vand.u32 %v194, 4294901760
        %v1905 = vsub.f32 %v194, %v1904
        %v1906 = vand.u32 %v1905, 4294901760
        %1907 = vmatpush1.msra.mxu0 %v1906
        %1908 = vmatprep.subr.mxu0 0.0
        %1909 = vmatpush1.msra.mxu0 0.0
        %1910 = vmatprep.subr.mxu0 0.0
        %1911 = vmatpush1.msra.mxu0 0.0
        %1912 = vmatprep.subr.mxu0 0.0
        %1913 = vmatpush1.msra.mxu0 0.0
        %1914 = vmatprep.subr.mxu0 0.0
        %1915 = vmatpush1.msra.mxu0 0.0
        %1916 = vmatprep.subr.mxu0 0.0
        %1917 = vmatpush1.msra.mxu0 0.0
        %1918 = vmatprep.subr.mxu0 0.0
        %1919 = vmatpush1.msra.mxu0 0.0
        %1920 = vmatprep.subr.mxu0 0.0
        %1921 = vmatpush1.msra.mxu0 0.0
        %1922 = vmatprep.subr.mxu0 0.0
        %1923 = vmatpush1.msra.mxu0 0.0
        %1924 = vmatprep.subr.mxu0 0.0
        %1925 = vmatpush1.msra.mxu0 0.0
        %1926 = vmatprep.subr.mxu0 0.0
        %1927 = vmatpush1.msra.mxu0 0.0
        %1928 = vmatprep.subr.mxu0 0.0
        %1929 = vmatpush1.msra.mxu0 0.0
        %1930 = vmatprep.subr.mxu0 0.0
        %1931 = vmatpush1.msra.mxu0 0.0
        %1932 = vmatprep.subr.mxu0 0.0
        %1933 = vmatpush1.msra.mxu0 0.0
        %1934 = vmatprep.subr.mxu0 0.0
        %1935 = vmatpush1.msra.mxu0 0.0
        %1936 = vmatprep.subr.mxu0 0.0
        %1937 = vmatpush1.msra.mxu0 0.0
        %1938 = vmatprep.subr.mxu0 0.0
        %1939 = vmatpush1.msra.mxu0 0.0
        %1940 = vmatprep.subr.mxu0 0.0
        %1941 = vmatpush1.msra.mxu0 0.0
        %1942 = vmatprep.subr.mxu0 0.0
        %1943 = vmatpush1.msra.mxu0 0.0
        %1944 = vmatprep.subr.mxu0 0.0
        %1945 = vmatpush1.msra.mxu0 0.0
        %1946 = vmatprep.subr.mxu0 0.0
        %1947 = vmatpush1.msra.mxu0 0.0
        %1948 = vmatprep.subr.mxu0 0.0
        %1949 = vmatpush1.msra.mxu0 0.0
        %1950 = vmatprep.subr.mxu0 0.0
        %1951 = vmatpush1.msra.mxu0 0.0
        %1952 = vmatprep.subr.mxu0 0.0
        %1953 = vmatpush1.msra.mxu0 0.0
        %1954 = vmatprep.subr.mxu0 0.0
        %1955 = vmatpush1.msra.mxu0 0.0
        %1956 = vmatprep.subr.mxu0 0.0
        %1957 = vmatpush1.msra.mxu0 0.0
        %1958 = vmatprep.subr.mxu0 0.0
        %1959 = vmatpush1.msra.mxu0 0.0
        %1960 = vmatprep.subr.mxu0 0.0
        %1961 = vmatpush1.msra.mxu0 0.0
        %1962 = vmatprep.subr.mxu0 0.0
        %1963 = vmatpush1.msra.mxu0 0.0
        %1964 = vmatprep.subr.mxu0 0.0
        %1965 = vmatpush1.msra.mxu0 0.0
        %1966 = vmatprep.subr.mxu0 0.0
        %1967 = vmatpush1.msra.mxu0 0.0
        %1968 = vmatprep.mubr.f32.mxu0 0.0
        %v1969 = vand.u32 %v1587, 4294901760
        %1970 = vmatmul.mubr.f32.gmra.mrb[0].mxu0 %v1969
        %v1971 = vpop.f32.mrb[0].mxu0
        %v1972 = vadd.f32 %v1895, %v1971
        %v1973 = vpop.f32.mrb[0].mxu0
        %1974 = vdwg.mxu0
        %1975 = vmatprep.subr.mxu0 0.0
        %v1976 = vand.u32 %v193, 4294901760
        %1977 = vmatpush1.msra.mxu0 %v1976
        %1978 = vmatprep.subr.mxu0 0.0
        %v1979 = vand.u32 %v194, 4294901760
        %1980 = vmatpush1.msra.mxu0 %v1979
        %1981 = vmatprep.subr.mxu0 0.0
        %1982 = vmatpush1.msra.mxu0 0.0
        %1983 = vmatprep.subr.mxu0 0.0
        %1984 = vmatpush1.msra.mxu0 0.0
        %1985 = vmatprep.subr.mxu0 0.0
        %1986 = vmatpush1.msra.mxu0 0.0
        %1987 = vmatprep.subr.mxu0 0.0
        %1988 = vmatpush1.msra.mxu0 0.0
        %1989 = vmatprep.subr.mxu0 0.0
        %1990 = vmatpush1.msra.mxu0 0.0
        %1991 = vmatprep.subr.mxu0 0.0
        %1992 = vmatpush1.msra.mxu0 0.0
        %1993 = vmatprep.subr.mxu0 0.0
        %1994 = vmatpush1.msra.mxu0 0.0
        %1995 = vmatprep.subr.mxu0 0.0
        %1996 = vmatpush1.msra.mxu0 0.0
        %1997 = vmatprep.subr.mxu0 0.0
        %1998 = vmatpush1.msra.mxu0 0.0
        %1999 = vmatprep.subr.mxu0 0.0
        %2000 = vmatpush1.msra.mxu0 0.0
        %2001 = vmatprep.subr.mxu0 0.0
        %2002 = vmatpush1.msra.mxu0 0.0
        %2003 = vmatprep.subr.mxu0 0.0
        %2004 = vmatpush1.msra.mxu0 0.0
        %2005 = vmatprep.subr.mxu0 0.0
        %2006 = vmatpush1.msra.mxu0 0.0
        %2007 = vmatprep.subr.mxu0 0.0
        %2008 = vmatpush1.msra.mxu0 0.0
        %2009 = vmatprep.subr.mxu0 0.0
        %2010 = vmatpush1.msra.mxu0 0.0
        %2011 = vmatprep.subr.mxu0 0.0
        %2012 = vmatpush1.msra.mxu0 0.0
        %2013 = vmatprep.subr.mxu0 0.0
        %2014 = vmatpush1.msra.mxu0 0.0
        %2015 = vmatprep.subr.mxu0 0.0
        %2016 = vmatpush1.msra.mxu0 0.0
        %2017 = vmatprep.subr.mxu0 0.0
        %2018 = vmatpush1.msra.mxu0 0.0
        %2019 = vmatprep.subr.mxu0 0.0
        %2020 = vmatpush1.msra.mxu0 0.0
        %2021 = vmatprep.subr.mxu0 0.0
        %2022 = vmatpush1.msra.mxu0 0.0
        %2023 = vmatprep.subr.mxu0 0.0
        %2024 = vmatpush1.msra.mxu0 0.0
        %2025 = vmatprep.subr.mxu0 0.0
        %2026 = vmatpush1.msra.mxu0 0.0
        %2027 = vmatprep.subr.mxu0 0.0
        %2028 = vmatpush1.msra.mxu0 0.0
        %2029 = vmatprep.subr.mxu0 0.0
        %2030 = vmatpush1.msra.mxu0 0.0
        %2031 = vmatprep.subr.mxu0 0.0
        %2032 = vmatpush1.msra.mxu0 0.0
        %2033 = vmatprep.subr.mxu0 0.0
        %2034 = vmatpush1.msra.mxu0 0.0
        %2035 = vmatprep.subr.mxu0 0.0
        %2036 = vmatpush1.msra.mxu0 0.0
        %2037 = vmatprep.subr.mxu0 0.0
        %2038 = vmatpush1.msra.mxu0 0.0
        %2039 = vmatprep.subr.mxu0 0.0
        %2040 = vmatpush1.msra.mxu0 0.0
        %2041 = vmatprep.mubr.f32.mxu0 0.0
        %v2042 = vand.u32 %v1587, 4294901760
        %2043 = vmatmul.mubr.f32.gmra.mrb[0].mxu0 %v2042
        %v2044 = vpop.f32.mrb[0].mxu0
        %v2045 = vadd.f32 %v1972, %v2044
        %v2046 = vpop.f32.mrb[0].mxu0
        %2047 = vdwg.mxu0
        %s2048 = scalar_lea.vmem %s189, 8 [#allocation5]
        %2049 = vst.msk [vmem:[%s2048] sm:$0xff] %vm1122, %v2045
        %s2050 = scalar_lea.vmem %s167, 32 [#allocation2]
        %v2051 = vld [vmem:[%s2050] sm:$0xff]
        %v2052 = vld [vmem:[%s2050 + $0x8] sm:$0xff]
        %2053 = vmatprep.subr.mxu0 0.0
        %v2054 = vand.u32 %v2051, 4294901760
        %2055 = vmatpush1.msra.mxu0 %v2054
        %2056 = vmatprep.subr.mxu0 0.0
        %v2057 = vand.u32 %v2052, 4294901760
        %2058 = vmatpush1.msra.mxu0 %v2057
        %2059 = vmatprep.subr.mxu0 0.0
        %2060 = vmatpush1.msra.mxu0 0.0
        %2061 = vmatprep.subr.mxu0 0.0
        %2062 = vmatpush1.msra.mxu0 0.0
        %2063 = vmatprep.subr.mxu0 0.0
        %2064 = vmatpush1.msra.mxu0 0.0
        %2065 = vmatprep.subr.mxu0 0.0
        %2066 = vmatpush1.msra.mxu0 0.0
        %2067 = vmatprep.subr.mxu0 0.0
        %2068 = vmatpush1.msra.mxu0 0.0
        %2069 = vmatprep.subr.mxu0 0.0
        %2070 = vmatpush1.msra.mxu0 0.0
        %2071 = vmatprep.subr.mxu0 0.0
        %2072 = vmatpush1.msra.mxu0 0.0
        %2073 = vmatprep.subr.mxu0 0.0
        %2074 = vmatpush1.msra.mxu0 0.0
        %2075 = vmatprep.subr.mxu0 0.0
        %2076 = vmatpush1.msra.mxu0 0.0
        %2077 = vmatprep.subr.mxu0 0.0
        %2078 = vmatpush1.msra.mxu0 0.0
        %2079 = vmatprep.subr.mxu0 0.0
        %2080 = vmatpush1.msra.mxu0 0.0
        %2081 = vmatprep.subr.mxu0 0.0
        %2082 = vmatpush1.msra.mxu0 0.0
        %2083 = vmatprep.subr.mxu0 0.0
        %2084 = vmatpush1.msra.mxu0 0.0
        %2085 = vmatprep.subr.mxu0 0.0
        %2086 = vmatpush1.msra.mxu0 0.0
        %2087 = vmatprep.subr.mxu0 0.0
        %2088 = vmatpush1.msra.mxu0 0.0
        %2089 = vmatprep.subr.mxu0 0.0
        %2090 = vmatpush1.msra.mxu0 0.0
        %2091 = vmatprep.subr.mxu0 0.0
        %2092 = vmatpush1.msra.mxu0 0.0
        %2093 = vmatprep.subr.mxu0 0.0
        %2094 = vmatpush1.msra.mxu0 0.0
        %2095 = vmatprep.subr.mxu0 0.0
        %2096 = vmatpush1.msra.mxu0 0.0
        %2097 = vmatprep.subr.mxu0 0.0
        %2098 = vmatpush1.msra.mxu0 0.0
        %2099 = vmatprep.subr.mxu0 0.0
        %2100 = vmatpush1.msra.mxu0 0.0
        %2101 = vmatprep.subr.mxu0 0.0
        %2102 = vmatpush1.msra.mxu0 0.0
        %2103 = vmatprep.subr.mxu0 0.0
        %2104 = vmatpush1.msra.mxu0 0.0
        %2105 = vmatprep.subr.mxu0 0.0
        %2106 = vmatpush1.msra.mxu0 0.0
        %2107 = vmatprep.subr.mxu0 0.0
        %2108 = vmatpush1.msra.mxu0 0.0
        %2109 = vmatprep.subr.mxu0 0.0
        %2110 = vmatpush1.msra.mxu0 0.0
        %2111 = vmatprep.subr.mxu0 0.0
        %2112 = vmatpush1.msra.mxu0 0.0
        %2113 = vmatprep.subr.mxu0 0.0
        %2114 = vmatpush1.msra.mxu0 0.0
        %2115 = vmatprep.subr.mxu0 0.0
        %2116 = vmatpush1.msra.mxu0 0.0
        %2117 = vmatprep.subr.mxu0 0.0
        %2118 = vmatpush1.msra.mxu0 0.0
        %2119 = vmatprep.mubr.f32.mxu0 0.0
        %v2120 = vand.u32 %v199, 4294901760
        %v2121 = vsub.f32 %v199, %v2120
        %v2122 = vand.u32 %v2121, 4294901760
        %v2123 = vsub.f32 %v2121, %v2122
        %v2124 = vand.u32 %v2123, 4294901760
        %2125 = vmatmul.mubr.f32.gmra.mrb[0].mxu0 %v2124
        %v2126 = vpop.f32.mrb[0].mxu0
        %v2127 = vadd.f32 0.0, %v2126
        %v2128 = vpop.f32.mrb[0].mxu0
        %2129 = vdwg.mxu0
        %2130 = vmatprep.subr.mxu0 0.0
        %v2131 = vand.u32 %v2051, 4294901760
        %v2132 = vsub.f32 %v2051, %v2131
        %v2133 = vand.u32 %v2132, 4294901760
        %v2134 = vsub.f32 %v2132, %v2133
        %v2135 = vand.u32 %v2134, 4294901760
        %2136 = vmatpush1.msra.mxu0 %v2135
        %2137 = vmatprep.subr.mxu0 0.0
        %v2138 = vand.u32 %v2052, 4294901760
        %v2139 = vsub.f32 %v2052, %v2138
        %v2140 = vand.u32 %v2139, 4294901760
        %v2141 = vsub.f32 %v2139, %v2140
        %v2142 = vand.u32 %v2141, 4294901760
        %2143 = vmatpush1.msra.mxu0 %v2142
        %2144 = vmatprep.subr.mxu0 0.0
        %2145 = vmatpush1.msra.mxu0 0.0
        %2146 = vmatprep.subr.mxu0 0.0
        %2147 = vmatpush1.msra.mxu0 0.0
        %2148 = vmatprep.subr.mxu0 0.0
        %2149 = vmatpush1.msra.mxu0 0.0
        %2150 = vmatprep.subr.mxu0 0.0
        %2151 = vmatpush1.msra.mxu0 0.0
        %2152 = vmatprep.subr.mxu0 0.0
        %2153 = vmatpush1.msra.mxu0 0.0
        %2154 = vmatprep.subr.mxu0 0.0
        %2155 = vmatpush1.msra.mxu0 0.0
        %2156 = vmatprep.subr.mxu0 0.0
        %2157 = vmatpush1.msra.mxu0 0.0
        %2158 = vmatprep.subr.mxu0 0.0
        %2159 = vmatpush1.msra.mxu0 0.0
        %2160 = vmatprep.subr.mxu0 0.0
        %2161 = vmatpush1.msra.mxu0 0.0
        %2162 = vmatprep.subr.mxu0 0.0
        %2163 = vmatpush1.msra.mxu0 0.0
        %2164 = vmatprep.subr.mxu0 0.0
        %2165 = vmatpush1.msra.mxu0 0.0
        %2166 = vmatprep.subr.mxu0 0.0
        %2167 = vmatpush1.msra.mxu0 0.0
        %2168 = vmatprep.subr.mxu0 0.0
        %2169 = vmatpush1.msra.mxu0 0.0
        %2170 = vmatprep.subr.mxu0 0.0
        %2171 = vmatpush1.msra.mxu0 0.0
        %2172 = vmatprep.subr.mxu0 0.0
        %2173 = vmatpush1.msra.mxu0 0.0
        %2174 = vmatprep.subr.mxu0 0.0
        %2175 = vmatpush1.msra.mxu0 0.0
        %2176 = vmatprep.subr.mxu0 0.0
        %2177 = vmatpush1.msra.mxu0 0.0
        %2178 = vmatprep.subr.mxu0 0.0
        %2179 = vmatpush1.msra.mxu0 0.0
        %2180 = vmatprep.subr.mxu0 0.0
        %2181 = vmatpush1.msra.mxu0 0.0
        %2182 = vmatprep.subr.mxu0 0.0
        %2183 = vmatpush1.msra.mxu0 0.0
        %2184 = vmatprep.subr.mxu0 0.0
        %2185 = vmatpush1.msra.mxu0 0.0
        %2186 = vmatprep.subr.mxu0 0.0
        %2187 = vmatpush1.msra.mxu0 0.0
        %2188 = vmatprep.subr.mxu0 0.0
        %2189 = vmatpush1.msra.mxu0 0.0
        %2190 = vmatprep.subr.mxu0 0.0
        %2191 = vmatpush1.msra.mxu0 0.0
        %2192 = vmatprep.subr.mxu0 0.0
        %2193 = vmatpush1.msra.mxu0 0.0
        %2194 = vmatprep.subr.mxu0 0.0
        %2195 = vmatpush1.msra.mxu0 0.0
        %2196 = vmatprep.subr.mxu0 0.0
        %2197 = vmatpush1.msra.mxu0 0.0
        %2198 = vmatprep.subr.mxu0 0.0
        %2199 = vmatpush1.msra.mxu0 0.0
        %2200 = vmatprep.subr.mxu0 0.0
        %2201 = vmatpush1.msra.mxu0 0.0
        %2202 = vmatprep.subr.mxu0 0.0
        %2203 = vmatpush1.msra.mxu0 0.0
        %2204 = vmatprep.mubr.f32.mxu0 0.0
        %v2205 = vand.u32 %v199, 4294901760
        %2206 = vmatmul.mubr.f32.gmra.mrb[0].mxu0 %v2205
        %v2207 = vpop.f32.mrb[0].mxu0
        %v2208 = vadd.f32 %v2127, %v2207
        %v2209 = vpop.f32.mrb[0].mxu0
        %2210 = vdwg.mxu0
        %2211 = vmatprep.subr.mxu0 0.0
        %v2212 = vand.u32 %v2051, 4294901760
        %v2213 = vsub.f32 %v2051, %v2212
        %2214 = vmatpush1.msra.mxu0 %v2213
        %2215 = vmatprep.subr.mxu0 0.0
        %v2216 = vand.u32 %v2052, 4294901760
        %v2217 = vsub.f32 %v2052, %v2216
        %2218 = vmatpush1.msra.mxu0 %v2217
        %2219 = vmatprep.subr.mxu0 0.0
        %2220 = vmatpush1.msra.mxu0 0.0
        %2221 = vmatprep.subr.mxu0 0.0
        %2222 = vmatpush1.msra.mxu0 0.0
        %2223 = vmatprep.subr.mxu0 0.0
        %2224 = vmatpush1.msra.mxu0 0.0
        %2225 = vmatprep.subr.mxu0 0.0
        %2226 = vmatpush1.msra.mxu0 0.0
        %2227 = vmatprep.subr.mxu0 0.0
        %2228 = vmatpush1.msra.mxu0 0.0
        %2229 = vmatprep.subr.mxu0 0.0
        %2230 = vmatpush1.msra.mxu0 0.0
        %2231 = vmatprep.subr.mxu0 0.0
        %2232 = vmatpush1.msra.mxu0 0.0
        %2233 = vmatprep.subr.mxu0 0.0
        %2234 = vmatpush1.msra.mxu0 0.0
        %2235 = vmatprep.subr.mxu0 0.0
        %2236 = vmatpush1.msra.mxu0 0.0
        %2237 = vmatprep.subr.mxu0 0.0
        %2238 = vmatpush1.msra.mxu0 0.0
        %2239 = vmatprep.subr.mxu0 0.0
        %2240 = vmatpush1.msra.mxu0 0.0
        %2241 = vmatprep.subr.mxu0 0.0
        %2242 = vmatpush1.msra.mxu0 0.0
        %2243 = vmatprep.subr.mxu0 0.0
        %2244 = vmatpush1.msra.mxu0 0.0
        %2245 = vmatprep.subr.mxu0 0.0
        %2246 = vmatpush1.msra.mxu0 0.0
        %2247 = vmatprep.subr.mxu0 0.0
        %2248 = vmatpush1.msra.mxu0 0.0
        %2249 = vmatprep.subr.mxu0 0.0
        %2250 = vmatpush1.msra.mxu0 0.0
        %2251 = vmatprep.subr.mxu0 0.0
        %2252 = vmatpush1.msra.mxu0 0.0
        %2253 = vmatprep.subr.mxu0 0.0
        %2254 = vmatpush1.msra.mxu0 0.0
        %2255 = vmatprep.subr.mxu0 0.0
        %2256 = vmatpush1.msra.mxu0 0.0
        %2257 = vmatprep.subr.mxu0 0.0
        %2258 = vmatpush1.msra.mxu0 0.0
        %2259 = vmatprep.subr.mxu0 0.0
        %2260 = vmatpush1.msra.mxu0 0.0
        %2261 = vmatprep.subr.mxu0 0.0
        %2262 = vmatpush1.msra.mxu0 0.0
        %2263 = vmatprep.subr.mxu0 0.0
        %2264 = vmatpush1.msra.mxu0 0.0
        %2265 = vmatprep.subr.mxu0 0.0
        %2266 = vmatpush1.msra.mxu0 0.0
        %2267 = vmatprep.subr.mxu0 0.0
        %2268 = vmatpush1.msra.mxu0 0.0
        %2269 = vmatprep.subr.mxu0 0.0
        %2270 = vmatpush1.msra.mxu0 0.0
        %2271 = vmatprep.subr.mxu0 0.0
        %2272 = vmatpush1.msra.mxu0 0.0
        %2273 = vmatprep.subr.mxu0 0.0
        %2274 = vmatpush1.msra.mxu0 0.0
        %2275 = vmatprep.subr.mxu0 0.0
        %2276 = vmatpush1.msra.mxu0 0.0
        %2277 = vmatprep.subr.mxu0 0.0
        %2278 = vmatpush1.msra.mxu0 0.0
        %2279 = vmatprep.mubr.f32.mxu0 0.0
        %v2280 = vand.u32 %v199, 4294901760
        %v2281 = vsub.f32 %v199, %v2280
        %2282 = vmatmul.mubr.f32.gmra.mrb[0].mxu0 %v2281
        %v2283 = vpop.f32.mrb[0].mxu0
        %v2284 = vadd.f32 %v2208, %v2283
        %v2285 = vpop.f32.mrb[0].mxu0
        %2286 = vdwg.mxu0
        %2287 = vmatprep.subr.mxu0 0.0
        %v2288 = vand.u32 %v2051, 4294901760
        %2289 = vmatpush1.msra.mxu0 %v2288
        %2290 = vmatprep.subr.mxu0 0.0
        %v2291 = vand.u32 %v2052, 4294901760
        %2292 = vmatpush1.msra.mxu0 %v2291
        %2293 = vmatprep.subr.mxu0 0.0
        %2294 = vmatpush1.msra.mxu0 0.0
        %2295 = vmatprep.subr.mxu0 0.0
        %2296 = vmatpush1.msra.mxu0 0.0
        %2297 = vmatprep.subr.mxu0 0.0
        %2298 = vmatpush1.msra.mxu0 0.0
        %2299 = vmatprep.subr.mxu0 0.0
        %2300 = vmatpush1.msra.mxu0 0.0
        %2301 = vmatprep.subr.mxu0 0.0
        %2302 = vmatpush1.msra.mxu0 0.0
        %2303 = vmatprep.subr.mxu0 0.0
        %2304 = vmatpush1.msra.mxu0 0.0
        %2305 = vmatprep.subr.mxu0 0.0
        %2306 = vmatpush1.msra.mxu0 0.0
        %2307 = vmatprep.subr.mxu0 0.0
        %2308 = vmatpush1.msra.mxu0 0.0
        %2309 = vmatprep.subr.mxu0 0.0
        %2310 = vmatpush1.msra.mxu0 0.0
        %2311 = vmatprep.subr.mxu0 0.0
        %2312 = vmatpush1.msra.mxu0 0.0
        %2313 = vmatprep.subr.mxu0 0.0
        %2314 = vmatpush1.msra.mxu0 0.0
        %2315 = vmatprep.subr.mxu0 0.0
        %2316 = vmatpush1.msra.mxu0 0.0
        %2317 = vmatprep.subr.mxu0 0.0
        %2318 = vmatpush1.msra.mxu0 0.0
        %2319 = vmatprep.subr.mxu0 0.0
        %2320 = vmatpush1.msra.mxu0 0.0
        %2321 = vmatprep.subr.mxu0 0.0
        %2322 = vmatpush1.msra.mxu0 0.0
        %2323 = vmatprep.subr.mxu0 0.0
        %2324 = vmatpush1.msra.mxu0 0.0
        %2325 = vmatprep.subr.mxu0 0.0
        %2326 = vmatpush1.msra.mxu0 0.0
        %2327 = vmatprep.subr.mxu0 0.0
        %2328 = vmatpush1.msra.mxu0 0.0
        %2329 = vmatprep.subr.mxu0 0.0
        %2330 = vmatpush1.msra.mxu0 0.0
        %2331 = vmatprep.subr.mxu0 0.0
        %2332 = vmatpush1.msra.mxu0 0.0
        %2333 = vmatprep.subr.mxu0 0.0
        %2334 = vmatpush1.msra.mxu0 0.0
        %2335 = vmatprep.subr.mxu0 0.0
        %2336 = vmatpush1.msra.mxu0 0.0
        %2337 = vmatprep.subr.mxu0 0.0
        %2338 = vmatpush1.msra.mxu0 0.0
        %2339 = vmatprep.subr.mxu0 0.0
        %2340 = vmatpush1.msra.mxu0 0.0
        %2341 = vmatprep.subr.mxu0 0.0
        %2342 = vmatpush1.msra.mxu0 0.0
        %2343 = vmatprep.subr.mxu0 0.0
        %2344 = vmatpush1.msra.mxu0 0.0
        %2345 = vmatprep.subr.mxu0 0.0
        %2346 = vmatpush1.msra.mxu0 0.0
        %2347 = vmatprep.subr.mxu0 0.0
        %2348 = vmatpush1.msra.mxu0 0.0
        %2349 = vmatprep.subr.mxu0 0.0
        %2350 = vmatpush1.msra.mxu0 0.0
        %2351 = vmatprep.subr.mxu0 0.0
        %2352 = vmatpush1.msra.mxu0 0.0
        %2353 = vmatprep.mubr.f32.mxu0 0.0
        %v2354 = vand.u32 %v199, 4294901760
        %v2355 = vsub.f32 %v199, %v2354
        %v2356 = vand.u32 %v2355, 4294901760
        %2357 = vmatmul.mubr.f32.gmra.mrb[0].mxu0 %v2356
        %v2358 = vpop.f32.mrb[0].mxu0
        %v2359 = vadd.f32 %v2284, %v2358
        %v2360 = vpop.f32.mrb[0].mxu0
        %2361 = vdwg.mxu0
        %2362 = vmatprep.subr.mxu0 0.0
        %v2363 = vand.u32 %v2051, 4294901760
        %v2364 = vsub.f32 %v2051, %v2363
        %v2365 = vand.u32 %v2364, 4294901760
        %2366 = vmatpush1.msra.mxu0 %v2365
        %2367 = vmatprep.subr.mxu0 0.0
        %v2368 = vand.u32 %v2052, 4294901760
        %v2369 = vsub.f32 %v2052, %v2368
        %v2370 = vand.u32 %v2369, 4294901760
        %2371 = vmatpush1.msra.mxu0 %v2370
        %2372 = vmatprep.subr.mxu0 0.0
        %2373 = vmatpush1.msra.mxu0 0.0
        %2374 = vmatprep.subr.mxu0 0.0
        %2375 = vmatpush1.msra.mxu0 0.0
        %2376 = vmatprep.subr.mxu0 0.0
        %2377 = vmatpush1.msra.mxu0 0.0
        %2378 = vmatprep.subr.mxu0 0.0
        %2379 = vmatpush1.msra.mxu0 0.0
        %2380 = vmatprep.subr.mxu0 0.0
        %2381 = vmatpush1.msra.mxu0 0.0
        %2382 = vmatprep.subr.mxu0 0.0
        %2383 = vmatpush1.msra.mxu0 0.0
        %2384 = vmatprep.subr.mxu0 0.0
        %2385 = vmatpush1.msra.mxu0 0.0
        %2386 = vmatprep.subr.mxu0 0.0
        %2387 = vmatpush1.msra.mxu0 0.0
        %2388 = vmatprep.subr.mxu0 0.0
        %2389 = vmatpush1.msra.mxu0 0.0
        %2390 = vmatprep.subr.mxu0 0.0
        %2391 = vmatpush1.msra.mxu0 0.0
        %2392 = vmatprep.subr.mxu0 0.0
        %2393 = vmatpush1.msra.mxu0 0.0
        %2394 = vmatprep.subr.mxu0 0.0
        %2395 = vmatpush1.msra.mxu0 0.0
        %2396 = vmatprep.subr.mxu0 0.0
        %2397 = vmatpush1.msra.mxu0 0.0
        %2398 = vmatprep.subr.mxu0 0.0
        %2399 = vmatpush1.msra.mxu0 0.0
        %2400 = vmatprep.subr.mxu0 0.0
        %2401 = vmatpush1.msra.mxu0 0.0
        %2402 = vmatprep.subr.mxu0 0.0
        %2403 = vmatpush1.msra.mxu0 0.0
        %2404 = vmatprep.subr.mxu0 0.0
        %2405 = vmatpush1.msra.mxu0 0.0
        %2406 = vmatprep.subr.mxu0 0.0
        %2407 = vmatpush1.msra.mxu0 0.0
        %2408 = vmatprep.subr.mxu0 0.0
        %2409 = vmatpush1.msra.mxu0 0.0
        %2410 = vmatprep.subr.mxu0 0.0
        %2411 = vmatpush1.msra.mxu0 0.0
        %2412 = vmatprep.subr.mxu0 0.0
        %2413 = vmatpush1.msra.mxu0 0.0
        %2414 = vmatprep.subr.mxu0 0.0
        %2415 = vmatpush1.msra.mxu0 0.0
        %2416 = vmatprep.subr.mxu0 0.0
        %2417 = vmatpush1.msra.mxu0 0.0
        %2418 = vmatprep.subr.mxu0 0.0
        %2419 = vmatpush1.msra.mxu0 0.0
        %2420 = vmatprep.subr.mxu0 0.0
        %2421 = vmatpush1.msra.mxu0 0.0
        %2422 = vmatprep.subr.mxu0 0.0
        %2423 = vmatpush1.msra.mxu0 0.0
        %2424 = vmatprep.subr.mxu0 0.0
        %2425 = vmatpush1.msra.mxu0 0.0
        %2426 = vmatprep.subr.mxu0 0.0
        %2427 = vmatpush1.msra.mxu0 0.0
        %2428 = vmatprep.subr.mxu0 0.0
        %2429 = vmatpush1.msra.mxu0 0.0
        %2430 = vmatprep.subr.mxu0 0.0
        %2431 = vmatpush1.msra.mxu0 0.0
        %2432 = vmatprep.mubr.f32.mxu0 0.0
        %v2433 = vand.u32 %v199, 4294901760
        %2434 = vmatmul.mubr.f32.gmra.mrb[0].mxu0 %v2433
        %v2435 = vpop.f32.mrb[0].mxu0
        %v2436 = vadd.f32 %v2359, %v2435
        %v2437 = vpop.f32.mrb[0].mxu0
        %2438 = vdwg.mxu0
        %2439 = vmatprep.subr.mxu0 0.0
        %v2440 = vand.u32 %v2051, 4294901760
        %2441 = vmatpush1.msra.mxu0 %v2440
        %2442 = vmatprep.subr.mxu0 0.0
        %v2443 = vand.u32 %v2052, 4294901760
        %2444 = vmatpush1.msra.mxu0 %v2443
        %2445 = vmatprep.subr.mxu0 0.0
        %2446 = vmatpush1.msra.mxu0 0.0
        %2447 = vmatprep.subr.mxu0 0.0
        %2448 = vmatpush1.msra.mxu0 0.0
        %2449 = vmatprep.subr.mxu0 0.0
        %2450 = vmatpush1.msra.mxu0 0.0
        %2451 = vmatprep.subr.mxu0 0.0
        %2452 = vmatpush1.msra.mxu0 0.0
        %2453 = vmatprep.subr.mxu0 0.0
        %2454 = vmatpush1.msra.mxu0 0.0
        %2455 = vmatprep.subr.mxu0 0.0
        %2456 = vmatpush1.msra.mxu0 0.0
        %2457 = vmatprep.subr.mxu0 0.0
        %2458 = vmatpush1.msra.mxu0 0.0
        %2459 = vmatprep.subr.mxu0 0.0
        %2460 = vmatpush1.msra.mxu0 0.0
        %2461 = vmatprep.subr.mxu0 0.0
        %2462 = vmatpush1.msra.mxu0 0.0
        %2463 = vmatprep.subr.mxu0 0.0
        %2464 = vmatpush1.msra.mxu0 0.0
        %2465 = vmatprep.subr.mxu0 0.0
        %2466 = vmatpush1.msra.mxu0 0.0
        %2467 = vmatprep.subr.mxu0 0.0
        %2468 = vmatpush1.msra.mxu0 0.0
        %2469 = vmatprep.subr.mxu0 0.0
        %2470 = vmatpush1.msra.mxu0 0.0
        %2471 = vmatprep.subr.mxu0 0.0
        %2472 = vmatpush1.msra.mxu0 0.0
        %2473 = vmatprep.subr.mxu0 0.0
        %2474 = vmatpush1.msra.mxu0 0.0
        %2475 = vmatprep.subr.mxu0 0.0
        %2476 = vmatpush1.msra.mxu0 0.0
        %2477 = vmatprep.subr.mxu0 0.0
        %2478 = vmatpush1.msra.mxu0 0.0
        %2479 = vmatprep.subr.mxu0 0.0
        %2480 = vmatpush1.msra.mxu0 0.0
        %2481 = vmatprep.subr.mxu0 0.0
        %2482 = vmatpush1.msra.mxu0 0.0
        %2483 = vmatprep.subr.mxu0 0.0
        %2484 = vmatpush1.msra.mxu0 0.0
        %2485 = vmatprep.subr.mxu0 0.0
        %2486 = vmatpush1.msra.mxu0 0.0
        %2487 = vmatprep.subr.mxu0 0.0
        %2488 = vmatpush1.msra.mxu0 0.0
        %2489 = vmatprep.subr.mxu0 0.0
        %2490 = vmatpush1.msra.mxu0 0.0
        %2491 = vmatprep.subr.mxu0 0.0
        %2492 = vmatpush1.msra.mxu0 0.0
        %2493 = vmatprep.subr.mxu0 0.0
        %2494 = vmatpush1.msra.mxu0 0.0
        %2495 = vmatprep.subr.mxu0 0.0
        %2496 = vmatpush1.msra.mxu0 0.0
        %2497 = vmatprep.subr.mxu0 0.0
        %2498 = vmatpush1.msra.mxu0 0.0
        %2499 = vmatprep.subr.mxu0 0.0
        %2500 = vmatpush1.msra.mxu0 0.0
        %2501 = vmatprep.subr.mxu0 0.0
        %2502 = vmatpush1.msra.mxu0 0.0
        %2503 = vmatprep.subr.mxu0 0.0
        %2504 = vmatpush1.msra.mxu0 0.0
        %2505 = vmatprep.mubr.f32.mxu0 0.0
        %v2506 = vand.u32 %v199, 4294901760
        %2507 = vmatmul.mubr.f32.gmra.mrb[0].mxu0 %v2506
        %v2508 = vpop.f32.mrb[0].mxu0
        %v2509 = vadd.f32 %v2436, %v2508
        %v2510 = vpop.f32.mrb[0].mxu0
        %2511 = vdwg.mxu0
        %v2513 = vsel %vm197, %v2509, 0
        %2515 = vmatprep.subr.mxu0 0.0
        %v2516 = vand.u32 %v193, 4294901760
        %2517 = vmatpush1.msra.mxu0 %v2516
        %2518 = vmatprep.subr.mxu0 0.0
        %v2519 = vand.u32 %v194, 4294901760
        %2520 = vmatpush1.msra.mxu0 %v2519
        %2521 = vmatprep.subr.mxu0 0.0
        %2522 = vmatpush1.msra.mxu0 0.0
        %2523 = vmatprep.subr.mxu0 0.0
        %2524 = vmatpush1.msra.mxu0 0.0
        %2525 = vmatprep.subr.mxu0 0.0
        %2526 = vmatpush1.msra.mxu0 0.0
        %2527 = vmatprep.subr.mxu0 0.0
        %2528 = vmatpush1.msra.mxu0 0.0
        %2529 = vmatprep.subr.mxu0 0.0
        %2530 = vmatpush1.msra.mxu0 0.0
        %2531 = vmatprep.subr.mxu0 0.0
        %2532 = vmatpush1.msra.mxu0 0.0
        %2533 = vmatprep.subr.mxu0 0.0
        %2534 = vmatpush1.msra.mxu0 0.0
        %2535 = vmatprep.subr.mxu0 0.0
        %2536 = vmatpush1.msra.mxu0 0.0
        %2537 = vmatprep.subr.mxu0 0.0
        %2538 = vmatpush1.msra.mxu0 0.0
        %2539 = vmatprep.subr.mxu0 0.0
        %2540 = vmatpush1.msra.mxu0 0.0
        %2541 = vmatprep.subr.mxu0 0.0
        %2542 = vmatpush1.msra.mxu0 0.0
        %2543 = vmatprep.subr.mxu0 0.0
        %2544 = vmatpush1.msra.mxu0 0.0
        %2545 = vmatprep.subr.mxu0 0.0
        %2546 = vmatpush1.msra.mxu0 0.0
        %2547 = vmatprep.subr.mxu0 0.0
        %2548 = vmatpush1.msra.mxu0 0.0
        %2549 = vmatprep.subr.mxu0 0.0
        %2550 = vmatpush1.msra.mxu0 0.0
        %2551 = vmatprep.subr.mxu0 0.0
        %2552 = vmatpush1.msra.mxu0 0.0
        %2553 = vmatprep.subr.mxu0 0.0
        %2554 = vmatpush1.msra.mxu0 0.0
        %2555 = vmatprep.subr.mxu0 0.0
        %2556 = vmatpush1.msra.mxu0 0.0
        %2557 = vmatprep.subr.mxu0 0.0
        %2558 = vmatpush1.msra.mxu0 0.0
        %2559 = vmatprep.subr.mxu0 0.0
        %2560 = vmatpush1.msra.mxu0 0.0
        %2561 = vmatprep.subr.mxu0 0.0
        %2562 = vmatpush1.msra.mxu0 0.0
        %2563 = vmatprep.subr.mxu0 0.0
        %2564 = vmatpush1.msra.mxu0 0.0
        %2565 = vmatprep.subr.mxu0 0.0
        %2566 = vmatpush1.msra.mxu0 0.0
        %2567 = vmatprep.subr.mxu0 0.0
        %2568 = vmatpush1.msra.mxu0 0.0
        %2569 = vmatprep.subr.mxu0 0.0
        %2570 = vmatpush1.msra.mxu0 0.0
        %2571 = vmatprep.subr.mxu0 0.0
        %2572 = vmatpush1.msra.mxu0 0.0
        %2573 = vmatprep.subr.mxu0 0.0
        %2574 = vmatpush1.msra.mxu0 0.0
        %2575 = vmatprep.subr.mxu0 0.0
        %2576 = vmatpush1.msra.mxu0 0.0
        %2577 = vmatprep.subr.mxu0 0.0
        %2578 = vmatpush1.msra.mxu0 0.0
        %2579 = vmatprep.subr.mxu0 0.0
        %2580 = vmatpush1.msra.mxu0 0.0
        %2581 = vmatprep.mubr.f32.mxu0 0.0
        %v2582 = vand.u32 %v2513, 4294901760
        %v2583 = vsub.f32 %v2513, %v2582
        %v2584 = vand.u32 %v2583, 4294901760
        %v2585 = vsub.f32 %v2583, %v2584
        %v2586 = vand.u32 %v2585, 4294901760
        %2587 = vmatmul.mubr.f32.gmra.mrb[0].mxu0 %v2586
        %v2588 = vpop.f32.mrb[0].mxu0
        %v2589 = vadd.f32 0.0, %v2588
        %v2590 = vpop.f32.mrb[0].mxu0
        %2591 = vdwg.mxu0
        %2592 = vmatprep.subr.mxu0 0.0
        %v2593 = vand.u32 %v193, 4294901760
        %v2594 = vsub.f32 %v193, %v2593
        %v2595 = vand.u32 %v2594, 4294901760
        %v2596 = vsub.f32 %v2594, %v2595
        %v2597 = vand.u32 %v2596, 4294901760
        %2598 = vmatpush1.msra.mxu0 %v2597
        %2599 = vmatprep.subr.mxu0 0.0
        %v2600 = vand.u32 %v194, 4294901760
        %v2601 = vsub.f32 %v194, %v2600
        %v2602 = vand.u32 %v2601, 4294901760
        %v2603 = vsub.f32 %v2601, %v2602
        %v2604 = vand.u32 %v2603, 4294901760
        %2605 = vmatpush1.msra.mxu0 %v2604
        %2606 = vmatprep.subr.mxu0 0.0
        %2607 = vmatpush1.msra.mxu0 0.0
        %2608 = vmatprep.subr.mxu0 0.0
        %2609 = vmatpush1.msra.mxu0 0.0
        %2610 = vmatprep.subr.mxu0 0.0
        %2611 = vmatpush1.msra.mxu0 0.0
        %2612 = vmatprep.subr.mxu0 0.0
        %2613 = vmatpush1.msra.mxu0 0.0
        %2614 = vmatprep.subr.mxu0 0.0
        %2615 = vmatpush1.msra.mxu0 0.0
        %2616 = vmatprep.subr.mxu0 0.0
        %2617 = vmatpush1.msra.mxu0 0.0
        %2618 = vmatprep.subr.mxu0 0.0
        %2619 = vmatpush1.msra.mxu0 0.0
        %2620 = vmatprep.subr.mxu0 0.0
        %2621 = vmatpush1.msra.mxu0 0.0
        %2622 = vmatprep.subr.mxu0 0.0
        %2623 = vmatpush1.msra.mxu0 0.0
        %2624 = vmatprep.subr.mxu0 0.0
        %2625 = vmatpush1.msra.mxu0 0.0
        %2626 = vmatprep.subr.mxu0 0.0
        %2627 = vmatpush1.msra.mxu0 0.0
        %2628 = vmatprep.subr.mxu0 0.0
        %2629 = vmatpush1.msra.mxu0 0.0
        %2630 = vmatprep.subr.mxu0 0.0
        %2631 = vmatpush1.msra.mxu0 0.0
        %2632 = vmatprep.subr.mxu0 0.0
        %2633 = vmatpush1.msra.mxu0 0.0
        %2634 = vmatprep.subr.mxu0 0.0
        %2635 = vmatpush1.msra.mxu0 0.0
        %2636 = vmatprep.subr.mxu0 0.0
        %2637 = vmatpush1.msra.mxu0 0.0
        %2638 = vmatprep.subr.mxu0 0.0
        %2639 = vmatpush1.msra.mxu0 0.0
        %2640 = vmatprep.subr.mxu0 0.0
        %2641 = vmatpush1.msra.mxu0 0.0
        %2642 = vmatprep.subr.mxu0 0.0
        %2643 = vmatpush1.msra.mxu0 0.0
        %2644 = vmatprep.subr.mxu0 0.0
        %2645 = vmatpush1.msra.mxu0 0.0
        %2646 = vmatprep.subr.mxu0 0.0
        %2647 = vmatpush1.msra.mxu0 0.0
        %2648 = vmatprep.subr.mxu0 0.0
        %2649 = vmatpush1.msra.mxu0 0.0
        %2650 = vmatprep.subr.mxu0 0.0
        %2651 = vmatpush1.msra.mxu0 0.0
        %2652 = vmatprep.subr.mxu0 0.0
        %2653 = vmatpush1.msra.mxu0 0.0
        %2654 = vmatprep.subr.mxu0 0.0
        %2655 = vmatpush1.msra.mxu0 0.0
        %2656 = vmatprep.subr.mxu0 0.0
        %2657 = vmatpush1.msra.mxu0 0.0
        %2658 = vmatprep.subr.mxu0 0.0
        %2659 = vmatpush1.msra.mxu0 0.0
        %2660 = vmatprep.subr.mxu0 0.0
        %2661 = vmatpush1.msra.mxu0 0.0
        %2662 = vmatprep.subr.mxu0 0.0
        %2663 = vmatpush1.msra.mxu0 0.0
        %2664 = vmatprep.subr.mxu0 0.0
        %2665 = vmatpush1.msra.mxu0 0.0
        %2666 = vmatprep.mubr.f32.mxu0 0.0
        %v2667 = vand.u32 %v2513, 4294901760
        %2668 = vmatmul.mubr.f32.gmra.mrb[0].mxu0 %v2667
        %v2669 = vpop.f32.mrb[0].mxu0
        %v2670 = vadd.f32 %v2589, %v2669
        %v2671 = vpop.f32.mrb[0].mxu0
        %2672 = vdwg.mxu0
        %2673 = vmatprep.subr.mxu0 0.0
        %v2674 = vand.u32 %v193, 4294901760
        %v2675 = vsub.f32 %v193, %v2674
        %2676 = vmatpush1.msra.mxu0 %v2675
        %2677 = vmatprep.subr.mxu0 0.0
        %v2678 = vand.u32 %v194, 4294901760
        %v2679 = vsub.f32 %v194, %v2678
        %2680 = vmatpush1.msra.mxu0 %v2679
        %2681 = vmatprep.subr.mxu0 0.0
        %2682 = vmatpush1.msra.mxu0 0.0
        %2683 = vmatprep.subr.mxu0 0.0
        %2684 = vmatpush1.msra.mxu0 0.0
        %2685 = vmatprep.subr.mxu0 0.0
        %2686 = vmatpush1.msra.mxu0 0.0
        %2687 = vmatprep.subr.mxu0 0.0
        %2688 = vmatpush1.msra.mxu0 0.0
        %2689 = vmatprep.subr.mxu0 0.0
        %2690 = vmatpush1.msra.mxu0 0.0
        %2691 = vmatprep.subr.mxu0 0.0
        %2692 = vmatpush1.msra.mxu0 0.0
        %2693 = vmatprep.subr.mxu0 0.0
        %2694 = vmatpush1.msra.mxu0 0.0
        %2695 = vmatprep.subr.mxu0 0.0
        %2696 = vmatpush1.msra.mxu0 0.0
        %2697 = vmatprep.subr.mxu0 0.0
        %2698 = vmatpush1.msra.mxu0 0.0
        %2699 = vmatprep.subr.mxu0 0.0
        %2700 = vmatpush1.msra.mxu0 0.0
        %2701 = vmatprep.subr.mxu0 0.0
        %2702 = vmatpush1.msra.mxu0 0.0
        %2703 = vmatprep.subr.mxu0 0.0
        %2704 = vmatpush1.msra.mxu0 0.0
        %2705 = vmatprep.subr.mxu0 0.0
        %2706 = vmatpush1.msra.mxu0 0.0
        %2707 = vmatprep.subr.mxu0 0.0
        %2708 = vmatpush1.msra.mxu0 0.0
        %2709 = vmatprep.subr.mxu0 0.0
        %2710 = vmatpush1.msra.mxu0 0.0
        %2711 = vmatprep.subr.mxu0 0.0
        %2712 = vmatpush1.msra.mxu0 0.0
        %2713 = vmatprep.subr.mxu0 0.0
        %2714 = vmatpush1.msra.mxu0 0.0
        %2715 = vmatprep.subr.mxu0 0.0
        %2716 = vmatpush1.msra.mxu0 0.0
        %2717 = vmatprep.subr.mxu0 0.0
        %2718 = vmatpush1.msra.mxu0 0.0
        %2719 = vmatprep.subr.mxu0 0.0
        %2720 = vmatpush1.msra.mxu0 0.0
        %2721 = vmatprep.subr.mxu0 0.0
        %2722 = vmatpush1.msra.mxu0 0.0
        %2723 = vmatprep.subr.mxu0 0.0
        %2724 = vmatpush1.msra.mxu0 0.0
        %2725 = vmatprep.subr.mxu0 0.0
        %2726 = vmatpush1.msra.mxu0 0.0
        %2727 = vmatprep.subr.mxu0 0.0
        %2728 = vmatpush1.msra.mxu0 0.0
        %2729 = vmatprep.subr.mxu0 0.0
        %2730 = vmatpush1.msra.mxu0 0.0
        %2731 = vmatprep.subr.mxu0 0.0
        %2732 = vmatpush1.msra.mxu0 0.0
        %2733 = vmatprep.subr.mxu0 0.0
        %2734 = vmatpush1.msra.mxu0 0.0
        %2735 = vmatprep.subr.mxu0 0.0
        %2736 = vmatpush1.msra.mxu0 0.0
        %2737 = vmatprep.subr.mxu0 0.0
        %2738 = vmatpush1.msra.mxu0 0.0
        %2739 = vmatprep.subr.mxu0 0.0
        %2740 = vmatpush1.msra.mxu0 0.0
        %2741 = vmatprep.mubr.f32.mxu0 0.0
        %v2742 = vand.u32 %v2513, 4294901760
        %v2743 = vsub.f32 %v2513, %v2742
        %2744 = vmatmul.mubr.f32.gmra.mrb[0].mxu0 %v2743
        %v2745 = vpop.f32.mrb[0].mxu0
        %v2746 = vadd.f32 %v2670, %v2745
        %v2747 = vpop.f32.mrb[0].mxu0
        %2748 = vdwg.mxu0
        %2749 = vmatprep.subr.mxu0 0.0
        %v2750 = vand.u32 %v193, 4294901760
        %2751 = vmatpush1.msra.mxu0 %v2750
        %2752 = vmatprep.subr.mxu0 0.0
        %v2753 = vand.u32 %v194, 4294901760
        %2754 = vmatpush1.msra.mxu0 %v2753
        %2755 = vmatprep.subr.mxu0 0.0
        %2756 = vmatpush1.msra.mxu0 0.0
        %2757 = vmatprep.subr.mxu0 0.0
        %2758 = vmatpush1.msra.mxu0 0.0
        %2759 = vmatprep.subr.mxu0 0.0
        %2760 = vmatpush1.msra.mxu0 0.0
        %2761 = vmatprep.subr.mxu0 0.0
        %2762 = vmatpush1.msra.mxu0 0.0
        %2763 = vmatprep.subr.mxu0 0.0
        %2764 = vmatpush1.msra.mxu0 0.0
        %2765 = vmatprep.subr.mxu0 0.0
        %2766 = vmatpush1.msra.mxu0 0.0
        %2767 = vmatprep.subr.mxu0 0.0
        %2768 = vmatpush1.msra.mxu0 0.0
        %2769 = vmatprep.subr.mxu0 0.0
        %2770 = vmatpush1.msra.mxu0 0.0
        %2771 = vmatprep.subr.mxu0 0.0
        %2772 = vmatpush1.msra.mxu0 0.0
        %2773 = vmatprep.subr.mxu0 0.0
        %2774 = vmatpush1.msra.mxu0 0.0
        %2775 = vmatprep.subr.mxu0 0.0
        %2776 = vmatpush1.msra.mxu0 0.0
        %2777 = vmatprep.subr.mxu0 0.0
        %2778 = vmatpush1.msra.mxu0 0.0
        %2779 = vmatprep.subr.mxu0 0.0
        %2780 = vmatpush1.msra.mxu0 0.0
        %2781 = vmatprep.subr.mxu0 0.0
        %2782 = vmatpush1.msra.mxu0 0.0
        %2783 = vmatprep.subr.mxu0 0.0
        %2784 = vmatpush1.msra.mxu0 0.0
        %2785 = vmatprep.subr.mxu0 0.0
        %2786 = vmatpush1.msra.mxu0 0.0
        %2787 = vmatprep.subr.mxu0 0.0
        %2788 = vmatpush1.msra.mxu0 0.0
        %2789 = vmatprep.subr.mxu0 0.0
        %2790 = vmatpush1.msra.mxu0 0.0
        %2791 = vmatprep.subr.mxu0 0.0
        %2792 = vmatpush1.msra.mxu0 0.0
        %2793 = vmatprep.subr.mxu0 0.0
        %2794 = vmatpush1.msra.mxu0 0.0
        %2795 = vmatprep.subr.mxu0 0.0
        %2796 = vmatpush1.msra.mxu0 0.0
        %2797 = vmatprep.subr.mxu0 0.0
        %2798 = vmatpush1.msra.mxu0 0.0
        %2799 = vmatprep.subr.mxu0 0.0
        %2800 = vmatpush1.msra.mxu0 0.0
        %2801 = vmatprep.subr.mxu0 0.0
        %2802 = vmatpush1.msra.mxu0 0.0
        %2803 = vmatprep.subr.mxu0 0.0
        %2804 = vmatpush1.msra.mxu0 0.0
        %2805 = vmatprep.subr.mxu0 0.0
        %2806 = vmatpush1.msra.mxu0 0.0
        %2807 = vmatprep.subr.mxu0 0.0
        %2808 = vmatpush1.msra.mxu0 0.0
        %2809 = vmatprep.subr.mxu0 0.0
        %2810 = vmatpush1.msra.mxu0 0.0
        %2811 = vmatprep.subr.mxu0 0.0
        %2812 = vmatpush1.msra.mxu0 0.0
        %2813 = vmatprep.subr.mxu0 0.0
        %2814 = vmatpush1.msra.mxu0 0.0
        %2815 = vmatprep.mubr.f32.mxu0 0.0
        %v2816 = vand.u32 %v2513, 4294901760
        %v2817 = vsub.f32 %v2513, %v2816
        %v2818 = vand.u32 %v2817, 4294901760
        %2819 = vmatmul.mubr.f32.gmra.mrb[0].mxu0 %v2818
        %v2820 = vpop.f32.mrb[0].mxu0
        %v2821 = vadd.f32 %v2746, %v2820
        %v2822 = vpop.f32.mrb[0].mxu0
        %2823 = vdwg.mxu0
        %2824 = vmatprep.subr.mxu0 0.0
        %v2825 = vand.u32 %v193, 4294901760
        %v2826 = vsub.f32 %v193, %v2825
        %v2827 = vand.u32 %v2826, 4294901760
        %2828 = vmatpush1.msra.mxu0 %v2827
        %2829 = vmatprep.subr.mxu0 0.0
        %v2830 = vand.u32 %v194, 4294901760
        %v2831 = vsub.f32 %v194, %v2830
        %v2832 = vand.u32 %v2831, 4294901760
        %2833 = vmatpush1.msra.mxu0 %v2832
        %2834 = vmatprep.subr.mxu0 0.0
        %2835 = vmatpush1.msra.mxu0 0.0
        %2836 = vmatprep.subr.mxu0 0.0
        %2837 = vmatpush1.msra.mxu0 0.0
        %2838 = vmatprep.subr.mxu0 0.0
        %2839 = vmatpush1.msra.mxu0 0.0
        %2840 = vmatprep.subr.mxu0 0.0
        %2841 = vmatpush1.msra.mxu0 0.0
        %2842 = vmatprep.subr.mxu0 0.0
        %2843 = vmatpush1.msra.mxu0 0.0
        %2844 = vmatprep.subr.mxu0 0.0
        %2845 = vmatpush1.msra.mxu0 0.0
        %2846 = vmatprep.subr.mxu0 0.0
        %2847 = vmatpush1.msra.mxu0 0.0
        %2848 = vmatprep.subr.mxu0 0.0
        %2849 = vmatpush1.msra.mxu0 0.0
        %2850 = vmatprep.subr.mxu0 0.0
        %2851 = vmatpush1.msra.mxu0 0.0
        %2852 = vmatprep.subr.mxu0 0.0
        %2853 = vmatpush1.msra.mxu0 0.0
        %2854 = vmatprep.subr.mxu0 0.0
        %2855 = vmatpush1.msra.mxu0 0.0
        %2856 = vmatprep.subr.mxu0 0.0
        %2857 = vmatpush1.msra.mxu0 0.0
        %2858 = vmatprep.subr.mxu0 0.0
        %2859 = vmatpush1.msra.mxu0 0.0
        %2860 = vmatprep.subr.mxu0 0.0
        %2861 = vmatpush1.msra.mxu0 0.0
        %2862 = vmatprep.subr.mxu0 0.0
        %2863 = vmatpush1.msra.mxu0 0.0
        %2864 = vmatprep.subr.mxu0 0.0
        %2865 = vmatpush1.msra.mxu0 0.0
        %2866 = vmatprep.subr.mxu0 0.0
        %2867 = vmatpush1.msra.mxu0 0.0
        %2868 = vmatprep.subr.mxu0 0.0
        %2869 = vmatpush1.msra.mxu0 0.0
        %2870 = vmatprep.subr.mxu0 0.0
        %2871 = vmatpush1.msra.mxu0 0.0
        %2872 = vmatprep.subr.mxu0 0.0
        %2873 = vmatpush1.msra.mxu0 0.0
        %2874 = vmatprep.subr.mxu0 0.0
        %2875 = vmatpush1.msra.mxu0 0.0
        %2876 = vmatprep.subr.mxu0 0.0
        %2877 = vmatpush1.msra.mxu0 0.0
        %2878 = vmatprep.subr.mxu0 0.0
        %2879 = vmatpush1.msra.mxu0 0.0
        %2880 = vmatprep.subr.mxu0 0.0
        %2881 = vmatpush1.msra.mxu0 0.0
        %2882 = vmatprep.subr.mxu0 0.0
        %2883 = vmatpush1.msra.mxu0 0.0
        %2884 = vmatprep.subr.mxu0 0.0
        %2885 = vmatpush1.msra.mxu0 0.0
        %2886 = vmatprep.subr.mxu0 0.0
        %2887 = vmatpush1.msra.mxu0 0.0
        %2888 = vmatprep.subr.mxu0 0.0
        %2889 = vmatpush1.msra.mxu0 0.0
        %2890 = vmatprep.subr.mxu0 0.0
        %2891 = vmatpush1.msra.mxu0 0.0
        %2892 = vmatprep.subr.mxu0 0.0
        %2893 = vmatpush1.msra.mxu0 0.0
        %2894 = vmatprep.mubr.f32.mxu0 0.0
        %v2895 = vand.u32 %v2513, 4294901760
        %2896 = vmatmul.mubr.f32.gmra.mrb[0].mxu0 %v2895
        %v2897 = vpop.f32.mrb[0].mxu0
        %v2898 = vadd.f32 %v2821, %v2897
        %v2899 = vpop.f32.mrb[0].mxu0
        %2900 = vdwg.mxu0
        %2901 = vmatprep.subr.mxu0 0.0
        %v2902 = vand.u32 %v193, 4294901760
        %2903 = vmatpush1.msra.mxu0 %v2902
        %2904 = vmatprep.subr.mxu0 0.0
        %v2905 = vand.u32 %v194, 4294901760
        %2906 = vmatpush1.msra.mxu0 %v2905
        %2907 = vmatprep.subr.mxu0 0.0
        %2908 = vmatpush1.msra.mxu0 0.0
        %2909 = vmatprep.subr.mxu0 0.0
        %2910 = vmatpush1.msra.mxu0 0.0
        %2911 = vmatprep.subr.mxu0 0.0
        %2912 = vmatpush1.msra.mxu0 0.0
        %2913 = vmatprep.subr.mxu0 0.0
        %2914 = vmatpush1.msra.mxu0 0.0
        %2915 = vmatprep.subr.mxu0 0.0
        %2916 = vmatpush1.msra.mxu0 0.0
        %2917 = vmatprep.subr.mxu0 0.0
        %2918 = vmatpush1.msra.mxu0 0.0
        %2919 = vmatprep.subr.mxu0 0.0
        %2920 = vmatpush1.msra.mxu0 0.0
        %2921 = vmatprep.subr.mxu0 0.0
        %2922 = vmatpush1.msra.mxu0 0.0
        %2923 = vmatprep.subr.mxu0 0.0
        %2924 = vmatpush1.msra.mxu0 0.0
        %2925 = vmatprep.subr.mxu0 0.0
        %2926 = vmatpush1.msra.mxu0 0.0
        %2927 = vmatprep.subr.mxu0 0.0
        %2928 = vmatpush1.msra.mxu0 0.0
        %2929 = vmatprep.subr.mxu0 0.0
        %2930 = vmatpush1.msra.mxu0 0.0
        %2931 = vmatprep.subr.mxu0 0.0
        %2932 = vmatpush1.msra.mxu0 0.0
        %2933 = vmatprep.subr.mxu0 0.0
        %2934 = vmatpush1.msra.mxu0 0.0
        %2935 = vmatprep.subr.mxu0 0.0
        %2936 = vmatpush1.msra.mxu0 0.0
        %2937 = vmatprep.subr.mxu0 0.0
        %2938 = vmatpush1.msra.mxu0 0.0
        %2939 = vmatprep.subr.mxu0 0.0
        %2940 = vmatpush1.msra.mxu0 0.0
        %2941 = vmatprep.subr.mxu0 0.0
        %2942 = vmatpush1.msra.mxu0 0.0
        %2943 = vmatprep.subr.mxu0 0.0
        %2944 = vmatpush1.msra.mxu0 0.0
        %2945 = vmatprep.subr.mxu0 0.0
        %2946 = vmatpush1.msra.mxu0 0.0
        %2947 = vmatprep.subr.mxu0 0.0
        %2948 = vmatpush1.msra.mxu0 0.0
        %2949 = vmatprep.subr.mxu0 0.0
        %2950 = vmatpush1.msra.mxu0 0.0
        %2951 = vmatprep.subr.mxu0 0.0
        %2952 = vmatpush1.msra.mxu0 0.0
        %2953 = vmatprep.subr.mxu0 0.0
        %2954 = vmatpush1.msra.mxu0 0.0
        %2955 = vmatprep.subr.mxu0 0.0
        %2956 = vmatpush1.msra.mxu0 0.0
        %2957 = vmatprep.subr.mxu0 0.0
        %2958 = vmatpush1.msra.mxu0 0.0
        %2959 = vmatprep.subr.mxu0 0.0
        %2960 = vmatpush1.msra.mxu0 0.0
        %2961 = vmatprep.subr.mxu0 0.0
        %2962 = vmatpush1.msra.mxu0 0.0
        %2963 = vmatprep.subr.mxu0 0.0
        %2964 = vmatpush1.msra.mxu0 0.0
        %2965 = vmatprep.subr.mxu0 0.0
        %2966 = vmatpush1.msra.mxu0 0.0
        %2967 = vmatprep.mubr.f32.mxu0 0.0
        %v2968 = vand.u32 %v2513, 4294901760
        %2969 = vmatmul.mubr.f32.gmra.mrb[0].mxu0 %v2968
        %v2970 = vpop.f32.mrb[0].mxu0
        %v2971 = vadd.f32 %v2898, %v2970
        %v2972 = vpop.f32.mrb[0].mxu0
        %2973 = vdwg.mxu0
        %s2974 = scalar_lea.vmem %s189, 16 [#allocation5]
        %2975 = vst.msk [vmem:[%s2974] sm:$0xff] %vm1122, %v2971
        %s2976 = scalar_lea.vmem %s167, 48 [#allocation2]
        %v2977 = vld [vmem:[%s2976] sm:$0xff]
        %v2978 = vld [vmem:[%s2976 + $0x8] sm:$0xff]
        %2979 = vmatprep.subr.mxu0 0.0
        %v2980 = vand.u32 %v2977, 4294901760
        %2981 = vmatpush1.msra.mxu0 %v2980
        %2982 = vmatprep.subr.mxu0 0.0
        %v2983 = vand.u32 %v2978, 4294901760
        %2984 = vmatpush1.msra.mxu0 %v2983
        %2985 = vmatprep.subr.mxu0 0.0
        %2986 = vmatpush1.msra.mxu0 0.0
        %2987 = vmatprep.subr.mxu0 0.0
        %2988 = vmatpush1.msra.mxu0 0.0
        %2989 = vmatprep.subr.mxu0 0.0
        %2990 = vmatpush1.msra.mxu0 0.0
        %2991 = vmatprep.subr.mxu0 0.0
        %2992 = vmatpush1.msra.mxu0 0.0
        %2993 = vmatprep.subr.mxu0 0.0
        %2994 = vmatpush1.msra.mxu0 0.0
        %2995 = vmatprep.subr.mxu0 0.0
        %2996 = vmatpush1.msra.mxu0 0.0
        %2997 = vmatprep.subr.mxu0 0.0
        %2998 = vmatpush1.msra.mxu0 0.0
        %2999 = vmatprep.subr.mxu0 0.0
        %3000 = vmatpush1.msra.mxu0 0.0
        %3001 = vmatprep.subr.mxu0 0.0
        %3002 = vmatpush1.msra.mxu0 0.0
        %3003 = vmatprep.subr.mxu0 0.0
        %3004 = vmatpush1.msra.mxu0 0.0
        %3005 = vmatprep.subr.mxu0 0.0
        %3006 = vmatpush1.msra.mxu0 0.0
        %3007 = vmatprep.subr.mxu0 0.0
        %3008 = vmatpush1.msra.mxu0 0.0
        %3009 = vmatprep.subr.mxu0 0.0
        %3010 = vmatpush1.msra.mxu0 0.0
        %3011 = vmatprep.subr.mxu0 0.0
        %3012 = vmatpush1.msra.mxu0 0.0
        %3013 = vmatprep.subr.mxu0 0.0
        %3014 = vmatpush1.msra.mxu0 0.0
        %3015 = vmatprep.subr.mxu0 0.0
        %3016 = vmatpush1.msra.mxu0 0.0
        %3017 = vmatprep.subr.mxu0 0.0
        %3018 = vmatpush1.msra.mxu0 0.0
        %3019 = vmatprep.subr.mxu0 0.0
        %3020 = vmatpush1.msra.mxu0 0.0
        %3021 = vmatprep.subr.mxu0 0.0
        %3022 = vmatpush1.msra.mxu0 0.0
        %3023 = vmatprep.subr.mxu0 0.0
        %3024 = vmatpush1.msra.mxu0 0.0
        %3025 = vmatprep.subr.mxu0 0.0
        %3026 = vmatpush1.msra.mxu0 0.0
        %3027 = vmatprep.subr.mxu0 0.0
        %3028 = vmatpush1.msra.mxu0 0.0
        %3029 = vmatprep.subr.mxu0 0.0
        %3030 = vmatpush1.msra.mxu0 0.0
        %3031 = vmatprep.subr.mxu0 0.0
        %3032 = vmatpush1.msra.mxu0 0.0
        %3033 = vmatprep.subr.mxu0 0.0
        %3034 = vmatpush1.msra.mxu0 0.0
        %3035 = vmatprep.subr.mxu0 0.0
        %3036 = vmatpush1.msra.mxu0 0.0
        %3037 = vmatprep.subr.mxu0 0.0
        %3038 = vmatpush1.msra.mxu0 0.0
        %3039 = vmatprep.subr.mxu0 0.0
        %3040 = vmatpush1.msra.mxu0 0.0
        %3041 = vmatprep.subr.mxu0 0.0
        %3042 = vmatpush1.msra.mxu0 0.0
        %3043 = vmatprep.subr.mxu0 0.0
        %3044 = vmatpush1.msra.mxu0 0.0
        %3045 = vmatprep.mubr.f32.mxu0 0.0
        %v3046 = vand.u32 %v199, 4294901760
        %v3047 = vsub.f32 %v199, %v3046
        %v3048 = vand.u32 %v3047, 4294901760
        %v3049 = vsub.f32 %v3047, %v3048
        %v3050 = vand.u32 %v3049, 4294901760
        %3051 = vmatmul.mubr.f32.gmra.mrb[0].mxu0 %v3050
        %v3052 = vpop.f32.mrb[0].mxu0
        %v3053 = vadd.f32 0.0, %v3052
        %v3054 = vpop.f32.mrb[0].mxu0
        %3055 = vdwg.mxu0
        %3056 = vmatprep.subr.mxu0 0.0
        %v3057 = vand.u32 %v2977, 4294901760
        %v3058 = vsub.f32 %v2977, %v3057
        %v3059 = vand.u32 %v3058, 4294901760
        %v3060 = vsub.f32 %v3058, %v3059
        %v3061 = vand.u32 %v3060, 4294901760
        %3062 = vmatpush1.msra.mxu0 %v3061
        %3063 = vmatprep.subr.mxu0 0.0
        %v3064 = vand.u32 %v2978, 4294901760
        %v3065 = vsub.f32 %v2978, %v3064
        %v3066 = vand.u32 %v3065, 4294901760
        %v3067 = vsub.f32 %v3065, %v3066
        %v3068 = vand.u32 %v3067, 4294901760
        %3069 = vmatpush1.msra.mxu0 %v3068
        %3070 = vmatprep.subr.mxu0 0.0
        %3071 = vmatpush1.msra.mxu0 0.0
        %3072 = vmatprep.subr.mxu0 0.0
        %3073 = vmatpush1.msra.mxu0 0.0
        %3074 = vmatprep.subr.mxu0 0.0
        %3075 = vmatpush1.msra.mxu0 0.0
        %3076 = vmatprep.subr.mxu0 0.0
        %3077 = vmatpush1.msra.mxu0 0.0
        %3078 = vmatprep.subr.mxu0 0.0
        %3079 = vmatpush1.msra.mxu0 0.0
        %3080 = vmatprep.subr.mxu0 0.0
        %3081 = vmatpush1.msra.mxu0 0.0
        %3082 = vmatprep.subr.mxu0 0.0
        %3083 = vmatpush1.msra.mxu0 0.0
        %3084 = vmatprep.subr.mxu0 0.0
        %3085 = vmatpush1.msra.mxu0 0.0
        %3086 = vmatprep.subr.mxu0 0.0
        %3087 = vmatpush1.msra.mxu0 0.0
        %3088 = vmatprep.subr.mxu0 0.0
        %3089 = vmatpush1.msra.mxu0 0.0
        %3090 = vmatprep.subr.mxu0 0.0
        %3091 = vmatpush1.msra.mxu0 0.0
        %3092 = vmatprep.subr.mxu0 0.0
        %3093 = vmatpush1.msra.mxu0 0.0
        %3094 = vmatprep.subr.mxu0 0.0
        %3095 = vmatpush1.msra.mxu0 0.0
        %3096 = vmatprep.subr.mxu0 0.0
        %3097 = vmatpush1.msra.mxu0 0.0
        %3098 = vmatprep.subr.mxu0 0.0
        %3099 = vmatpush1.msra.mxu0 0.0
        %3100 = vmatprep.subr.mxu0 0.0
        %3101 = vmatpush1.msra.mxu0 0.0
        %3102 = vmatprep.subr.mxu0 0.0
        %3103 = vmatpush1.msra.mxu0 0.0
        %3104 = vmatprep.subr.mxu0 0.0
        %3105 = vmatpush1.msra.mxu0 0.0
        %3106 = vmatprep.subr.mxu0 0.0
        %3107 = vmatpush1.msra.mxu0 0.0
        %3108 = vmatprep.subr.mxu0 0.0
        %3109 = vmatpush1.msra.mxu0 0.0
        %3110 = vmatprep.subr.mxu0 0.0
        %3111 = vmatpush1.msra.mxu0 0.0
        %3112 = vmatprep.subr.mxu0 0.0
        %3113 = vmatpush1.msra.mxu0 0.0
        %3114 = vmatprep.subr.mxu0 0.0
        %3115 = vmatpush1.msra.mxu0 0.0
        %3116 = vmatprep.subr.mxu0 0.0
        %3117 = vmatpush1.msra.mxu0 0.0
        %3118 = vmatprep.subr.mxu0 0.0
        %3119 = vmatpush1.msra.mxu0 0.0
        %3120 = vmatprep.subr.mxu0 0.0
        %3121 = vmatpush1.msra.mxu0 0.0
        %3122 = vmatprep.subr.mxu0 0.0
        %3123 = vmatpush1.msra.mxu0 0.0
        %3124 = vmatprep.subr.mxu0 0.0
        %3125 = vmatpush1.msra.mxu0 0.0
        %3126 = vmatprep.subr.mxu0 0.0
        %3127 = vmatpush1.msra.mxu0 0.0
        %3128 = vmatprep.subr.mxu0 0.0
        %3129 = vmatpush1.msra.mxu0 0.0
        %3130 = vmatprep.mubr.f32.mxu0 0.0
        %v3131 = vand.u32 %v199, 4294901760
        %3132 = vmatmul.mubr.f32.gmra.mrb[0].mxu0 %v3131
        %v3133 = vpop.f32.mrb[0].mxu0
        %v3134 = vadd.f32 %v3053, %v3133
        %v3135 = vpop.f32.mrb[0].mxu0
        %3136 = vdwg.mxu0
        %3137 = vmatprep.subr.mxu0 0.0
        %v3138 = vand.u32 %v2977, 4294901760
        %v3139 = vsub.f32 %v2977, %v3138
        %3140 = vmatpush1.msra.mxu0 %v3139
        %3141 = vmatprep.subr.mxu0 0.0
        %v3142 = vand.u32 %v2978, 4294901760
        %v3143 = vsub.f32 %v2978, %v3142
        %3144 = vmatpush1.msra.mxu0 %v3143
        %3145 = vmatprep.subr.mxu0 0.0
        %3146 = vmatpush1.msra.mxu0 0.0
        %3147 = vmatprep.subr.mxu0 0.0
        %3148 = vmatpush1.msra.mxu0 0.0
        %3149 = vmatprep.subr.mxu0 0.0
        %3150 = vmatpush1.msra.mxu0 0.0
        %3151 = vmatprep.subr.mxu0 0.0
        %3152 = vmatpush1.msra.mxu0 0.0
        %3153 = vmatprep.subr.mxu0 0.0
        %3154 = vmatpush1.msra.mxu0 0.0
        %3155 = vmatprep.subr.mxu0 0.0
        %3156 = vmatpush1.msra.mxu0 0.0
        %3157 = vmatprep.subr.mxu0 0.0
        %3158 = vmatpush1.msra.mxu0 0.0
        %3159 = vmatprep.subr.mxu0 0.0
        %3160 = vmatpush1.msra.mxu0 0.0
        %3161 = vmatprep.subr.mxu0 0.0
        %3162 = vmatpush1.msra.mxu0 0.0
        %3163 = vmatprep.subr.mxu0 0.0
        %3164 = vmatpush1.msra.mxu0 0.0
        %3165 = vmatprep.subr.mxu0 0.0
        %3166 = vmatpush1.msra.mxu0 0.0
        %3167 = vmatprep.subr.mxu0 0.0
        %3168 = vmatpush1.msra.mxu0 0.0
        %3169 = vmatprep.subr.mxu0 0.0
        %3170 = vmatpush1.msra.mxu0 0.0
        %3171 = vmatprep.subr.mxu0 0.0
        %3172 = vmatpush1.msra.mxu0 0.0
        %3173 = vmatprep.subr.mxu0 0.0
        %3174 = vmatpush1.msra.mxu0 0.0
        %3175 = vmatprep.subr.mxu0 0.0
        %3176 = vmatpush1.msra.mxu0 0.0
        %3177 = vmatprep.subr.mxu0 0.0
        %3178 = vmatpush1.msra.mxu0 0.0
        %3179 = vmatprep.subr.mxu0 0.0
        %3180 = vmatpush1.msra.mxu0 0.0
        %3181 = vmatprep.subr.mxu0 0.0
        %3182 = vmatpush1.msra.mxu0 0.0
        %3183 = vmatprep.subr.mxu0 0.0
        %3184 = vmatpush1.msra.mxu0 0.0
        %3185 = vmatprep.subr.mxu0 0.0
        %3186 = vmatpush1.msra.mxu0 0.0
        %3187 = vmatprep.subr.mxu0 0.0
        %3188 = vmatpush1.msra.mxu0 0.0
        %3189 = vmatprep.subr.mxu0 0.0
        %3190 = vmatpush1.msra.mxu0 0.0
        %3191 = vmatprep.subr.mxu0 0.0
        %3192 = vmatpush1.msra.mxu0 0.0
        %3193 = vmatprep.subr.mxu0 0.0
        %3194 = vmatpush1.msra.mxu0 0.0
        %3195 = vmatprep.subr.mxu0 0.0
        %3196 = vmatpush1.msra.mxu0 0.0
        %3197 = vmatprep.subr.mxu0 0.0
        %3198 = vmatpush1.msra.mxu0 0.0
        %3199 = vmatprep.subr.mxu0 0.0
        %3200 = vmatpush1.msra.mxu0 0.0
        %3201 = vmatprep.subr.mxu0 0.0
        %3202 = vmatpush1.msra.mxu0 0.0
        %3203 = vmatprep.subr.mxu0 0.0
        %3204 = vmatpush1.msra.mxu0 0.0
        %3205 = vmatprep.mubr.f32.mxu0 0.0
        %v3206 = vand.u32 %v199, 4294901760
        %v3207 = vsub.f32 %v199, %v3206
        %3208 = vmatmul.mubr.f32.gmra.mrb[0].mxu0 %v3207
        %v3209 = vpop.f32.mrb[0].mxu0
        %v3210 = vadd.f32 %v3134, %v3209
        %v3211 = vpop.f32.mrb[0].mxu0
        %3212 = vdwg.mxu0
        %3213 = vmatprep.subr.mxu0 0.0
        %v3214 = vand.u32 %v2977, 4294901760
        %3215 = vmatpush1.msra.mxu0 %v3214
        %3216 = vmatprep.subr.mxu0 0.0
        %v3217 = vand.u32 %v2978, 4294901760
        %3218 = vmatpush1.msra.mxu0 %v3217
        %3219 = vmatprep.subr.mxu0 0.0
        %3220 = vmatpush1.msra.mxu0 0.0
        %3221 = vmatprep.subr.mxu0 0.0
        %3222 = vmatpush1.msra.mxu0 0.0
        %3223 = vmatprep.subr.mxu0 0.0
        %3224 = vmatpush1.msra.mxu0 0.0
        %3225 = vmatprep.subr.mxu0 0.0
        %3226 = vmatpush1.msra.mxu0 0.0
        %3227 = vmatprep.subr.mxu0 0.0
        %3228 = vmatpush1.msra.mxu0 0.0
        %3229 = vmatprep.subr.mxu0 0.0
        %3230 = vmatpush1.msra.mxu0 0.0
        %3231 = vmatprep.subr.mxu0 0.0
        %3232 = vmatpush1.msra.mxu0 0.0
        %3233 = vmatprep.subr.mxu0 0.0
        %3234 = vmatpush1.msra.mxu0 0.0
        %3235 = vmatprep.subr.mxu0 0.0
        %3236 = vmatpush1.msra.mxu0 0.0
        %3237 = vmatprep.subr.mxu0 0.0
        %3238 = vmatpush1.msra.mxu0 0.0
        %3239 = vmatprep.subr.mxu0 0.0
        %3240 = vmatpush1.msra.mxu0 0.0
        %3241 = vmatprep.subr.mxu0 0.0
        %3242 = vmatpush1.msra.mxu0 0.0
        %3243 = vmatprep.subr.mxu0 0.0
        %3244 = vmatpush1.msra.mxu0 0.0
        %3245 = vmatprep.subr.mxu0 0.0
        %3246 = vmatpush1.msra.mxu0 0.0
        %3247 = vmatprep.subr.mxu0 0.0
        %3248 = vmatpush1.msra.mxu0 0.0
        %3249 = vmatprep.subr.mxu0 0.0
        %3250 = vmatpush1.msra.mxu0 0.0
        %3251 = vmatprep.subr.mxu0 0.0
        %3252 = vmatpush1.msra.mxu0 0.0
        %3253 = vmatprep.subr.mxu0 0.0
        %3254 = vmatpush1.msra.mxu0 0.0
        %3255 = vmatprep.subr.mxu0 0.0
        %3256 = vmatpush1.msra.mxu0 0.0
        %3257 = vmatprep.subr.mxu0 0.0
        %3258 = vmatpush1.msra.mxu0 0.0
        %3259 = vmatprep.subr.mxu0 0.0
        %3260 = vmatpush1.msra.mxu0 0.0
        %3261 = vmatprep.subr.mxu0 0.0
        %3262 = vmatpush1.msra.mxu0 0.0
        %3263 = vmatprep.subr.mxu0 0.0
        %3264 = vmatpush1.msra.mxu0 0.0
        %3265 = vmatprep.subr.mxu0 0.0
        %3266 = vmatpush1.msra.mxu0 0.0
        %3267 = vmatprep.subr.mxu0 0.0
        %3268 = vmatpush1.msra.mxu0 0.0
        %3269 = vmatprep.subr.mxu0 0.0
        %3270 = vmatpush1.msra.mxu0 0.0
        %3271 = vmatprep.subr.mxu0 0.0
        %3272 = vmatpush1.msra.mxu0 0.0
        %3273 = vmatprep.subr.mxu0 0.0
        %3274 = vmatpush1.msra.mxu0 0.0
        %3275 = vmatprep.subr.mxu0 0.0
        %3276 = vmatpush1.msra.mxu0 0.0
        %3277 = vmatprep.subr.mxu0 0.0
        %3278 = vmatpush1.msra.mxu0 0.0
        %3279 = vmatprep.mubr.f32.mxu0 0.0
        %v3280 = vand.u32 %v199, 4294901760
        %v3281 = vsub.f32 %v199, %v3280
        %v3282 = vand.u32 %v3281, 4294901760
        %3283 = vmatmul.mubr.f32.gmra.mrb[0].mxu0 %v3282
        %v3284 = vpop.f32.mrb[0].mxu0
        %v3285 = vadd.f32 %v3210, %v3284
        %v3286 = vpop.f32.mrb[0].mxu0
        %3287 = vdwg.mxu0
        %3288 = vmatprep.subr.mxu0 0.0
        %v3289 = vand.u32 %v2977, 4294901760
        %v3290 = vsub.f32 %v2977, %v3289
        %v3291 = vand.u32 %v3290, 4294901760
        %3292 = vmatpush1.msra.mxu0 %v3291
        %3293 = vmatprep.subr.mxu0 0.0
        %v3294 = vand.u32 %v2978, 4294901760
        %v3295 = vsub.f32 %v2978, %v3294
        %v3296 = vand.u32 %v3295, 4294901760
        %3297 = vmatpush1.msra.mxu0 %v3296
        %3298 = vmatprep.subr.mxu0 0.0
        %3299 = vmatpush1.msra.mxu0 0.0
        %3300 = vmatprep.subr.mxu0 0.0
        %3301 = vmatpush1.msra.mxu0 0.0
        %3302 = vmatprep.subr.mxu0 0.0
        %3303 = vmatpush1.msra.mxu0 0.0
        %3304 = vmatprep.subr.mxu0 0.0
        %3305 = vmatpush1.msra.mxu0 0.0
        %3306 = vmatprep.subr.mxu0 0.0
        %3307 = vmatpush1.msra.mxu0 0.0
        %3308 = vmatprep.subr.mxu0 0.0
        %3309 = vmatpush1.msra.mxu0 0.0
        %3310 = vmatprep.subr.mxu0 0.0
        %3311 = vmatpush1.msra.mxu0 0.0
        %3312 = vmatprep.subr.mxu0 0.0
        %3313 = vmatpush1.msra.mxu0 0.0
        %3314 = vmatprep.subr.mxu0 0.0
        %3315 = vmatpush1.msra.mxu0 0.0
        %3316 = vmatprep.subr.mxu0 0.0
        %3317 = vmatpush1.msra.mxu0 0.0
        %3318 = vmatprep.subr.mxu0 0.0
        %3319 = vmatpush1.msra.mxu0 0.0
        %3320 = vmatprep.subr.mxu0 0.0
        %3321 = vmatpush1.msra.mxu0 0.0
        %3322 = vmatprep.subr.mxu0 0.0
        %3323 = vmatpush1.msra.mxu0 0.0
        %3324 = vmatprep.subr.mxu0 0.0
        %3325 = vmatpush1.msra.mxu0 0.0
        %3326 = vmatprep.subr.mxu0 0.0
        %3327 = vmatpush1.msra.mxu0 0.0
        %3328 = vmatprep.subr.mxu0 0.0
        %3329 = vmatpush1.msra.mxu0 0.0
        %3330 = vmatprep.subr.mxu0 0.0
        %3331 = vmatpush1.msra.mxu0 0.0
        %3332 = vmatprep.subr.mxu0 0.0
        %3333 = vmatpush1.msra.mxu0 0.0
        %3334 = vmatprep.subr.mxu0 0.0
        %3335 = vmatpush1.msra.mxu0 0.0
        %3336 = vmatprep.subr.mxu0 0.0
        %3337 = vmatpush1.msra.mxu0 0.0
        %3338 = vmatprep.subr.mxu0 0.0
        %3339 = vmatpush1.msra.mxu0 0.0
        %3340 = vmatprep.subr.mxu0 0.0
        %3341 = vmatpush1.msra.mxu0 0.0
        %3342 = vmatprep.subr.mxu0 0.0
        %3343 = vmatpush1.msra.mxu0 0.0
        %3344 = vmatprep.subr.mxu0 0.0
        %3345 = vmatpush1.msra.mxu0 0.0
        %3346 = vmatprep.subr.mxu0 0.0
        %3347 = vmatpush1.msra.mxu0 0.0
        %3348 = vmatprep.subr.mxu0 0.0
        %3349 = vmatpush1.msra.mxu0 0.0
        %3350 = vmatprep.subr.mxu0 0.0
        %3351 = vmatpush1.msra.mxu0 0.0
        %3352 = vmatprep.subr.mxu0 0.0
        %3353 = vmatpush1.msra.mxu0 0.0
        %3354 = vmatprep.subr.mxu0 0.0
        %3355 = vmatpush1.msra.mxu0 0.0
        %3356 = vmatprep.subr.mxu0 0.0
        %3357 = vmatpush1.msra.mxu0 0.0
        %3358 = vmatprep.mubr.f32.mxu0 0.0
        %v3359 = vand.u32 %v199, 4294901760
        %3360 = vmatmul.mubr.f32.gmra.mrb[0].mxu0 %v3359
        %v3361 = vpop.f32.mrb[0].mxu0
        %v3362 = vadd.f32 %v3285, %v3361
        %v3363 = vpop.f32.mrb[0].mxu0
        %3364 = vdwg.mxu0
        %3365 = vmatprep.subr.mxu0 0.0
        %v3366 = vand.u32 %v2977, 4294901760
        %3367 = vmatpush1.msra.mxu0 %v3366
        %3368 = vmatprep.subr.mxu0 0.0
        %v3369 = vand.u32 %v2978, 4294901760
        %3370 = vmatpush1.msra.mxu0 %v3369
        %3371 = vmatprep.subr.mxu0 0.0
        %3372 = vmatpush1.msra.mxu0 0.0
        %3373 = vmatprep.subr.mxu0 0.0
        %3374 = vmatpush1.msra.mxu0 0.0
        %3375 = vmatprep.subr.mxu0 0.0
        %3376 = vmatpush1.msra.mxu0 0.0
        %3377 = vmatprep.subr.mxu0 0.0
        %3378 = vmatpush1.msra.mxu0 0.0
        %3379 = vmatprep.subr.mxu0 0.0
        %3380 = vmatpush1.msra.mxu0 0.0
        %3381 = vmatprep.subr.mxu0 0.0
        %3382 = vmatpush1.msra.mxu0 0.0
        %3383 = vmatprep.subr.mxu0 0.0
        %3384 = vmatpush1.msra.mxu0 0.0
        %3385 = vmatprep.subr.mxu0 0.0
        %3386 = vmatpush1.msra.mxu0 0.0
        %3387 = vmatprep.subr.mxu0 0.0
        %3388 = vmatpush1.msra.mxu0 0.0
        %3389 = vmatprep.subr.mxu0 0.0
        %3390 = vmatpush1.msra.mxu0 0.0
        %3391 = vmatprep.subr.mxu0 0.0
        %3392 = vmatpush1.msra.mxu0 0.0
        %3393 = vmatprep.subr.mxu0 0.0
        %3394 = vmatpush1.msra.mxu0 0.0
        %3395 = vmatprep.subr.mxu0 0.0
        %3396 = vmatpush1.msra.mxu0 0.0
        %3397 = vmatprep.subr.mxu0 0.0
        %3398 = vmatpush1.msra.mxu0 0.0
        %3399 = vmatprep.subr.mxu0 0.0
        %3400 = vmatpush1.msra.mxu0 0.0
        %3401 = vmatprep.subr.mxu0 0.0
        %3402 = vmatpush1.msra.mxu0 0.0
        %3403 = vmatprep.subr.mxu0 0.0
        %3404 = vmatpush1.msra.mxu0 0.0
        %3405 = vmatprep.subr.mxu0 0.0
        %3406 = vmatpush1.msra.mxu0 0.0
        %3407 = vmatprep.subr.mxu0 0.0
        %3408 = vmatpush1.msra.mxu0 0.0
        %3409 = vmatprep.subr.mxu0 0.0
        %3410 = vmatpush1.msra.mxu0 0.0
        %3411 = vmatprep.subr.mxu0 0.0
        %3412 = vmatpush1.msra.mxu0 0.0
        %3413 = vmatprep.subr.mxu0 0.0
        %3414 = vmatpush1.msra.mxu0 0.0
        %3415 = vmatprep.subr.mxu0 0.0
        %3416 = vmatpush1.msra.mxu0 0.0
        %3417 = vmatprep.subr.mxu0 0.0
        %3418 = vmatpush1.msra.mxu0 0.0
        %3419 = vmatprep.subr.mxu0 0.0
        %3420 = vmatpush1.msra.mxu0 0.0
        %3421 = vmatprep.subr.mxu0 0.0
        %3422 = vmatpush1.msra.mxu0 0.0
        %3423 = vmatprep.subr.mxu0 0.0
        %3424 = vmatpush1.msra.mxu0 0.0
        %3425 = vmatprep.subr.mxu0 0.0
        %3426 = vmatpush1.msra.mxu0 0.0
        %3427 = vmatprep.subr.mxu0 0.0
        %3428 = vmatpush1.msra.mxu0 0.0
        %3429 = vmatprep.subr.mxu0 0.0
        %3430 = vmatpush1.msra.mxu0 0.0
        %3431 = vmatprep.mubr.f32.mxu0 0.0
        %v3432 = vand.u32 %v199, 4294901760
        %3433 = vmatmul.mubr.f32.gmra.mrb[0].mxu0 %v3432
        %v3434 = vpop.f32.mrb[0].mxu0
        %v3435 = vadd.f32 %v3362, %v3434
        %v3436 = vpop.f32.mrb[0].mxu0
        %3437 = vdwg.mxu0
        %v3439 = vsel %vm197, %v3435, 0
        %3441 = vmatprep.subr.mxu0 0.0
        %v3442 = vand.u32 %v193, 4294901760
        %3443 = vmatpush1.msra.mxu0 %v3442
        %3444 = vmatprep.subr.mxu0 0.0
        %v3445 = vand.u32 %v194, 4294901760
        %3446 = vmatpush1.msra.mxu0 %v3445
        %3447 = vmatprep.subr.mxu0 0.0
        %3448 = vmatpush1.msra.mxu0 0.0
        %3449 = vmatprep.subr.mxu0 0.0
        %3450 = vmatpush1.msra.mxu0 0.0
        %3451 = vmatprep.subr.mxu0 0.0
        %3452 = vmatpush1.msra.mxu0 0.0
        %3453 = vmatprep.subr.mxu0 0.0
        %3454 = vmatpush1.msra.mxu0 0.0
        %3455 = vmatprep.subr.mxu0 0.0
        %3456 = vmatpush1.msra.mxu0 0.0
        %3457 = vmatprep.subr.mxu0 0.0
        %3458 = vmatpush1.msra.mxu0 0.0
        %3459 = vmatprep.subr.mxu0 0.0
        %3460 = vmatpush1.msra.mxu0 0.0
        %3461 = vmatprep.subr.mxu0 0.0
        %3462 = vmatpush1.msra.mxu0 0.0
        %3463 = vmatprep.subr.mxu0 0.0
        %3464 = vmatpush1.msra.mxu0 0.0
        %3465 = vmatprep.subr.mxu0 0.0
        %3466 = vmatpush1.msra.mxu0 0.0
        %3467 = vmatprep.subr.mxu0 0.0
        %3468 = vmatpush1.msra.mxu0 0.0
        %3469 = vmatprep.subr.mxu0 0.0
        %3470 = vmatpush1.msra.mxu0 0.0
        %3471 = vmatprep.subr.mxu0 0.0
        %3472 = vmatpush1.msra.mxu0 0.0
        %3473 = vmatprep.subr.mxu0 0.0
        %3474 = vmatpush1.msra.mxu0 0.0
        %3475 = vmatprep.subr.mxu0 0.0
        %3476 = vmatpush1.msra.mxu0 0.0
        %3477 = vmatprep.subr.mxu0 0.0
        %3478 = vmatpush1.msra.mxu0 0.0
        %3479 = vmatprep.subr.mxu0 0.0
        %3480 = vmatpush1.msra.mxu0 0.0
        %3481 = vmatprep.subr.mxu0 0.0
        %3482 = vmatpush1.msra.mxu0 0.0
        %3483 = vmatprep.subr.mxu0 0.0
        %3484 = vmatpush1.msra.mxu0 0.0
        %3485 = vmatprep.subr.mxu0 0.0
        %3486 = vmatpush1.msra.mxu0 0.0
        %3487 = vmatprep.subr.mxu0 0.0
        %3488 = vmatpush1.msra.mxu0 0.0
        %3489 = vmatprep.subr.mxu0 0.0
        %3490 = vmatpush1.msra.mxu0 0.0
        %3491 = vmatprep.subr.mxu0 0.0
        %3492 = vmatpush1.msra.mxu0 0.0
        %3493 = vmatprep.subr.mxu0 0.0
        %3494 = vmatpush1.msra.mxu0 0.0
        %3495 = vmatprep.subr.mxu0 0.0
        %3496 = vmatpush1.msra.mxu0 0.0
        %3497 = vmatprep.subr.mxu0 0.0
        %3498 = vmatpush1.msra.mxu0 0.0
        %3499 = vmatprep.subr.mxu0 0.0
        %3500 = vmatpush1.msra.mxu0 0.0
        %3501 = vmatprep.subr.mxu0 0.0
        %3502 = vmatpush1.msra.mxu0 0.0
        %3503 = vmatprep.subr.mxu0 0.0
        %3504 = vmatpush1.msra.mxu0 0.0
        %3505 = vmatprep.subr.mxu0 0.0
        %3506 = vmatpush1.msra.mxu0 0.0
        %3507 = vmatprep.mubr.f32.mxu0 0.0
        %v3508 = vand.u32 %v3439, 4294901760
        %v3509 = vsub.f32 %v3439, %v3508
        %v3510 = vand.u32 %v3509, 4294901760
        %v3511 = vsub.f32 %v3509, %v3510
        %v3512 = vand.u32 %v3511, 4294901760
        %3513 = vmatmul.mubr.f32.gmra.mrb[0].mxu0 %v3512
        %v3514 = vpop.f32.mrb[0].mxu0
        %v3515 = vadd.f32 0.0, %v3514
        %v3516 = vpop.f32.mrb[0].mxu0
        %3517 = vdwg.mxu0
        %3518 = vmatprep.subr.mxu0 0.0
        %v3519 = vand.u32 %v193, 4294901760
        %v3520 = vsub.f32 %v193, %v3519
        %v3521 = vand.u32 %v3520, 4294901760
        %v3522 = vsub.f32 %v3520, %v3521
        %v3523 = vand.u32 %v3522, 4294901760
        %3524 = vmatpush1.msra.mxu0 %v3523
        %3525 = vmatprep.subr.mxu0 0.0
        %v3526 = vand.u32 %v194, 4294901760
        %v3527 = vsub.f32 %v194, %v3526
        %v3528 = vand.u32 %v3527, 4294901760
        %v3529 = vsub.f32 %v3527, %v3528
        %v3530 = vand.u32 %v3529, 4294901760
        %3531 = vmatpush1.msra.mxu0 %v3530
        %3532 = vmatprep.subr.mxu0 0.0
        %3533 = vmatpush1.msra.mxu0 0.0
        %3534 = vmatprep.subr.mxu0 0.0
        %3535 = vmatpush1.msra.mxu0 0.0
        %3536 = vmatprep.subr.mxu0 0.0
        %3537 = vmatpush1.msra.mxu0 0.0
        %3538 = vmatprep.subr.mxu0 0.0
        %3539 = vmatpush1.msra.mxu0 0.0
        %3540 = vmatprep.subr.mxu0 0.0
        %3541 = vmatpush1.msra.mxu0 0.0
        %3542 = vmatprep.subr.mxu0 0.0
        %3543 = vmatpush1.msra.mxu0 0.0
        %3544 = vmatprep.subr.mxu0 0.0
        %3545 = vmatpush1.msra.mxu0 0.0
        %3546 = vmatprep.subr.mxu0 0.0
        %3547 = vmatpush1.msra.mxu0 0.0
        %3548 = vmatprep.subr.mxu0 0.0
        %3549 = vmatpush1.msra.mxu0 0.0
        %3550 = vmatprep.subr.mxu0 0.0
        %3551 = vmatpush1.msra.mxu0 0.0
        %3552 = vmatprep.subr.mxu0 0.0
        %3553 = vmatpush1.msra.mxu0 0.0
        %3554 = vmatprep.subr.mxu0 0.0
        %3555 = vmatpush1.msra.mxu0 0.0
        %3556 = vmatprep.subr.mxu0 0.0
        %3557 = vmatpush1.msra.mxu0 0.0
        %3558 = vmatprep.subr.mxu0 0.0
        %3559 = vmatpush1.msra.mxu0 0.0
        %3560 = vmatprep.subr.mxu0 0.0
        %3561 = vmatpush1.msra.mxu0 0.0
        %3562 = vmatprep.subr.mxu0 0.0
        %3563 = vmatpush1.msra.mxu0 0.0
        %3564 = vmatprep.subr.mxu0 0.0
        %3565 = vmatpush1.msra.mxu0 0.0
        %3566 = vmatprep.subr.mxu0 0.0
        %3567 = vmatpush1.msra.mxu0 0.0
        %3568 = vmatprep.subr.mxu0 0.0
        %3569 = vmatpush1.msra.mxu0 0.0
        %3570 = vmatprep.subr.mxu0 0.0
        %3571 = vmatpush1.msra.mxu0 0.0
        %3572 = vmatprep.subr.mxu0 0.0
        %3573 = vmatpush1.msra.mxu0 0.0
        %3574 = vmatprep.subr.mxu0 0.0
        %3575 = vmatpush1.msra.mxu0 0.0
        %3576 = vmatprep.subr.mxu0 0.0
        %3577 = vmatpush1.msra.mxu0 0.0
        %3578 = vmatprep.subr.mxu0 0.0
        %3579 = vmatpush1.msra.mxu0 0.0
        %3580 = vmatprep.subr.mxu0 0.0
        %3581 = vmatpush1.msra.mxu0 0.0
        %3582 = vmatprep.subr.mxu0 0.0
        %3583 = vmatpush1.msra.mxu0 0.0
        %3584 = vmatprep.subr.mxu0 0.0
        %3585 = vmatpush1.msra.mxu0 0.0
        %3586 = vmatprep.subr.mxu0 0.0
        %3587 = vmatpush1.msra.mxu0 0.0
        %3588 = vmatprep.subr.mxu0 0.0
        %3589 = vmatpush1.msra.mxu0 0.0
        %3590 = vmatprep.subr.mxu0 0.0
        %3591 = vmatpush1.msra.mxu0 0.0
        %3592 = vmatprep.mubr.f32.mxu0 0.0
        %v3593 = vand.u32 %v3439, 4294901760
        %3594 = vmatmul.mubr.f32.gmra.mrb[0].mxu0 %v3593
        %v3595 = vpop.f32.mrb[0].mxu0
        %v3596 = vadd.f32 %v3515, %v3595
        %v3597 = vpop.f32.mrb[0].mxu0
        %3598 = vdwg.mxu0
        %3599 = vmatprep.subr.mxu0 0.0
        %v3600 = vand.u32 %v193, 4294901760
        %v3601 = vsub.f32 %v193, %v3600
        %3602 = vmatpush1.msra.mxu0 %v3601
        %3603 = vmatprep.subr.mxu0 0.0
        %v3604 = vand.u32 %v194, 4294901760
        %v3605 = vsub.f32 %v194, %v3604
        %3606 = vmatpush1.msra.mxu0 %v3605
        %3607 = vmatprep.subr.mxu0 0.0
        %3608 = vmatpush1.msra.mxu0 0.0
        %3609 = vmatprep.subr.mxu0 0.0
        %3610 = vmatpush1.msra.mxu0 0.0
        %3611 = vmatprep.subr.mxu0 0.0
        %3612 = vmatpush1.msra.mxu0 0.0
        %3613 = vmatprep.subr.mxu0 0.0
        %3614 = vmatpush1.msra.mxu0 0.0
        %3615 = vmatprep.subr.mxu0 0.0
        %3616 = vmatpush1.msra.mxu0 0.0
        %3617 = vmatprep.subr.mxu0 0.0
        %3618 = vmatpush1.msra.mxu0 0.0
        %3619 = vmatprep.subr.mxu0 0.0
        %3620 = vmatpush1.msra.mxu0 0.0
        %3621 = vmatprep.subr.mxu0 0.0
        %3622 = vmatpush1.msra.mxu0 0.0
        %3623 = vmatprep.subr.mxu0 0.0
        %3624 = vmatpush1.msra.mxu0 0.0
        %3625 = vmatprep.subr.mxu0 0.0
        %3626 = vmatpush1.msra.mxu0 0.0
        %3627 = vmatprep.subr.mxu0 0.0
        %3628 = vmatpush1.msra.mxu0 0.0
        %3629 = vmatprep.subr.mxu0 0.0
        %3630 = vmatpush1.msra.mxu0 0.0
        %3631 = vmatprep.subr.mxu0 0.0
        %3632 = vmatpush1.msra.mxu0 0.0
        %3633 = vmatprep.subr.mxu0 0.0
        %3634 = vmatpush1.msra.mxu0 0.0
        %3635 = vmatprep.subr.mxu0 0.0
        %3636 = vmatpush1.msra.mxu0 0.0
        %3637 = vmatprep.subr.mxu0 0.0
        %3638 = vmatpush1.msra.mxu0 0.0
        %3639 = vmatprep.subr.mxu0 0.0
        %3640 = vmatpush1.msra.mxu0 0.0
        %3641 = vmatprep.subr.mxu0 0.0
        %3642 = vmatpush1.msra.mxu0 0.0
        %3643 = vmatprep.subr.mxu0 0.0
        %3644 = vmatpush1.msra.mxu0 0.0
        %3645 = vmatprep.subr.mxu0 0.0
        %3646 = vmatpush1.msra.mxu0 0.0
        %3647 = vmatprep.subr.mxu0 0.0
        %3648 = vmatpush1.msra.mxu0 0.0
        %3649 = vmatprep.subr.mxu0 0.0
        %3650 = vmatpush1.msra.mxu0 0.0
        %3651 = vmatprep.subr.mxu0 0.0
        %3652 = vmatpush1.msra.mxu0 0.0
        %3653 = vmatprep.subr.mxu0 0.0
        %3654 = vmatpush1.msra.mxu0 0.0
        %3655 = vmatprep.subr.mxu0 0.0
        %3656 = vmatpush1.msra.mxu0 0.0
        %3657 = vmatprep.subr.mxu0 0.0
        %3658 = vmatpush1.msra.mxu0 0.0
        %3659 = vmatprep.subr.mxu0 0.0
        %3660 = vmatpush1.msra.mxu0 0.0
        %3661 = vmatprep.subr.mxu0 0.0
        %3662 = vmatpush1.msra.mxu0 0.0
        %3663 = vmatprep.subr.mxu0 0.0
        %3664 = vmatpush1.msra.mxu0 0.0
        %3665 = vmatprep.subr.mxu0 0.0
        %3666 = vmatpush1.msra.mxu0 0.0
        %3667 = vmatprep.mubr.f32.mxu0 0.0
        %v3668 = vand.u32 %v3439, 4294901760
        %v3669 = vsub.f32 %v3439, %v3668
        %3670 = vmatmul.mubr.f32.gmra.mrb[0].mxu0 %v3669
        %v3671 = vpop.f32.mrb[0].mxu0
        %v3672 = vadd.f32 %v3596, %v3671
        %v3673 = vpop.f32.mrb[0].mxu0
        %3674 = vdwg.mxu0
        %3675 = vmatprep.subr.mxu0 0.0
        %v3676 = vand.u32 %v193, 4294901760
        %3677 = vmatpush1.msra.mxu0 %v3676
        %3678 = vmatprep.subr.mxu0 0.0
        %v3679 = vand.u32 %v194, 4294901760
        %3680 = vmatpush1.msra.mxu0 %v3679
        %3681 = vmatprep.subr.mxu0 0.0
        %3682 = vmatpush1.msra.mxu0 0.0
        %3683 = vmatprep.subr.mxu0 0.0
        %3684 = vmatpush1.msra.mxu0 0.0
        %3685 = vmatprep.subr.mxu0 0.0
        %3686 = vmatpush1.msra.mxu0 0.0
        %3687 = vmatprep.subr.mxu0 0.0
        %3688 = vmatpush1.msra.mxu0 0.0
        %3689 = vmatprep.subr.mxu0 0.0
        %3690 = vmatpush1.msra.mxu0 0.0
        %3691 = vmatprep.subr.mxu0 0.0
        %3692 = vmatpush1.msra.mxu0 0.0
        %3693 = vmatprep.subr.mxu0 0.0
        %3694 = vmatpush1.msra.mxu0 0.0
        %3695 = vmatprep.subr.mxu0 0.0
        %3696 = vmatpush1.msra.mxu0 0.0
        %3697 = vmatprep.subr.mxu0 0.0
        %3698 = vmatpush1.msra.mxu0 0.0
        %3699 = vmatprep.subr.mxu0 0.0
        %3700 = vmatpush1.msra.mxu0 0.0
        %3701 = vmatprep.subr.mxu0 0.0
        %3702 = vmatpush1.msra.mxu0 0.0
        %3703 = vmatprep.subr.mxu0 0.0
        %3704 = vmatpush1.msra.mxu0 0.0
        %3705 = vmatprep.subr.mxu0 0.0
        %3706 = vmatpush1.msra.mxu0 0.0
        %3707 = vmatprep.subr.mxu0 0.0
        %3708 = vmatpush1.msra.mxu0 0.0
        %3709 = vmatprep.subr.mxu0 0.0
        %3710 = vmatpush1.msra.mxu0 0.0
        %3711 = vmatprep.subr.mxu0 0.0
        %3712 = vmatpush1.msra.mxu0 0.0
        %3713 = vmatprep.subr.mxu0 0.0
        %3714 = vmatpush1.msra.mxu0 0.0
        %3715 = vmatprep.subr.mxu0 0.0
        %3716 = vmatpush1.msra.mxu0 0.0
        %3717 = vmatprep.subr.mxu0 0.0
        %3718 = vmatpush1.msra.mxu0 0.0
        %3719 = vmatprep.subr.mxu0 0.0
        %3720 = vmatpush1.msra.mxu0 0.0
        %3721 = vmatprep.subr.mxu0 0.0
        %3722 = vmatpush1.msra.mxu0 0.0
        %3723 = vmatprep.subr.mxu0 0.0
        %3724 = vmatpush1.msra.mxu0 0.0
        %3725 = vmatprep.subr.mxu0 0.0
        %3726 = vmatpush1.msra.mxu0 0.0
        %3727 = vmatprep.subr.mxu0 0.0
        %3728 = vmatpush1.msra.mxu0 0.0
        %3729 = vmatprep.subr.mxu0 0.0
        %3730 = vmatpush1.msra.mxu0 0.0
        %3731 = vmatprep.subr.mxu0 0.0
        %3732 = vmatpush1.msra.mxu0 0.0
        %3733 = vmatprep.subr.mxu0 0.0
        %3734 = vmatpush1.msra.mxu0 0.0
        %3735 = vmatprep.subr.mxu0 0.0
        %3736 = vmatpush1.msra.mxu0 0.0
        %3737 = vmatprep.subr.mxu0 0.0
        %3738 = vmatpush1.msra.mxu0 0.0
        %3739 = vmatprep.subr.mxu0 0.0
        %3740 = vmatpush1.msra.mxu0 0.0
        %3741 = vmatprep.mubr.f32.mxu0 0.0
        %v3742 = vand.u32 %v3439, 4294901760
        %v3743 = vsub.f32 %v3439, %v3742
        %v3744 = vand.u32 %v3743, 4294901760
        %3745 = vmatmul.mubr.f32.gmra.mrb[0].mxu0 %v3744
        %v3746 = vpop.f32.mrb[0].mxu0
        %v3747 = vadd.f32 %v3672, %v3746
        %v3748 = vpop.f32.mrb[0].mxu0
        %3749 = vdwg.mxu0
        %3750 = vmatprep.subr.mxu0 0.0
        %v3751 = vand.u32 %v193, 4294901760
        %v3752 = vsub.f32 %v193, %v3751
        %v3753 = vand.u32 %v3752, 4294901760
        %3754 = vmatpush1.msra.mxu0 %v3753
        %3755 = vmatprep.subr.mxu0 0.0
        %v3756 = vand.u32 %v194, 4294901760
        %v3757 = vsub.f32 %v194, %v3756
        %v3758 = vand.u32 %v3757, 4294901760
        %3759 = vmatpush1.msra.mxu0 %v3758
        %3760 = vmatprep.subr.mxu0 0.0
        %3761 = vmatpush1.msra.mxu0 0.0
        %3762 = vmatprep.subr.mxu0 0.0
        %3763 = vmatpush1.msra.mxu0 0.0
        %3764 = vmatprep.subr.mxu0 0.0
        %3765 = vmatpush1.msra.mxu0 0.0
        %3766 = vmatprep.subr.mxu0 0.0
        %3767 = vmatpush1.msra.mxu0 0.0
        %3768 = vmatprep.subr.mxu0 0.0
        %3769 = vmatpush1.msra.mxu0 0.0
        %3770 = vmatprep.subr.mxu0 0.0
        %3771 = vmatpush1.msra.mxu0 0.0
        %3772 = vmatprep.subr.mxu0 0.0
        %3773 = vmatpush1.msra.mxu0 0.0
        %3774 = vmatprep.subr.mxu0 0.0
        %3775 = vmatpush1.msra.mxu0 0.0
        %3776 = vmatprep.subr.mxu0 0.0
        %3777 = vmatpush1.msra.mxu0 0.0
        %3778 = vmatprep.subr.mxu0 0.0
        %3779 = vmatpush1.msra.mxu0 0.0
        %3780 = vmatprep.subr.mxu0 0.0
        %3781 = vmatpush1.msra.mxu0 0.0
        %3782 = vmatprep.subr.mxu0 0.0
        %3783 = vmatpush1.msra.mxu0 0.0
        %3784 = vmatprep.subr.mxu0 0.0
        %3785 = vmatpush1.msra.mxu0 0.0
        %3786 = vmatprep.subr.mxu0 0.0
        %3787 = vmatpush1.msra.mxu0 0.0
        %3788 = vmatprep.subr.mxu0 0.0
        %3789 = vmatpush1.msra.mxu0 0.0
        %3790 = vmatprep.subr.mxu0 0.0
        %3791 = vmatpush1.msra.mxu0 0.0
        %3792 = vmatprep.subr.mxu0 0.0
        %3793 = vmatpush1.msra.mxu0 0.0
        %3794 = vmatprep.subr.mxu0 0.0
        %3795 = vmatpush1.msra.mxu0 0.0
        %3796 = vmatprep.subr.mxu0 0.0
        %3797 = vmatpush1.msra.mxu0 0.0
        %3798 = vmatprep.subr.mxu0 0.0
        %3799 = vmatpush1.msra.mxu0 0.0
        %3800 = vmatprep.subr.mxu0 0.0
        %3801 = vmatpush1.msra.mxu0 0.0
        %3802 = vmatprep.subr.mxu0 0.0
        %3803 = vmatpush1.msra.mxu0 0.0
        %3804 = vmatprep.subr.mxu0 0.0
        %3805 = vmatpush1.msra.mxu0 0.0
        %3806 = vmatprep.subr.mxu0 0.0
        %3807 = vmatpush1.msra.mxu0 0.0
        %3808 = vmatprep.subr.mxu0 0.0
        %3809 = vmatpush1.msra.mxu0 0.0
        %3810 = vmatprep.subr.mxu0 0.0
        %3811 = vmatpush1.msra.mxu0 0.0
        %3812 = vmatprep.subr.mxu0 0.0
        %3813 = vmatpush1.msra.mxu0 0.0
        %3814 = vmatprep.subr.mxu0 0.0
        %3815 = vmatpush1.msra.mxu0 0.0
        %3816 = vmatprep.subr.mxu0 0.0
        %3817 = vmatpush1.msra.mxu0 0.0
        %3818 = vmatprep.subr.mxu0 0.0
        %3819 = vmatpush1.msra.mxu0 0.0
        %3820 = vmatprep.mubr.f32.mxu0 0.0
        %v3821 = vand.u32 %v3439, 4294901760
        %3822 = vmatmul.mubr.f32.gmra.mrb[0].mxu0 %v3821
        %v3823 = vpop.f32.mrb[0].mxu0
        %v3824 = vadd.f32 %v3747, %v3823
        %v3825 = vpop.f32.mrb[0].mxu0
        %3826 = vdwg.mxu0
        %3827 = vmatprep.subr.mxu0 0.0
        %v3828 = vand.u32 %v193, 4294901760
        %3829 = vmatpush1.msra.mxu0 %v3828
        %3830 = vmatprep.subr.mxu0 0.0
        %v3831 = vand.u32 %v194, 4294901760
        %3832 = vmatpush1.msra.mxu0 %v3831
        %3833 = vmatprep.subr.mxu0 0.0
        %3834 = vmatpush1.msra.mxu0 0.0
        %3835 = vmatprep.subr.mxu0 0.0
        %3836 = vmatpush1.msra.mxu0 0.0
        %3837 = vmatprep.subr.mxu0 0.0
        %3838 = vmatpush1.msra.mxu0 0.0
        %3839 = vmatprep.subr.mxu0 0.0
        %3840 = vmatpush1.msra.mxu0 0.0
        %3841 = vmatprep.subr.mxu0 0.0
        %3842 = vmatpush1.msra.mxu0 0.0
        %3843 = vmatprep.subr.mxu0 0.0
        %3844 = vmatpush1.msra.mxu0 0.0
        %3845 = vmatprep.subr.mxu0 0.0
        %3846 = vmatpush1.msra.mxu0 0.0
        %3847 = vmatprep.subr.mxu0 0.0
        %3848 = vmatpush1.msra.mxu0 0.0
        %3849 = vmatprep.subr.mxu0 0.0
        %3850 = vmatpush1.msra.mxu0 0.0
        %3851 = vmatprep.subr.mxu0 0.0
        %3852 = vmatpush1.msra.mxu0 0.0
        %3853 = vmatprep.subr.mxu0 0.0
        %3854 = vmatpush1.msra.mxu0 0.0
        %3855 = vmatprep.subr.mxu0 0.0
        %3856 = vmatpush1.msra.mxu0 0.0
        %3857 = vmatprep.subr.mxu0 0.0
        %3858 = vmatpush1.msra.mxu0 0.0
        %3859 = vmatprep.subr.mxu0 0.0
        %3860 = vmatpush1.msra.mxu0 0.0
        %3861 = vmatprep.subr.mxu0 0.0
        %3862 = vmatpush1.msra.mxu0 0.0
        %3863 = vmatprep.subr.mxu0 0.0
        %3864 = vmatpush1.msra.mxu0 0.0
        %3865 = vmatprep.subr.mxu0 0.0
        %3866 = vmatpush1.msra.mxu0 0.0
        %3867 = vmatprep.subr.mxu0 0.0
        %3868 = vmatpush1.msra.mxu0 0.0
        %3869 = vmatprep.subr.mxu0 0.0
        %3870 = vmatpush1.msra.mxu0 0.0
        %3871 = vmatprep.subr.mxu0 0.0
        %3872 = vmatpush1.msra.mxu0 0.0
        %3873 = vmatprep.subr.mxu0 0.0
        %3874 = vmatpush1.msra.mxu0 0.0
        %3875 = vmatprep.subr.mxu0 0.0
        %3876 = vmatpush1.msra.mxu0 0.0
        %3877 = vmatprep.subr.mxu0 0.0
        %3878 = vmatpush1.msra.mxu0 0.0
        %3879 = vmatprep.subr.mxu0 0.0
        %3880 = vmatpush1.msra.mxu0 0.0
        %3881 = vmatprep.subr.mxu0 0.0
        %3882 = vmatpush1.msra.mxu0 0.0
        %3883 = vmatprep.subr.mxu0 0.0
        %3884 = vmatpush1.msra.mxu0 0.0
        %3885 = vmatprep.subr.mxu0 0.0
        %3886 = vmatpush1.msra.mxu0 0.0
        %3887 = vmatprep.subr.mxu0 0.0
        %3888 = vmatpush1.msra.mxu0 0.0
        %3889 = vmatprep.subr.mxu0 0.0
        %3890 = vmatpush1.msra.mxu0 0.0
        %3891 = vmatprep.subr.mxu0 0.0
        %3892 = vmatpush1.msra.mxu0 0.0
        %3893 = vmatprep.mubr.f32.mxu0 0.0
        %v3894 = vand.u32 %v3439, 4294901760
        %3895 = vmatmul.mubr.f32.gmra.mrb[0].mxu0 %v3894
        %v3896 = vpop.f32.mrb[0].mxu0
        %v3897 = vadd.f32 %v3824, %v3896
        %v3898 = vpop.f32.mrb[0].mxu0
        %3899 = vdwg.mxu0
        %s3900 = scalar_lea.vmem %s189, 24 [#allocation5]
        %3901 = vst.msk [vmem:[%s3900] sm:$0xff] %vm1122, %v3897
        %s3902 = sand.u32 %s96, 1
        %s3903 = scalar_lea.sflag [#allocation4], %s3902
        %s3904 = sand.u32 %s96, 1
        %s3905 = smul.addr %s3904, 32
        %s3906 = scalar_lea.vmem [#allocation5], %s3905
        // Predicated region
        $region37: #{tpu_custom_call.1} parent=31 // pred_check
          %p3907 = pneg %p106
        $region38: #{tpu_custom_call.1} parent=31 // pred_check_branch
          %3909 = sbr.rel (%p3907) target = $region40
        $region39: #{tpu_custom_call.1} parent=31 // pred_region
          %s3910 = smul.u32 4, %s20
          %s3912 = ssub.s32 512, 512
          %3913 = vsyncadd %s3903, %s3912
          %s3914 = smul.addr %s3910, 128
          %s3915 = scalar_lea.hbm %s3, %s3914
          %s3916 = sshll.u32 %s3906, 4
          %s3917 = int_to_ptr.vmem [resolvable:$true] %s3916
          %3922 = dma.vmem_to_hbm [thread:$0]  %s3917, 512, %s3915, %s3903, 128, 128, 8
        $region40: #{tpu_custom_call.1} parent=31 // pred_fallthru
          _
      $region32: #{tpu_custom_call.1} parent=5 // pred_fallthru
        _
      %p3923 = scmp.le.s32.totalorder 2, %s15
      // Predicated region
      $region41: #{tpu_custom_call.1} parent=5 // pred_check
        %p3924 = pneg %p3923
      $region42: #{tpu_custom_call.1} parent=5 // pred_check_branch
        %3926 = sbr.rel (%p3924) target = $region44
      $region43: #{tpu_custom_call.1} parent=5 // pred_region
        %s3927 = ssub.s32 %s15, 2
        // Predicated region
        $region45: #{tpu_custom_call.1} parent=43 // pred_check
          %p3928 = pneg %p112
        $region46: #{tpu_custom_call.1} parent=43 // pred_check_branch
          %3930 = sbr.rel (%p3928) target = $region48
        $region47: #{tpu_custom_call.1} parent=43 // pred_region
          %s3931 = sand.u32 %s97, 1
          %s3932 = scalar_lea.sflag [#allocation4], %s3931
          %s3933 = sand.u32 %s97, 1
          %s3934 = smul.addr %s3933, 32
          %s3935 = scalar_lea.vmem [#allocation5], %s3934
          %3936 = dma.done %s3932, 512
        $region48: #{tpu_custom_call.1} parent=43 // pred_fallthru
          _
      $region44: #{tpu_custom_call.1} parent=5 // pred_fallthru
        _
    $region6: #{tpu_custom_call.1} parent=1 // loop_footer
      %s19 = sadd.s32 1, %s15
    $region7: #{tpu_custom_call.1} parent=1 // loop_footer_branch
      %14 = sbr.rel target = $region3
    $region8: #{tpu_custom_call.1} parent=1 // loop_exit
      _
    %3937 = vsyncpa [#allocation3], 1
    %s3938 = scalar_lea.sflag [#allocation3], 1
    %3939 = vsyncpa %s3938, 1
    %3940 = vsyncpa [#allocation4], 1
    %s3941 = scalar_lea.sflag [#allocation4], 1
    %3942 = vsyncpa %s3941, 1

// kernel: tpu_custom_call.1
$region0: #{tpu_custom_call.1}
  #allocation0 [shape = 'u32[]', space=smem, size = 0x4, offset = 0x4, fixed_abs, tag = 'smem constant byte address 0x4 - core index']
  #allocation1 [shape = 'u32[144,128]{1,0:T(1,128)}', space=vmem, size = 0x12000, scoped, tag = 'internal scratch']
  %s0 = inlined_call_operand.vmem [shape: f32[8,16], index: 0, kind: input, shape index: {}]
  %s1 = inlined_call_operand.vmem [shape: f32[16,8], index: 1, kind: input, shape index: {}]
  %s2 = inlined_call_operand.hbm [shape: f32[8,16,16], index: 2, kind: input, shape index: {}]
  %s3 = inlined_call_operand.hbm [shape: f32[8,8,8], index: 3, kind: output, shape index: {}]
  %s4 = sld [smem:[#allocation0]]
  $region49: #{tpu_custom_call.1} parent=0
    _
  %s6 = ssub.s32 1, %s4
  %s7 = scalar_select 0, %s6, %s4
  $region1: #{tpu_custom_call.1} parent=0
    #allocation2 [shape = 'u8[65536]{0}', space=vmem, size = 0x10000, scoped, tag = 'input window, operand 2']
    #allocation3 [shape = 's32[2]{0}', space=sflag, size = 0x8, scoped, tag = 'scoped memory for tpu_custom_call.1']
    #allocation4 [shape = 's32[2]{0}', space=sflag, size = 0x8, scoped, tag = 'scoped memory for tpu_custom_call.1']
    #allocation5 [shape = 'u8[32768]{0}', space=vmem, size = 0x8000, scoped, tag = 'output window, operand 0']
    %8 = vsyncpa [#allocation3], 0
    %s9 = scalar_lea.sflag [#allocation3], 1
    %10 = vsyncpa %s9, 0
    %11 = vsyncpa [#allocation4], 0
    %s12 = scalar_lea.sflag [#allocation4], 1
    %13 = vsyncpa %s12, 0
    loop: start=0, step=1, limit=4
    $region2: #{tpu_custom_call.1} parent=1 // loop_pre_header
      _
    $region3: #{tpu_custom_call.1} parent=1 // loop_header
      %s15 = sphi 0, %s19
      %p16 = scmp.ge.s32.totalorder %s15, 4
      %s23 = sphi 0, %s23
      %s25 = sphi 0, %s23
      %s26 = sphi 0, %s25
      %s40 = sphi 0, %s26
      %s44 = sphi 0, %s44
      %s46 = sphi 0, %s44
      %s47 = sphi 0, %s46
      %s61 = sphi 0, %s47
      %s67 = sphi 0, %s69
      %s70 = sphi 0, %s67
      %s71 = sphi 0, %s70
      %s87 = sphi 0, %s71
      %s93 = sphi 0, %s95
      %s96 = sphi 0, %s93
      %s97 = sphi 0, %s96
      %s113 = sphi 0, %s97
    $region4: #{tpu_custom_call.1} parent=1 // loop_header_branch
      %18 = sbr.rel (%p16) target = $region8
    $region5: #{tpu_custom_call.1} parent=1 // loop_body
      %s20 = ssub.s32 %s15, 1
      %s21 = ssub.s32 %s15, 2
      %s22 = sadd.s32 %s15, 1
      %s24 = sadd.s32 %s23, 1
      %p27 = scmp.eq.s32.totalorder %s15, 1
      %p28 = scmp.ne.s32.totalorder %s23, %s25
      %p29 = scmp.eq.s32.totalorder %s15, 0
      %p30 = por %p28, %p29
      %p31 = scmp.ne.s32.totalorder %s23, %s25
      %p32 = scmp.eq.s32.totalorder %s20, 1
      %p33 = por %p31, %p32
      %p34 = scmp.ne.s32.totalorder %s25, %s26
      %p35 = scmp.eq.s32.totalorder %s20, 0
      %p36 = por %p34, %p35
      %p37 = scmp.ne.s32.totalorder %s25, %s26
      %p38 = scmp.eq.s32.totalorder %s21, 1
      %p39 = por %p37, %p38
      %p41 = scmp.ne.s32.totalorder %s26, %s40
      %p42 = scmp.eq.s32.totalorder %s21, 0
      %p43 = por %p41, %p42
      %s45 = sadd.s32 %s44, 1
      %p48 = scmp.eq.s32.totalorder %s15, 1
      %p49 = scmp.ne.s32.totalorder %s44, %s46
      %p50 = scmp.eq.s32.totalorder %s15, 0
      %p51 = por %p49, %p50
      %p52 = scmp.ne.s32.totalorder %s44, %s46
      %p53 = scmp.eq.s32.totalorder %s20, 1
      %p54 = por %p52, %p53
      %p55 = scmp.ne.s32.totalorder %s46, %s47
      %p56 = scmp.eq.s32.totalorder %s20, 0
      %p57 = por %p55, %p56
      %p58 = scmp.ne.s32.totalorder %s46, %s47
      %p59 = scmp.eq.s32.totalorder %s21, 1
      %p60 = por %p58, %p59
      %p62 = scmp.ne.s32.totalorder %s47, %s61
      %p63 = scmp.eq.s32.totalorder %s21, 0
      %p64 = por %p62, %p63
      %s65 = ssub.s32 %s15, %s22
      %p66 = scmp.eq.s32.totalorder %s65, 0
      %s68 = sadd.s32 %s67, 1
      %s69 = scalar_select %p66, %s67, %s68
      %p72 = pneg %p66
      %p73 = scmp.eq.s32.totalorder %s15, 1
      %p74 = por %p72, %p73
      %p75 = scmp.ne.s32.totalorder %s67, %s70
      %p76 = scmp.eq.s32.totalorder %s15, 0
      %p77 = por %p75, %p76
      %p78 = scmp.ne.s32.totalorder %s67, %s70
      %p79 = scmp.eq.s32.totalorder %s20, 1
      %p80 = por %p78, %p79
      %p81 = scmp.ne.s32.totalorder %s70, %s71
      %p82 = scmp.eq.s32.totalorder %s20, 0
      %p83 = por %p81, %p82
      %p84 = scmp.ne.s32.totalorder %s70, %s71
      %p85 = scmp.eq.s32.totalorder %s21, 1
      %p86 = por %p84, %p85
      %p88 = scmp.ne.s32.totalorder %s71, %s87
      %p89 = scmp.eq.s32.totalorder %s21, 0
      %p90 = por %p88, %p89
      %s91 = ssub.s32 %s15, %s22
      %p92 = scmp.eq.s32.totalorder %s91, 0
      %s94 = sadd.s32 %s93, 1
      %s95 = scalar_select %p92, %s93, %s94
      %p98 = pneg %p92
      %p99 = scmp.eq.s32.totalorder %s15, 1
      %p100 = por %p98, %p99
      %p101 = scmp.ne.s32.totalorder %s93, %s96
      %p102 = scmp.eq.s32.totalorder %s15, 0
      %p103 = por %p101, %p102
      %p104 = scmp.ne.s32.totalorder %s93, %s96
      %p105 = scmp.eq.s32.totalorder %s20, 1
      %p106 = por %p104, %p105
      %p107 = scmp.ne.s32.totalorder %s96, %s97
      %p108 = scmp.eq.s32.totalorder %s20, 0
      %p109 = por %p107, %p108
      %p110 = scmp.ne.s32.totalorder %s96, %s97
      %p111 = scmp.eq.s32.totalorder %s21, 1
      %p112 = por %p110, %p111
      %p114 = scmp.ne.s32.totalorder %s97, %s113
      %p115 = scmp.eq.s32.totalorder %s21, 0
      %p116 = por %p114, %p115
      %p117 = scmp.le.s32.totalorder 1, %s15
      %p118 = scmp.lt.s32.totalorder %s15, 3
      %p119 = pnand %p117, %p118
      %p120 = pneg %p119
      // Predicated region
      $region9: #{tpu_custom_call.1} parent=5 // pred_check
        _
      $region10: #{tpu_custom_call.1} parent=5 // pred_check_branch
        %122 = sbr.rel (%p119) target = $region12
      $region11: #{tpu_custom_call.1} parent=5 // pred_region
        %s123 = ssub.s32 %s15, 1
        // Predicated region
        $region13: #{tpu_custom_call.1} parent=11 // pred_check
          %p124 = pneg %p36
        $region14: #{tpu_custom_call.1} parent=11 // pred_check_branch
          %126 = sbr.rel (%p124) target = $region16
        $region15: #{tpu_custom_call.1} parent=11 // pred_region
          _
        $region16: #{tpu_custom_call.1} parent=11 // pred_fallthru
          _
        // Predicated region
        $region17: #{tpu_custom_call.1} parent=11 // pred_check
          %p127 = pneg %p57
        $region18: #{tpu_custom_call.1} parent=11 // pred_check_branch
          %129 = sbr.rel (%p127) target = $region20
        $region19: #{tpu_custom_call.1} parent=11 // pred_region
          _
        $region20: #{tpu_custom_call.1} parent=11 // pred_fallthru
          _
      $region12: #{tpu_custom_call.1} parent=5 // pred_fallthru
        _
      %p130 = scmp.lt.s32.totalorder %s15, 2
      // Predicated region
      $region21: #{tpu_custom_call.1} parent=5 // pred_check
        %p131 = pneg %p130
      $region22: #{tpu_custom_call.1} parent=5 // pred_check_branch
        %133 = sbr.rel (%p131) target = $region24
      $region23: #{tpu_custom_call.1} parent=5 // pred_region
        // Predicated region
        $region25: #{tpu_custom_call.1} parent=23 // pred_check
          %p134 = pneg %p77
        $region26: #{tpu_custom_call.1} parent=23 // pred_check_branch
          %136 = sbr.rel (%p134) target = $region28
        $region27: #{tpu_custom_call.1} parent=23 // pred_region
          %s137 = sand.u32 %s67, 1
          %s138 = scalar_lea.sflag [#allocation3], %s137
          %s139 = sand.u32 %s67, 1
          %s140 = smul.addr %s139, 64
          %s141 = scalar_lea.vmem [#allocation2], %s140
          %s142 = smul.u32 4, %s15
          %s144 = ssub.s32 1024, 1024
          %145 = vsyncadd %s138, %s144
          %s146 = smul.addr %s142, 2
          %s147 = smul.addr %s146, 128
          %s148 = scalar_lea.hbm %s2, %s147
          %s149 = sshll.u32 %s141, 4
          %s150 = int_to_ptr.vmem [resolvable:$true] %s149
          %155 = dma.hbm_to_vmem [thread:$0]  %s148, 1024, %s150, %s138, 128, 128, 8
        $region28: #{tpu_custom_call.1} parent=23 // pred_fallthru
          _
      $region24: #{tpu_custom_call.1} parent=5 // pred_fallthru
        _
      %p156 = scmp.le.s32.totalorder 1, %s15
      %p157 = scmp.lt.s32.totalorder %s15, 3
      %p158 = pnand %p156, %p157
      %p159 = pneg %p158
      // Predicated region
      $region29: #{tpu_custom_call.1} parent=5 // pred_check
        _
      $region30: #{tpu_custom_call.1} parent=5 // pred_check_branch
        %161 = sbr.rel (%p158) target = $region32
      $region31: #{tpu_custom_call.1} parent=5 // pred_region
        %s162 = ssub.s32 %s15, 1
        %s163 = sand.u32 %s70, 1
        %s164 = scalar_lea.sflag [#allocation3], %s163
        %s165 = sand.u32 %s70, 1
        %s166 = smul.addr %s165, 64
        %s167 = scalar_lea.vmem [#allocation2], %s166
        // Predicated region
        $region33: #{tpu_custom_call.1} parent=31 // pred_check
          %p168 = pneg %p83
        $region34: #{tpu_custom_call.1} parent=31 // pred_check_branch
          %170 = sbr.rel (%p168) target = $region36
        $region35: #{tpu_custom_call.1} parent=31 // pred_region
          %171 = dma.done %s164, 1024
        $region36: #{tpu_custom_call.1} parent=31 // pred_fallthru
          _
        %p172 = pneg %p36
        %p173 = pneg %p33
        %p174 = pneg %p57
        %p175 = pneg %p54
        %s176 = sand.u32 %s70, 1
        %s177 = scalar_lea.sflag [#allocation3], %s176
        %s178 = sand.u32 %s70, 1
        %s179 = smul.addr %s178, 64
        %s180 = scalar_lea.vmem [#allocation2], %s179
        %p181 = pneg %p83
        %p182 = pneg %p80
        %p183 = pneg %p109
        %p184 = pneg %p106
        %s185 = sand.u32 %s96, 1
        %s186 = scalar_lea.sflag [#allocation4], %s185
        %s187 = sand.u32 %s96, 1
        %s188 = smul.addr %s187, 32
        %s189 = scalar_lea.vmem [#allocation5], %s188
        %s190 = smul.u32 4, %s20
        %s191 = smul.u32 4, %s20
        %v192 = vld [vmem:[%s0] sm:$0xff]
        %v193 = vld [vmem:[%s1] sm:$0xff]
        %v194 = vld [vmem:[%s1 + $0x8] sm:$0xff]
        %v195 = vld [vmem:[%s167] sm:$0xff]
        %v196 = vld [vmem:[%s167 + $0x8] sm:$0xff]
        %vm197 = vcmask 130048
        %v199 = vsel %vm197, %v192, 0
        %201 = vmatprep.subr.mxu0 0.0
        %202 = vmatpush1.msra.mxu0 %v195
        %203 = vmatprep.subr.mxu0 0.0
        %204 = vmatpush1.msra.mxu0 %v196
        %205 = vmatprep.subr.mxu0 0.0
        %206 = vmatpush1.msra.mxu0 0.0
        %207 = vmatprep.subr.mxu0 0.0
        %208 = vmatpush1.msra.mxu0 0.0
        %209 = vmatprep.subr.mxu0 0.0
        %210 = vmatpush1.msra.mxu0 0.0
        %211 = vmatprep.subr.mxu0 0.0
        %212 = vmatpush1.msra.mxu0 0.0
        %213 = vmatprep.subr.mxu0 0.0
        %214 = vmatpush1.msra.mxu0 0.0
        %215 = vmatprep.subr.mxu0 0.0
        %216 = vmatpush1.msra.mxu0 0.0
        %217 = vmatprep.subr.mxu0 0.0
        %218 = vmatpush1.msra.mxu0 0.0
        %219 = vmatprep.subr.mxu0 0.0
        %220 = vmatpush1.msra.mxu0 0.0
        %221 = vmatprep.subr.mxu0 0.0
        %222 = vmatpush1.msra.mxu0 0.0
        %223 = vmatprep.subr.mxu0 0.0
        %224 = vmatpush1.msra.mxu0 0.0
        %225 = vmatprep.subr.mxu0 0.0
        %226 = vmatpush1.msra.mxu0 0.0
        %227 = vmatprep.subr.mxu0 0.0
        %228 = vmatpush1.msra.mxu0 0.0
        %229 = vmatprep.subr.mxu0 0.0
        %230 = vmatpush1.msra.mxu0 0.0
        %231 = vmatprep.subr.mxu0 0.0
        %232 = vmatpush1.msra.mxu0 0.0
        %233 = vmatprep.subr.mxu0 0.0
        %234 = vmatpush1.msra.mxu0 0.0
        %235 = vmatprep.subr.mxu0 0.0
        %236 = vmatpush1.msra.mxu0 0.0
        %237 = vmatprep.subr.mxu0 0.0
        %238 = vmatpush1.msra.mxu0 0.0
        %239 = vmatprep.subr.mxu0 0.0
        %240 = vmatpush1.msra.mxu0 0.0
        %241 = vmatprep.subr.mxu0 0.0
        %242 = vmatpush1.msra.mxu0 0.0
        %243 = vmatprep.subr.mxu0 0.0
        %244 = vmatpush1.msra.mxu0 0.0
        %245 = vmatprep.subr.mxu0 0.0
        %246 = vmatpush1.msra.mxu0 0.0
        %247 = vmatprep.subr.mxu0 0.0
        %248 = vmatpush1.msra.mxu0 0.0
        %249 = vmatprep.subr.mxu0 0.0
        %250 = vmatpush1.msra.mxu0 0.0
        %251 = vmatprep.subr.mxu0 0.0
        %252 = vmatpush1.msra.mxu0 0.0
        %253 = vmatprep.subr.mxu0 0.0
        %254 = vmatpush1.msra.mxu0 0.0
        %255 = vmatprep.subr.mxu0 0.0
        %256 = vmatpush1.msra.mxu0 0.0
        %257 = vmatprep.subr.mxu0 0.0
        %258 = vmatpush1.msra.mxu0 0.0
        %259 = vmatprep.subr.mxu0 0.0
        %260 = vmatpush1.msra.mxu0 0.0
        %261 = vmatprep.subr.mxu0 0.0
        %262 = vmatpush1.msra.mxu0 0.0
        %263 = vmatprep.subr.mxu0 0.0
        %264 = vmatpush1.msra.mxu0 0.0
        %265 = vmatprep.mubr.f32.mxu0 0.0
        %266 = vmatmul.mubr.f32.gmra.mrb[0].mxu0 %v199
        %v267 = vpop.f32.mrb[0].mxu0
        %v268 = vadd.f32 0.0, %v267
        %v269 = vpop.f32.mrb[0].mxu0
        %270 = vdwg.mxu0
        %v272 = vsel %vm197, %v268, 0
        %274 = vmatprep.subr.mxu0 0.0
        %275 = vmatpush1.msra.mxu0 %v193
        %276 = vmatprep.subr.mxu0 0.0
        %277 = vmatpush1.msra.mxu0 %v194
        %278 = vmatprep.subr.mxu0 0.0
        %279 = vmatpush1.msra.mxu0 0.0
        %280 = vmatprep.subr.mxu0 0.0
        %281 = vmatpush1.msra.mxu0 0.0
        %282 = vmatprep.subr.mxu0 0.0
        %283 = vmatpush1.msra.mxu0 0.0
        %284 = vmatprep.subr.mxu0 0.0
        %285 = vmatpush1.msra.mxu0 0.0
        %286 = vmatprep.subr.mxu0 0.0
        %287 = vmatpush1.msra.mxu0 0.0
        %288 = vmatprep.subr.mxu0 0.0
        %289 = vmatpush1.msra.mxu0 0.0
        %290 = vmatprep.subr.mxu0 0.0
        %291 = vmatpush1.msra.mxu0 0.0
        %292 = vmatprep.subr.mxu0 0.0
        %293 = vmatpush1.msra.mxu0 0.0
        %294 = vmatprep.subr.mxu0 0.0
        %295 = vmatpush1.msra.mxu0 0.0
        %296 = vmatprep.subr.mxu0 0.0
        %297 = vmatpush1.msra.mxu0 0.0
        %298 = vmatprep.subr.mxu0 0.0
        %299 = vmatpush1.msra.mxu0 0.0
        %300 = vmatprep.subr.mxu0 0.0
        %301 = vmatpush1.msra.mxu0 0.0
        %302 = vmatprep.subr.mxu0 0.0
        %303 = vmatpush1.msra.mxu0 0.0
        %304 = vmatprep.subr.mxu0 0.0
        %305 = vmatpush1.msra.mxu0 0.0
        %306 = vmatprep.subr.mxu0 0.0
        %307 = vmatpush1.msra.mxu0 0.0
        %308 = vmatprep.subr.mxu0 0.0
        %309 = vmatpush1.msra.mxu0 0.0
        %310 = vmatprep.subr.mxu0 0.0
        %311 = vmatpush1.msra.mxu0 0.0
        %312 = vmatprep.subr.mxu0 0.0
        %313 = vmatpush1.msra.mxu0 0.0
        %314 = vmatprep.subr.mxu0 0.0
        %315 = vmatpush1.msra.mxu0 0.0
        %316 = vmatprep.subr.mxu0 0.0
        %317 = vmatpush1.msra.mxu0 0.0
        %318 = vmatprep.subr.mxu0 0.0
        %319 = vmatpush1.msra.mxu0 0.0
        %320 = vmatprep.subr.mxu0 0.0
        %321 = vmatpush1.msra.mxu0 0.0
        %322 = vmatprep.subr.mxu0 0.0
        %323 = vmatpush1.msra.mxu0 0.0
        %324 = vmatprep.subr.mxu0 0.0
        %325 = vmatpush1.msra.mxu0 0.0
        %326 = vmatprep.subr.mxu0 0.0
        %327 = vmatpush1.msra.mxu0 0.0
        %328 = vmatprep.subr.mxu0 0.0
        %329 = vmatpush1.msra.mxu0 0.0
        %330 = vmatprep.subr.mxu0 0.0
        %331 = vmatpush1.msra.mxu0 0.0
        %332 = vmatprep.subr.mxu0 0.0
        %333 = vmatpush1.msra.mxu0 0.0
        %334 = vmatprep.subr.mxu0 0.0
        %335 = vmatpush1.msra.mxu0 0.0
        %336 = vmatprep.subr.mxu0 0.0
        %337 = vmatpush1.msra.mxu0 0.0
        %338 = vmatprep.mubr.f32.mxu0 0.0
        %339 = vmatmul.mubr.f32.gmra.mrb[0].mxu0 %v272
        %v340 = vpop.f32.mrb[0].mxu0
        %v341 = vadd.f32 0.0, %v340
        %v342 = vpop.f32.mrb[0].mxu0
        %343 = vdwg.mxu0
        %vm344 = vcmask 64512
        %345 = vst.msk [vmem:[%s189] sm:$0xff] %vm344, %v341
        %s346 = scalar_lea.vmem %s167, 16 [#allocation2]
        %v347 = vld [vmem:[%s346] sm:$0xff]
        %v348 = vld [vmem:[%s346 + $0x8] sm:$0xff]
        %349 = vmatprep.subr.mxu0 0.0
        %350 = vmatpush1.msra.mxu0 %v347
        %351 = vmatprep.subr.mxu0 0.0
        %352 = vmatpush1.msra.mxu0 %v348
        %353 = vmatprep.subr.mxu0 0.0
        %354 = vmatpush1.msra.mxu0 0.0
        %355 = vmatprep.subr.mxu0 0.0
        %356 = vmatpush1.msra.mxu0 0.0
        %357 = vmatprep.subr.mxu0 0.0
        %358 = vmatpush1.msra.mxu0 0.0
        %359 = vmatprep.subr.mxu0 0.0
        %360 = vmatpush1.msra.mxu0 0.0
        %361 = vmatprep.subr.mxu0 0.0
        %362 = vmatpush1.msra.mxu0 0.0
        %363 = vmatprep.subr.mxu0 0.0
        %364 = vmatpush1.msra.mxu0 0.0
        %365 = vmatprep.subr.mxu0 0.0
        %366 = vmatpush1.msra.mxu0 0.0
        %367 = vmatprep.subr.mxu0 0.0
        %368 = vmatpush1.msra.mxu0 0.0
        %369 = vmatprep.subr.mxu0 0.0
        %370 = vmatpush1.msra.mxu0 0.0
        %371 = vmatprep.subr.mxu0 0.0
        %372 = vmatpush1.msra.mxu0 0.0
        %373 = vmatprep.subr.mxu0 0.0
        %374 = vmatpush1.msra.mxu0 0.0
        %375 = vmatprep.subr.mxu0 0.0
        %376 = vmatpush1.msra.mxu0 0.0
        %377 = vmatprep.subr.mxu0 0.0
        %378 = vmatpush1.msra.mxu0 0.0
        %379 = vmatprep.subr.mxu0 0.0
        %380 = vmatpush1.msra.mxu0 0.0
        %381 = vmatprep.subr.mxu0 0.0
        %382 = vmatpush1.msra.mxu0 0.0
        %383 = vmatprep.subr.mxu0 0.0
        %384 = vmatpush1.msra.mxu0 0.0
        %385 = vmatprep.subr.mxu0 0.0
        %386 = vmatpush1.msra.mxu0 0.0
        %387 = vmatprep.subr.mxu0 0.0
        %388 = vmatpush1.msra.mxu0 0.0
        %389 = vmatprep.subr.mxu0 0.0
        %390 = vmatpush1.msra.mxu0 0.0
        %391 = vmatprep.subr.mxu0 0.0
        %392 = vmatpush1.msra.mxu0 0.0
        %393 = vmatprep.subr.mxu0 0.0
        %394 = vmatpush1.msra.mxu0 0.0
        %395 = vmatprep.subr.mxu0 0.0
        %396 = vmatpush1.msra.mxu0 0.0
        %397 = vmatprep.subr.mxu0 0.0
        %398 = vmatpush1.msra.mxu0 0.0
        %399 = vmatprep.subr.mxu0 0.0
        %400 = vmatpush1.msra.mxu0 0.0
        %401 = vmatprep.subr.mxu0 0.0
        %402 = vmatpush1.msra.mxu0 0.0
        %403 = vmatprep.subr.mxu0 0.0
        %404 = vmatpush1.msra.mxu0 0.0
        %405 = vmatprep.subr.mxu0 0.0
        %406 = vmatpush1.msra.mxu0 0.0
        %407 = vmatprep.subr.mxu0 0.0
        %408 = vmatpush1.msra.mxu0 0.0
        %409 = vmatprep.subr.mxu0 0.0
        %410 = vmatpush1.msra.mxu0 0.0
        %411 = vmatprep.subr.mxu0 0.0
        %412 = vmatpush1.msra.mxu0 0.0
        %413 = vmatprep.mubr.f32.mxu0 0.0
        %414 = vmatmul.mubr.f32.gmra.mrb[0].mxu0 %v199
        %v415 = vpop.f32.mrb[0].mxu0
        %v416 = vadd.f32 0.0, %v415
        %v417 = vpop.f32.mrb[0].mxu0
        %418 = vdwg.mxu0
        %v420 = vsel %vm197, %v416, 0
        %422 = vmatprep.subr.mxu0 0.0
        %423 = vmatpush1.msra.mxu0 %v193
        %424 = vmatprep.subr.mxu0 0.0
        %425 = vmatpush1.msra.mxu0 %v194
        %426 = vmatprep.subr.mxu0 0.0
        %427 = vmatpush1.msra.mxu0 0.0
        %428 = vmatprep.subr.mxu0 0.0
        %429 = vmatpush1.msra.mxu0 0.0
        %430 = vmatprep.subr.mxu0 0.0
        %431 = vmatpush1.msra.mxu0 0.0
        %432 = vmatprep.subr.mxu0 0.0
        %433 = vmatpush1.msra.mxu0 0.0
        %434 = vmatprep.subr.mxu0 0.0
        %435 = vmatpush1.msra.mxu0 0.0
        %436 = vmatprep.subr.mxu0 0.0
        %437 = vmatpush1.msra.mxu0 0.0
        %438 = vmatprep.subr.mxu0 0.0
        %439 = vmatpush1.msra.mxu0 0.0
        %440 = vmatprep.subr.mxu0 0.0
        %441 = vmatpush1.msra.mxu0 0.0
        %442 = vmatprep.subr.mxu0 0.0
        %443 = vmatpush1.msra.mxu0 0.0
        %444 = vmatprep.subr.mxu0 0.0
        %445 = vmatpush1.msra.mxu0 0.0
        %446 = vmatprep.subr.mxu0 0.0
        %447 = vmatpush1.msra.mxu0 0.0
        %448 = vmatprep.subr.mxu0 0.0
        %449 = vmatpush1.msra.mxu0 0.0
        %450 = vmatprep.subr.mxu0 0.0
        %451 = vmatpush1.msra.mxu0 0.0
        %452 = vmatprep.subr.mxu0 0.0
        %453 = vmatpush1.msra.mxu0 0.0
        %454 = vmatprep.subr.mxu0 0.0
        %455 = vmatpush1.msra.mxu0 0.0
        %456 = vmatprep.subr.mxu0 0.0
        %457 = vmatpush1.msra.mxu0 0.0
        %458 = vmatprep.subr.mxu0 0.0
        %459 = vmatpush1.msra.mxu0 0.0
        %460 = vmatprep.subr.mxu0 0.0
        %461 = vmatpush1.msra.mxu0 0.0
        %462 = vmatprep.subr.mxu0 0.0
        %463 = vmatpush1.msra.mxu0 0.0
        %464 = vmatprep.subr.mxu0 0.0
        %465 = vmatpush1.msra.mxu0 0.0
        %466 = vmatprep.subr.mxu0 0.0
        %467 = vmatpush1.msra.mxu0 0.0
        %468 = vmatprep.subr.mxu0 0.0
        %469 = vmatpush1.msra.mxu0 0.0
        %470 = vmatprep.subr.mxu0 0.0
        %471 = vmatpush1.msra.mxu0 0.0
        %472 = vmatprep.subr.mxu0 0.0
        %473 = vmatpush1.msra.mxu0 0.0
        %474 = vmatprep.subr.mxu0 0.0
        %475 = vmatpush1.msra.mxu0 0.0
        %476 = vmatprep.subr.mxu0 0.0
        %477 = vmatpush1.msra.mxu0 0.0
        %478 = vmatprep.subr.mxu0 0.0
        %479 = vmatpush1.msra.mxu0 0.0
        %480 = vmatprep.subr.mxu0 0.0
        %481 = vmatpush1.msra.mxu0 0.0
        %482 = vmatprep.subr.mxu0 0.0
        %483 = vmatpush1.msra.mxu0 0.0
        %484 = vmatprep.subr.mxu0 0.0
        %485 = vmatpush1.msra.mxu0 0.0
        %486 = vmatprep.mubr.f32.mxu0 0.0
        %487 = vmatmul.mubr.f32.gmra.mrb[0].mxu0 %v420
        %v488 = vpop.f32.mrb[0].mxu0
        %v489 = vadd.f32 0.0, %v488
        %v490 = vpop.f32.mrb[0].mxu0
        %491 = vdwg.mxu0
        %s492 = scalar_lea.vmem %s189, 8 [#allocation5]
        %493 = vst.msk [vmem:[%s492] sm:$0xff] %vm344, %v489
        %s494 = scalar_lea.vmem %s167, 32 [#allocation2]
        %v495 = vld [vmem:[%s494] sm:$0xff]
        %v496 = vld [vmem:[%s494 + $0x8] sm:$0xff]
        %497 = vmatprep.subr.mxu0 0.0
        %498 = vmatpush1.msra.mxu0 %v495
        %499 = vmatprep.subr.mxu0 0.0
        %500 = vmatpush1.msra.mxu0 %v496
        %501 = vmatprep.subr.mxu0 0.0
        %502 = vmatpush1.msra.mxu0 0.0
        %503 = vmatprep.subr.mxu0 0.0
        %504 = vmatpush1.msra.mxu0 0.0
        %505 = vmatprep.subr.mxu0 0.0
        %506 = vmatpush1.msra.mxu0 0.0
        %507 = vmatprep.subr.mxu0 0.0
        %508 = vmatpush1.msra.mxu0 0.0
        %509 = vmatprep.subr.mxu0 0.0
        %510 = vmatpush1.msra.mxu0 0.0
        %511 = vmatprep.subr.mxu0 0.0
        %512 = vmatpush1.msra.mxu0 0.0
        %513 = vmatprep.subr.mxu0 0.0
        %514 = vmatpush1.msra.mxu0 0.0
        %515 = vmatprep.subr.mxu0 0.0
        %516 = vmatpush1.msra.mxu0 0.0
        %517 = vmatprep.subr.mxu0 0.0
        %518 = vmatpush1.msra.mxu0 0.0
        %519 = vmatprep.subr.mxu0 0.0
        %520 = vmatpush1.msra.mxu0 0.0
        %521 = vmatprep.subr.mxu0 0.0
        %522 = vmatpush1.msra.mxu0 0.0
        %523 = vmatprep.subr.mxu0 0.0
        %524 = vmatpush1.msra.mxu0 0.0
        %525 = vmatprep.subr.mxu0 0.0
        %526 = vmatpush1.msra.mxu0 0.0
        %527 = vmatprep.subr.mxu0 0.0
        %528 = vmatpush1.msra.mxu0 0.0
        %529 = vmatprep.subr.mxu0 0.0
        %530 = vmatpush1.msra.mxu0 0.0
        %531 = vmatprep.subr.mxu0 0.0
        %532 = vmatpush1.msra.mxu0 0.0
        %533 = vmatprep.subr.mxu0 0.0
        %534 = vmatpush1.msra.mxu0 0.0
        %535 = vmatprep.subr.mxu0 0.0
        %536 = vmatpush1.msra.mxu0 0.0
        %537 = vmatprep.subr.mxu0 0.0
        %538 = vmatpush1.msra.mxu0 0.0
        %539 = vmatprep.subr.mxu0 0.0
        %540 = vmatpush1.msra.mxu0 0.0
        %541 = vmatprep.subr.mxu0 0.0
        %542 = vmatpush1.msra.mxu0 0.0
        %543 = vmatprep.subr.mxu0 0.0
        %544 = vmatpush1.msra.mxu0 0.0
        %545 = vmatprep.subr.mxu0 0.0
        %546 = vmatpush1.msra.mxu0 0.0
        %547 = vmatprep.subr.mxu0 0.0
        %548 = vmatpush1.msra.mxu0 0.0
        %549 = vmatprep.subr.mxu0 0.0
        %550 = vmatpush1.msra.mxu0 0.0
        %551 = vmatprep.subr.mxu0 0.0
        %552 = vmatpush1.msra.mxu0 0.0
        %553 = vmatprep.subr.mxu0 0.0
        %554 = vmatpush1.msra.mxu0 0.0
        %555 = vmatprep.subr.mxu0 0.0
        %556 = vmatpush1.msra.mxu0 0.0
        %557 = vmatprep.subr.mxu0 0.0
        %558 = vmatpush1.msra.mxu0 0.0
        %559 = vmatprep.subr.mxu0 0.0
        %560 = vmatpush1.msra.mxu0 0.0
        %561 = vmatprep.mubr.f32.mxu0 0.0
        %562 = vmatmul.mubr.f32.gmra.mrb[0].mxu0 %v199
        %v563 = vpop.f32.mrb[0].mxu0
        %v564 = vadd.f32 0.0, %v563
        %v565 = vpop.f32.mrb[0].mxu0
        %566 = vdwg.mxu0
        %v568 = vsel %vm197, %v564, 0
        %570 = vmatprep.subr.mxu0 0.0
        %571 = vmatpush1.msra.mxu0 %v193
        %572 = vmatprep.subr.mxu0 0.0
        %573 = vmatpush1.msra.mxu0 %v194
        %574 = vmatprep.subr.mxu0 0.0
        %575 = vmatpush1.msra.mxu0 0.0
        %576 = vmatprep.subr.mxu0 0.0
        %577 = vmatpush1.msra.mxu0 0.0
        %578 = vmatprep.subr.mxu0 0.0
        %579 = vmatpush1.msra.mxu0 0.0
        %580 = vmatprep.subr.mxu0 0.0
        %581 = vmatpush1.msra.mxu0 0.0
        %582 = vmatprep.subr.mxu0 0.0
        %583 = vmatpush1.msra.mxu0 0.0
        %584 = vmatprep.subr.mxu0 0.0
        %585 = vmatpush1.msra.mxu0 0.0
        %586 = vmatprep.subr.mxu0 0.0
        %587 = vmatpush1.msra.mxu0 0.0
        %588 = vmatprep.subr.mxu0 0.0
        %589 = vmatpush1.msra.mxu0 0.0
        %590 = vmatprep.subr.mxu0 0.0
        %591 = vmatpush1.msra.mxu0 0.0
        %592 = vmatprep.subr.mxu0 0.0
        %593 = vmatpush1.msra.mxu0 0.0
        %594 = vmatprep.subr.mxu0 0.0
        %595 = vmatpush1.msra.mxu0 0.0
        %596 = vmatprep.subr.mxu0 0.0
        %597 = vmatpush1.msra.mxu0 0.0
        %598 = vmatprep.subr.mxu0 0.0
        %599 = vmatpush1.msra.mxu0 0.0
        %600 = vmatprep.subr.mxu0 0.0
        %601 = vmatpush1.msra.mxu0 0.0
        %602 = vmatprep.subr.mxu0 0.0
        %603 = vmatpush1.msra.mxu0 0.0
        %604 = vmatprep.subr.mxu0 0.0
        %605 = vmatpush1.msra.mxu0 0.0
        %606 = vmatprep.subr.mxu0 0.0
        %607 = vmatpush1.msra.mxu0 0.0
        %608 = vmatprep.subr.mxu0 0.0
        %609 = vmatpush1.msra.mxu0 0.0
        %610 = vmatprep.subr.mxu0 0.0
        %611 = vmatpush1.msra.mxu0 0.0
        %612 = vmatprep.subr.mxu0 0.0
        %613 = vmatpush1.msra.mxu0 0.0
        %614 = vmatprep.subr.mxu0 0.0
        %615 = vmatpush1.msra.mxu0 0.0
        %616 = vmatprep.subr.mxu0 0.0
        %617 = vmatpush1.msra.mxu0 0.0
        %618 = vmatprep.subr.mxu0 0.0
        %619 = vmatpush1.msra.mxu0 0.0
        %620 = vmatprep.subr.mxu0 0.0
        %621 = vmatpush1.msra.mxu0 0.0
        %622 = vmatprep.subr.mxu0 0.0
        %623 = vmatpush1.msra.mxu0 0.0
        %624 = vmatprep.subr.mxu0 0.0
        %625 = vmatpush1.msra.mxu0 0.0
        %626 = vmatprep.subr.mxu0 0.0
        %627 = vmatpush1.msra.mxu0 0.0
        %628 = vmatprep.subr.mxu0 0.0
        %629 = vmatpush1.msra.mxu0 0.0
        %630 = vmatprep.subr.mxu0 0.0
        %631 = vmatpush1.msra.mxu0 0.0
        %632 = vmatprep.subr.mxu0 0.0
        %633 = vmatpush1.msra.mxu0 0.0
        %634 = vmatprep.mubr.f32.mxu0 0.0
        %635 = vmatmul.mubr.f32.gmra.mrb[0].mxu0 %v568
        %v636 = vpop.f32.mrb[0].mxu0
        %v637 = vadd.f32 0.0, %v636
        %v638 = vpop.f32.mrb[0].mxu0
        %639 = vdwg.mxu0
        %s640 = scalar_lea.vmem %s189, 16 [#allocation5]
        %641 = vst.msk [vmem:[%s640] sm:$0xff] %vm344, %v637
        %s642 = scalar_lea.vmem %s167, 48 [#allocation2]
        %v643 = vld [vmem:[%s642] sm:$0xff]
        %v644 = vld [vmem:[%s642 + $0x8] sm:$0xff]
        %645 = vmatprep.subr.mxu0 0.0
        %646 = vmatpush1.msra.mxu0 %v643
        %647 = vmatprep.subr.mxu0 0.0
        %648 = vmatpush1.msra.mxu0 %v644
        %649 = vmatprep.subr.mxu0 0.0
        %650 = vmatpush1.msra.mxu0 0.0
        %651 = vmatprep.subr.mxu0 0.0
        %652 = vmatpush1.msra.mxu0 0.0
        %653 = vmatprep.subr.mxu0 0.0
        %654 = vmatpush1.msra.mxu0 0.0
        %655 = vmatprep.subr.mxu0 0.0
        %656 = vmatpush1.msra.mxu0 0.0
        %657 = vmatprep.subr.mxu0 0.0
        %658 = vmatpush1.msra.mxu0 0.0
        %659 = vmatprep.subr.mxu0 0.0
        %660 = vmatpush1.msra.mxu0 0.0
        %661 = vmatprep.subr.mxu0 0.0
        %662 = vmatpush1.msra.mxu0 0.0
        %663 = vmatprep.subr.mxu0 0.0
        %664 = vmatpush1.msra.mxu0 0.0
        %665 = vmatprep.subr.mxu0 0.0
        %666 = vmatpush1.msra.mxu0 0.0
        %667 = vmatprep.subr.mxu0 0.0
        %668 = vmatpush1.msra.mxu0 0.0
        %669 = vmatprep.subr.mxu0 0.0
        %670 = vmatpush1.msra.mxu0 0.0
        %671 = vmatprep.subr.mxu0 0.0
        %672 = vmatpush1.msra.mxu0 0.0
        %673 = vmatprep.subr.mxu0 0.0
        %674 = vmatpush1.msra.mxu0 0.0
        %675 = vmatprep.subr.mxu0 0.0
        %676 = vmatpush1.msra.mxu0 0.0
        %677 = vmatprep.subr.mxu0 0.0
        %678 = vmatpush1.msra.mxu0 0.0
        %679 = vmatprep.subr.mxu0 0.0
        %680 = vmatpush1.msra.mxu0 0.0
        %681 = vmatprep.subr.mxu0 0.0
        %682 = vmatpush1.msra.mxu0 0.0
        %683 = vmatprep.subr.mxu0 0.0
        %684 = vmatpush1.msra.mxu0 0.0
        %685 = vmatprep.subr.mxu0 0.0
        %686 = vmatpush1.msra.mxu0 0.0
        %687 = vmatprep.subr.mxu0 0.0
        %688 = vmatpush1.msra.mxu0 0.0
        %689 = vmatprep.subr.mxu0 0.0
        %690 = vmatpush1.msra.mxu0 0.0
        %691 = vmatprep.subr.mxu0 0.0
        %692 = vmatpush1.msra.mxu0 0.0
        %693 = vmatprep.subr.mxu0 0.0
        %694 = vmatpush1.msra.mxu0 0.0
        %695 = vmatprep.subr.mxu0 0.0
        %696 = vmatpush1.msra.mxu0 0.0
        %697 = vmatprep.subr.mxu0 0.0
        %698 = vmatpush1.msra.mxu0 0.0
        %699 = vmatprep.subr.mxu0 0.0
        %700 = vmatpush1.msra.mxu0 0.0
        %701 = vmatprep.subr.mxu0 0.0
        %702 = vmatpush1.msra.mxu0 0.0
        %703 = vmatprep.subr.mxu0 0.0
        %704 = vmatpush1.msra.mxu0 0.0
        %705 = vmatprep.subr.mxu0 0.0
        %706 = vmatpush1.msra.mxu0 0.0
        %707 = vmatprep.subr.mxu0 0.0
        %708 = vmatpush1.msra.mxu0 0.0
        %709 = vmatprep.mubr.f32.mxu0 0.0
        %710 = vmatmul.mubr.f32.gmra.mrb[0].mxu0 %v199
        %v711 = vpop.f32.mrb[0].mxu0
        %v712 = vadd.f32 0.0, %v711
        %v713 = vpop.f32.mrb[0].mxu0
        %714 = vdwg.mxu0
        %v716 = vsel %vm197, %v712, 0
        %718 = vmatprep.subr.mxu0 0.0
        %719 = vmatpush1.msra.mxu0 %v193
        %720 = vmatprep.subr.mxu0 0.0
        %721 = vmatpush1.msra.mxu0 %v194
        %722 = vmatprep.subr.mxu0 0.0
        %723 = vmatpush1.msra.mxu0 0.0
        %724 = vmatprep.subr.mxu0 0.0
        %725 = vmatpush1.msra.mxu0 0.0
        %726 = vmatprep.subr.mxu0 0.0
        %727 = vmatpush1.msra.mxu0 0.0
        %728 = vmatprep.subr.mxu0 0.0
        %729 = vmatpush1.msra.mxu0 0.0
        %730 = vmatprep.subr.mxu0 0.0
        %731 = vmatpush1.msra.mxu0 0.0
        %732 = vmatprep.subr.mxu0 0.0
        %733 = vmatpush1.msra.mxu0 0.0
        %734 = vmatprep.subr.mxu0 0.0
        %735 = vmatpush1.msra.mxu0 0.0
        %736 = vmatprep.subr.mxu0 0.0
        %737 = vmatpush1.msra.mxu0 0.0
        %738 = vmatprep.subr.mxu0 0.0
        %739 = vmatpush1.msra.mxu0 0.0
        %740 = vmatprep.subr.mxu0 0.0
        %741 = vmatpush1.msra.mxu0 0.0
        %742 = vmatprep.subr.mxu0 0.0
        %743 = vmatpush1.msra.mxu0 0.0
        %744 = vmatprep.subr.mxu0 0.0
        %745 = vmatpush1.msra.mxu0 0.0
        %746 = vmatprep.subr.mxu0 0.0
        %747 = vmatpush1.msra.mxu0 0.0
        %748 = vmatprep.subr.mxu0 0.0
        %749 = vmatpush1.msra.mxu0 0.0
        %750 = vmatprep.subr.mxu0 0.0
        %751 = vmatpush1.msra.mxu0 0.0
        %752 = vmatprep.subr.mxu0 0.0
        %753 = vmatpush1.msra.mxu0 0.0
        %754 = vmatprep.subr.mxu0 0.0
        %755 = vmatpush1.msra.mxu0 0.0
        %756 = vmatprep.subr.mxu0 0.0
        %757 = vmatpush1.msra.mxu0 0.0
        %758 = vmatprep.subr.mxu0 0.0
        %759 = vmatpush1.msra.mxu0 0.0
        %760 = vmatprep.subr.mxu0 0.0
        %761 = vmatpush1.msra.mxu0 0.0
        %762 = vmatprep.subr.mxu0 0.0
        %763 = vmatpush1.msra.mxu0 0.0
        %764 = vmatprep.subr.mxu0 0.0
        %765 = vmatpush1.msra.mxu0 0.0
        %766 = vmatprep.subr.mxu0 0.0
        %767 = vmatpush1.msra.mxu0 0.0
        %768 = vmatprep.subr.mxu0 0.0
        %769 = vmatpush1.msra.mxu0 0.0
        %770 = vmatprep.subr.mxu0 0.0
        %771 = vmatpush1.msra.mxu0 0.0
        %772 = vmatprep.subr.mxu0 0.0
        %773 = vmatpush1.msra.mxu0 0.0
        %774 = vmatprep.subr.mxu0 0.0
        %775 = vmatpush1.msra.mxu0 0.0
        %776 = vmatprep.subr.mxu0 0.0
        %777 = vmatpush1.msra.mxu0 0.0
        %778 = vmatprep.subr.mxu0 0.0
        %779 = vmatpush1.msra.mxu0 0.0
        %780 = vmatprep.subr.mxu0 0.0
        %781 = vmatpush1.msra.mxu0 0.0
        %782 = vmatprep.mubr.f32.mxu0 0.0
        %783 = vmatmul.mubr.f32.gmra.mrb[0].mxu0 %v716
        %v784 = vpop.f32.mrb[0].mxu0
        %v785 = vadd.f32 0.0, %v784
        %v786 = vpop.f32.mrb[0].mxu0
        %787 = vdwg.mxu0
        %s788 = scalar_lea.vmem %s189, 24 [#allocation5]
        %789 = vst.msk [vmem:[%s788] sm:$0xff] %vm344, %v785
        %s790 = sand.u32 %s96, 1
        %s791 = scalar_lea.sflag [#allocation4], %s790
        %s792 = sand.u32 %s96, 1
        %s793 = smul.addr %s792, 32
        %s794 = scalar_lea.vmem [#allocation5], %s793
        // Predicated region
        $region37: #{tpu_custom_call.1} parent=31 // pred_check
          %p795 = pneg %p106
        $region38: #{tpu_custom_call.1} parent=31 // pred_check_branch
          %797 = sbr.rel (%p795) target = $region40
        $region39: #{tpu_custom_call.1} parent=31 // pred_region
          %s798 = smul.u32 4, %s20
          %s800 = ssub.s32 512, 512
          %801 = vsyncadd %s791, %s800
          %s802 = smul.addr %s798, 128
          %s803 = scalar_lea.hbm %s3, %s802
          %s804 = sshll.u32 %s794, 4
          %s805 = int_to_ptr.vmem [resolvable:$true] %s804
          %810 = dma.vmem_to_hbm [thread:$0]  %s805, 512, %s803, %s791, 128, 128, 8
        $region40: #{tpu_custom_call.1} parent=31 // pred_fallthru
          _
      $region32: #{tpu_custom_call.1} parent=5 // pred_fallthru
        _
      %p811 = scmp.le.s32.totalorder 2, %s15
      // Predicated region
      $region41: #{tpu_custom_call.1} parent=5 // pred_check
        %p812 = pneg %p811
      $region42: #{tpu_custom_call.1} parent=5 // pred_check_branch
        %814 = sbr.rel (%p812) target = $region44
      $region43: #{tpu_custom_call.1} parent=5 // pred_region
        %s815 = ssub.s32 %s15, 2
        // Predicated region
        $region45: #{tpu_custom_call.1} parent=43 // pred_check
          %p816 = pneg %p112
        $region46: #{tpu_custom_call.1} parent=43 // pred_check_branch
          %818 = sbr.rel (%p816) target = $region48
        $region47: #{tpu_custom_call.1} parent=43 // pred_region
          %s819 = sand.u32 %s97, 1
          %s820 = scalar_lea.sflag [#allocation4], %s819
          %s821 = sand.u32 %s97, 1
          %s822 = smul.addr %s821, 32
          %s823 = scalar_lea.vmem [#allocation5], %s822
          %824 = dma.done %s820, 512
        $region48: #{tpu_custom_call.1} parent=43 // pred_fallthru
          _
      $region44: #{tpu_custom_call.1} parent=5 // pred_fallthru
        _
    $region6: #{tpu_custom_call.1} parent=1 // loop_footer
      %s19 = sadd.s32 1, %s15
    $region7: #{tpu_custom_call.1} parent=1 // loop_footer_branch
      %14 = sbr.rel target = $region3
    $region8: #{tpu_custom_call.1} parent=1 // loop_exit
      _
    %825 = vsyncpa [#allocation3], 1
    %s826 = scalar_lea.sflag [#allocation3], 1
    %827 = vsyncpa %s826, 1
    %828 = vsyncpa [#allocation4], 1
    %s829 = scalar_lea.sflag [#allocation4], 1
    %830 = vsyncpa %s829, 1

</llo_original>
